<compile_context>
chip_gen: v6e
topology: v6e:2x2x1
jax: 0.10.0
libtpu: 0.0.40
codegen_flags: <defaults>
</compile_context>

<pallas_src>
import functools

import jax
import jax.numpy as jnp
from jax import lax
from jax.experimental import pallas as pl
from jax.experimental.pallas import tpu as pltpu


def _resblock_kernel(x_ref, w1_ref, b1_ref, w2_ref, b2_ref, o_ref,
                     xpad_ref, mid_ref, *, H, W, C, d, res_scale):
    """One grid step = one batch element (NHWC layout, C on the lane axis).

    x_ref   : (1, H, W, C)   input block (conv input AND residual)
    w1/w2   : (9*C, C)       conv weights flattened to im2col layout (kh,kw,I)xO
    b1/b2   : (1, 1, C)      biases
    o_ref   : (1, H, W, C)
    xpad_ref: VMEM scratch (H+2d, W+2d, C) f32 — on-chip padded input
    mid_ref : VMEM scratch (H+2d, W+2d, C) f32 — padded post-ReLU intermediate
    """
    Hp = H + 2 * d
    Wp = W + 2 * d

    x = x_ref[0].astype(jnp.float32)                       # (H, W, C)

    def zero_border(ref):
        # Only the d-wide border strips need zeroing; the interior is overwritten.
        ref[0:d, :, :] = jnp.zeros((d, Wp, C), jnp.float32)
        ref[d + H:Hp, :, :] = jnp.zeros((d, Wp, C), jnp.float32)
        ref[:, 0:d, :] = jnp.zeros((Hp, d, C), jnp.float32)
        ref[:, d + W:Wp, :] = jnp.zeros((Hp, d, C), jnp.float32)

    def conv3x3(src_ref, w_ref, b_ref):
        # im2col-lite: fuse the 9 taps into a single K=9C matmul.
        taps = [src_ref[kh * d:kh * d + H, kw * d:kw * d + W, :]
                for kh in range(3) for kw in range(3)]
        patches = jnp.concatenate(taps, axis=-1)           # (H, W, 9C)
        acc = lax.dot_general(patches, w_ref[...],
                              (((2,), (0,)), ((), ())),
                              preferred_element_type=jnp.float32)
        return acc + b_ref[...]                            # (H, W, C)

    # ---- stage padded input in VMEM (no HBM round trip for padding)
    zero_border(xpad_ref)
    xpad_ref[d:d + H, d:d + W, :] = x

    # ---- conv1 + bias + ReLU
    y = jnp.maximum(conv3x3(xpad_ref, w1_ref, b1_ref), 0.0)

    # ---- stage padded intermediate
    zero_border(mid_ref)
    mid_ref[d:d + H, d:d + W, :] = y

    # ---- conv2 + bias, then residual: out = x + res_scale * layer(x)
    z = conv3x3(mid_ref, w2_ref, b2_ref)
    o_ref[0] = (x + res_scale * z).astype(o_ref.dtype)


def res_block_pallas_nhwc(x, w1_oihw, b1, w2_oihw, b2, *, dilation=1, res_scale=1.0):
    """ResBlock forward on an NHWC activation (preferred layout for chaining)."""
    d = int(dilation)
    B, H, W, C = x.shape
    Hp, Wp = H + 2 * d, W + 2 * d

    # PyTorch conv weights (O, I, kh, kw) -> im2col-flattened ((kh, kw, I), O).
    w1 = jnp.transpose(w1_oihw, (2, 3, 1, 0)).reshape(9 * C, C)
    w2 = jnp.transpose(w2_oihw, (2, 3, 1, 0)).reshape(9 * C, C)
    b1r = b1.reshape(1, 1, C).astype(jnp.float32)
    b2r = b2.reshape(1, 1, C).astype(jnp.float32)

    kernel = functools.partial(_resblock_kernel, H=H, W=W, C=C, d=d,
                               res_scale=float(res_scale))

    itemsize = jnp.dtype(x.dtype).itemsize
    flops = 2 * (2 * B * H * W * 9 * C * C)                # two convs, 2 flops/MAC
    bytes_accessed = (2 * B * H * W * C * itemsize         # read x + write out
                      + (w1.size + w2.size + b1r.size + b2r.size) * 4)

    # VMEM budget: double-buffered in/out blocks + 2 padded scratches + weights.
    block_bytes = H * W * C * itemsize
    scratch_bytes = 2 * Hp * Wp * C * 4
    weight_bytes = (w1.size + w2.size + b1r.size + b2r.size) * 4
    vmem_bytes = 4 * block_bytes + scratch_bytes + 2 * weight_bytes + (4 << 20)
    vmem_limit = int(min(max(vmem_bytes, 16 << 20), 48 << 20))

    return pl.pallas_call(
        kernel,
        out_shape=jax.ShapeDtypeStruct((B, H, W, C), x.dtype),
        grid_spec=pltpu.PrefetchScalarGridSpec(
            num_scalar_prefetch=0,
            grid=(B,),
            in_specs=[
                pl.BlockSpec((1, H, W, C), lambda b: (b, 0, 0, 0)),   # x
                pl.BlockSpec((9 * C, C), lambda b: (0, 0)),           # w1 (im2col)
                pl.BlockSpec((1, 1, C), lambda b: (0, 0, 0)),         # b1
                pl.BlockSpec((9 * C, C), lambda b: (0, 0)),           # w2 (im2col)
                pl.BlockSpec((1, 1, C), lambda b: (0, 0, 0)),         # b2
            ],
            out_specs=pl.BlockSpec((1, H, W, C), lambda b: (b, 0, 0, 0)),
            scratch_shapes=[
                pltpu.VMEM((Hp, Wp, C), jnp.float32),   # padded input
                pltpu.VMEM((Hp, Wp, C), jnp.float32),   # padded post-ReLU mid
            ],
        ),
        compiler_params=pltpu.CompilerParams(
            dimension_semantics=("parallel",),
            vmem_limit_bytes=vmem_limit),
        cost_estimate=pl.CostEstimate(flops=flops, transcendentals=0,
                                      bytes_accessed=bytes_accessed),
    )(x, w1, b1r, w2, b2r)


def res_block_pallas(x_nchw, w1_oihw, b1, w2_oihw, b2, *, dilation=1, res_scale=1.0):
    """PyTorch-compatible entry point: x is (B, C, H, W)."""
    x = jnp.transpose(x_nchw, (0, 2, 3, 1))                # NCHW -> NHWC
    out = res_block_pallas_nhwc(x, w1_oihw, b1, w2_oihw, b2,
                                dilation=dilation, res_scale=res_scale)
    return jnp.transpose(out, (0, 3, 1, 2))                # NHWC -> NCHW


def _reference(x_nchw, w1_oihw, b1, w2_oihw, b2, *, dilation=1, res_scale=1.0):
    """Pure-JAX reference mirroring the PyTorch forward (NCHW)."""
    d = int(dilation)
    dn = ("NCHW", "OIHW", "NCHW")

    def conv(x, w, b):
        y = lax.conv_general_dilated(
            x, w, window_strides=(1, 1), padding=((d, d), (d, d)),
            rhs_dilation=(d, d), dimension_numbers=dn)
        return y + b.reshape(1, -1, 1, 1)

    y = conv(x_nchw, w1_oihw, b1)
    y = jnp.maximum(y, 0.0)
    y = conv(y, w2_oihw, b2)
    return x_nchw + res_scale * y


if __name__ == "__main__":
    B, C, H, W = 2, 8, 16, 16
    dilation = 1
    res_scale = 0.5

    key = jax.random.PRNGKey(0)
    kx, k1, k2, k3, k4 = jax.random.split(key, 5)

    x = jax.random.normal(kx, (B, C, H, W), dtype=jnp.float32)
    # deterministic synthetic parameters (PyTorch Conv2d shapes: (O, I, 3, 3), (O,))
    w1 = jax.random.normal(k1, (C, C, 3, 3), dtype=jnp.float32) * 0.1
    b1 = jax.random.normal(k2, (C,), dtype=jnp.float32) * 0.1
    w2 = jax.random.normal(k3, (C, C, 3, 3), dtype=jnp.float32) * 0.1
    b2 = jax.random.normal(k4, (C,), dtype=jnp.float32) * 0.1

    out = res_block_pallas(x, w1, b1, w2, b2, dilation=dilation, res_scale=res_scale)
    out = jax.block_until_ready(out)

    ref = _reference(x, w1, b1, w2, b2, dilation=dilation, res_scale=res_scale)
    assert out.shape == (B, C, H, W)
    assert jnp.allclose(out, ref, atol=1e-4, rtol=1e-4), \
        f"max abs err {jnp.max(jnp.abs(out - ref))}"

    print("KERNEL_OK")
</pallas_src>

<mosaic_0001>
module attributes {stable_mosaic.version = 11 : i64} {
  func.func @_resblock_kernel(%arg0: i32, %arg1: memref<1x16x16x8xf32, #tpu.memory_space<vmem>>, %arg2: memref<72x8xf32, #tpu.memory_space<vmem>>, %arg3: memref<1x1x8xf32, #tpu.memory_space<vmem>>, %arg4: memref<72x8xf32, #tpu.memory_space<vmem>>, %arg5: memref<1x1x8xf32, #tpu.memory_space<vmem>>, %arg6: memref<1x16x16x8xf32, #tpu.memory_space<vmem>>, %arg7: memref<18x18x8xf32, #tpu.memory_space<vmem>>, %arg8: memref<18x18x8xf32, #tpu.memory_space<vmem>>) attributes {dimension_semantics = [#tpu.dimension_semantics<parallel>], iteration_bounds = array<i64: 2>, scalar_prefetch = 0 : i64, scratch_operands = 2 : i64, tpu.core_type = #tpu.core_type<tc>, window_params = [{transform_indices = @transform_0, window_bounds = array<i64: 1, 16, 16, 8>}, {pipeline_mode = #tpu.pipeline_mode<synchronous>, transform_indices = @transform_1, window_bounds = array<i64: 72, 8>}, {pipeline_mode = #tpu.pipeline_mode<synchronous>, transform_indices = @transform_2, window_bounds = array<i64: 1, 1, 8>}, {pipeline_mode = #tpu.pipeline_mode<synchronous>, transform_indices = @transform_3, window_bounds = array<i64: 72, 8>}, {pipeline_mode = #tpu.pipeline_mode<synchronous>, transform_indices = @transform_4, window_bounds = array<i64: 1, 1, 8>}, {transform_indices = @transform_5, window_bounds = array<i64: 1, 16, 16, 8>}]} {
    %c0 = arith.constant 0 : index
    %c0_0 = arith.constant 0 : index
    %c0_1 = arith.constant 0 : index
    %c0_2 = arith.constant 0 : index
    %0 = vector.load %arg1[%c0, %c0_0, %c0_1, %c0_2] : memref<1x16x16x8xf32, #tpu.memory_space<vmem>>, vector<1x16x16x8xf32>
    %1 = vector.shape_cast %0 : vector<1x16x16x8xf32> to vector<16x16x8xf32>
    %cst = arith.constant 0.000000e+00 : f32
    %2 = vector.broadcast %cst : f32 to vector<1x18x8xf32>
    %c0_3 = arith.constant 0 : index
    %c0_4 = arith.constant 0 : index
    %c0_5 = arith.constant 0 : index
    %3 = vector.load %arg7[%c0_3, %c0_4, %c0_5] : memref<18x18x8xf32, #tpu.memory_space<vmem>>, vector<1x18x8xf32>
    tpu.vector_store %arg7[%c0_3, %c0_4, %c0_5], %2 {strides = array<i32>} : memref<18x18x8xf32, #tpu.memory_space<vmem>>, vector<1x18x8xf32>,
    %cst_6 = arith.constant 0.000000e+00 : f32
    %4 = vector.broadcast %cst_6 : f32 to vector<1x18x8xf32>
    %c17 = arith.constant 17 : index
    %c0_7 = arith.constant 0 : index
    %c0_8 = arith.constant 0 : index
    %5 = vector.load %arg7[%c17, %c0_7, %c0_8] : memref<18x18x8xf32, #tpu.memory_space<vmem>>, vector<1x18x8xf32>
    tpu.vector_store %arg7[%c17, %c0_7, %c0_8], %4 {strides = array<i32>} : memref<18x18x8xf32, #tpu.memory_space<vmem>>, vector<1x18x8xf32>,
    %cst_9 = arith.constant 0.000000e+00 : f32
    %6 = vector.broadcast %cst_9 : f32 to vector<18x1x8xf32>
    %c0_10 = arith.constant 0 : index
    %c0_11 = arith.constant 0 : index
    %c0_12 = arith.constant 0 : index
    %7 = vector.load %arg7[%c0_10, %c0_11, %c0_12] : memref<18x18x8xf32, #tpu.memory_space<vmem>>, vector<18x1x8xf32>
    tpu.vector_store %arg7[%c0_10, %c0_11, %c0_12], %6 {strides = array<i32>} : memref<18x18x8xf32, #tpu.memory_space<vmem>>, vector<18x1x8xf32>,
    %cst_13 = arith.constant 0.000000e+00 : f32
    %8 = vector.broadcast %cst_13 : f32 to vector<18x1x8xf32>
    %c0_14 = arith.constant 0 : index
    %c17_15 = arith.constant 17 : index
    %c0_16 = arith.constant 0 : index
    %9 = vector.load %arg7[%c0_14, %c17_15, %c0_16] : memref<18x18x8xf32, #tpu.memory_space<vmem>>, vector<18x1x8xf32>
    tpu.vector_store %arg7[%c0_14, %c17_15, %c0_16], %8 {strides = array<i32>} : memref<18x18x8xf32, #tpu.memory_space<vmem>>, vector<18x1x8xf32>,
    %c1 = arith.constant 1 : index
    %c1_17 = arith.constant 1 : index
    %c0_18 = arith.constant 0 : index
    %10 = vector.load %arg7[%c1, %c1_17, %c0_18] : memref<18x18x8xf32, #tpu.memory_space<vmem>>, vector<16x16x8xf32>
    tpu.vector_store %arg7[%c1, %c1_17, %c0_18], %1 {strides = array<i32>} : memref<18x18x8xf32, #tpu.memory_space<vmem>>, vector<16x16x8xf32>,
    %c0_19 = arith.constant 0 : index
    %c0_20 = arith.constant 0 : index
    %c0_21 = arith.constant 0 : index
    %11 = vector.load %arg7[%c0_19, %c0_20, %c0_21] : memref<18x18x8xf32, #tpu.memory_space<vmem>>, vector<16x16x8xf32>
    %c0_22 = arith.constant 0 : index
    %c1_23 = arith.constant 1 : index
    %c0_24 = arith.constant 0 : index
    %12 = vector.load %arg7[%c0_22, %c1_23, %c0_24] : memref<18x18x8xf32, #tpu.memory_space<vmem>>, vector<16x16x8xf32>
    %c0_25 = arith.constant 0 : index
    %c2 = arith.constant 2 : index
    %c0_26 = arith.constant 0 : index
    %13 = vector.load %arg7[%c0_25, %c2, %c0_26] : memref<18x18x8xf32, #tpu.memory_space<vmem>>, vector<16x16x8xf32>
    %c1_27 = arith.constant 1 : index
    %c0_28 = arith.constant 0 : index
    %c0_29 = arith.constant 0 : index
    %14 = vector.load %arg7[%c1_27, %c0_28, %c0_29] : memref<18x18x8xf32, #tpu.memory_space<vmem>>, vector<16x16x8xf32>
    %c1_30 = arith.constant 1 : index
    %c1_31 = arith.constant 1 : index
    %c0_32 = arith.constant 0 : index
    %15 = vector.load %arg7[%c1_30, %c1_31, %c0_32] : memref<18x18x8xf32, #tpu.memory_space<vmem>>, vector<16x16x8xf32>
    %c1_33 = arith.constant 1 : index
    %c2_34 = arith.constant 2 : index
    %c0_35 = arith.constant 0 : index
    %16 = vector.load %arg7[%c1_33, %c2_34, %c0_35] : memref<18x18x8xf32, #tpu.memory_space<vmem>>, vector<16x16x8xf32>
    %c2_36 = arith.constant 2 : index
    %c0_37 = arith.constant 0 : index
    %c0_38 = arith.constant 0 : index
    %17 = vector.load %arg7[%c2_36, %c0_37, %c0_38] : memref<18x18x8xf32, #tpu.memory_space<vmem>>, vector<16x16x8xf32>
    %c2_39 = arith.constant 2 : index
    %c1_40 = arith.constant 1 : index
    %c0_41 = arith.constant 0 : index
    %18 = vector.load %arg7[%c2_39, %c1_40, %c0_41] : memref<18x18x8xf32, #tpu.memory_space<vmem>>, vector<16x16x8xf32>
    %c2_42 = arith.constant 2 : index
    %c2_43 = arith.constant 2 : index
    %c0_44 = arith.constant 0 : index
    %19 = vector.load %arg7[%c2_42, %c2_43, %c0_44] : memref<18x18x8xf32, #tpu.memory_space<vmem>>, vector<16x16x8xf32>
    %20 = tpu.concatenate %11, %12, %13, %14, %15, %16, %17, %18, %19 in 2 : vector<16x16x8xf32>, vector<16x16x8xf32>, vector<16x16x8xf32>, vector<16x16x8xf32>, vector<16x16x8xf32>, vector<16x16x8xf32>, vector<16x16x8xf32>, vector<16x16x8xf32>, vector<16x16x8xf32> -> vector<16x16x72xf32>
    %c0_45 = arith.constant 0 : index
    %c0_46 = arith.constant 0 : index
    %21 = vector.load %arg2[%c0_45, %c0_46] : memref<72x8xf32, #tpu.memory_space<vmem>>, vector<72x8xf32>
    %cst_47 = arith.constant dense<0.000000e+00> : vector<16x16x8xf32>
    %22 = tpu.matmul %20, %21, %cst_47 {dimension_numbers = #tpu.dot_dimension_numbers<[2], [0], [0, 1], [1], [0, 0, 0, 1, 1, 1], [], []>} : vector<16x16x72xf32>, vector<72x8xf32>, vector<16x16x8xf32> -> vector<16x16x8xf32>
    %c0_48 = arith.constant 0 : index
    %c0_49 = arith.constant 0 : index
    %c0_50 = arith.constant 0 : index
    %23 = vector.load %arg3[%c0_48, %c0_49, %c0_50] : memref<1x1x8xf32, #tpu.memory_space<vmem>>, vector<1x1x8xf32>
    %24 = vector.broadcast %23 : vector<1x1x8xf32> to vector<16x16x8xf32>
    %25 = arith.addf %22, %24 : vector<16x16x8xf32>
    %cst_51 = arith.constant 0.000000e+00 : f32
    %26 = vector.broadcast %cst_51 : f32 to vector<16x16x8xf32>
    %27 = arith.maximumf %25, %26 : vector<16x16x8xf32>
    %cst_52 = arith.constant 0.000000e+00 : f32
    %28 = vector.broadcast %cst_52 : f32 to vector<1x18x8xf32>
    %c0_53 = arith.constant 0 : index
    %c0_54 = arith.constant 0 : index
    %c0_55 = arith.constant 0 : index
    %29 = vector.load %arg8[%c0_53, %c0_54, %c0_55] : memref<18x18x8xf32, #tpu.memory_space<vmem>>, vector<1x18x8xf32>
    tpu.vector_store %arg8[%c0_53, %c0_54, %c0_55], %28 {strides = array<i32>} : memref<18x18x8xf32, #tpu.memory_space<vmem>>, vector<1x18x8xf32>,
    %cst_56 = arith.constant 0.000000e+00 : f32
    %30 = vector.broadcast %cst_56 : f32 to vector<1x18x8xf32>
    %c17_57 = arith.constant 17 : index
    %c0_58 = arith.constant 0 : index
    %c0_59 = arith.constant 0 : index
    %31 = vector.load %arg8[%c17_57, %c0_58, %c0_59] : memref<18x18x8xf32, #tpu.memory_space<vmem>>, vector<1x18x8xf32>
    tpu.vector_store %arg8[%c17_57, %c0_58, %c0_59], %30 {strides = array<i32>} : memref<18x18x8xf32, #tpu.memory_space<vmem>>, vector<1x18x8xf32>,
    %cst_60 = arith.constant 0.000000e+00 : f32
    %32 = vector.broadcast %cst_60 : f32 to vector<18x1x8xf32>
    %c0_61 = arith.constant 0 : index
    %c0_62 = arith.constant 0 : index
    %c0_63 = arith.constant 0 : index
    %33 = vector.load %arg8[%c0_61, %c0_62, %c0_63] : memref<18x18x8xf32, #tpu.memory_space<vmem>>, vector<18x1x8xf32>
    tpu.vector_store %arg8[%c0_61, %c0_62, %c0_63], %32 {strides = array<i32>} : memref<18x18x8xf32, #tpu.memory_space<vmem>>, vector<18x1x8xf32>,
    %cst_64 = arith.constant 0.000000e+00 : f32
    %34 = vector.broadcast %cst_64 : f32 to vector<18x1x8xf32>
    %c0_65 = arith.constant 0 : index
    %c17_66 = arith.constant 17 : index
    %c0_67 = arith.constant 0 : index
    %35 = vector.load %arg8[%c0_65, %c17_66, %c0_67] : memref<18x18x8xf32, #tpu.memory_space<vmem>>, vector<18x1x8xf32>
    tpu.vector_store %arg8[%c0_65, %c17_66, %c0_67], %34 {strides = array<i32>} : memref<18x18x8xf32, #tpu.memory_space<vmem>>, vector<18x1x8xf32>,
    %c1_68 = arith.constant 1 : index
    %c1_69 = arith.constant 1 : index
    %c0_70 = arith.constant 0 : index
    %36 = vector.load %arg8[%c1_68, %c1_69, %c0_70] : memref<18x18x8xf32, #tpu.memory_space<vmem>>, vector<16x16x8xf32>
    tpu.vector_store %arg8[%c1_68, %c1_69, %c0_70], %27 {strides = array<i32>} : memref<18x18x8xf32, #tpu.memory_space<vmem>>, vector<16x16x8xf32>,
    %c0_71 = arith.constant 0 : index
    %c0_72 = arith.constant 0 : index
    %c0_73 = arith.constant 0 : index
    %37 = vector.load %arg8[%c0_71, %c0_72, %c0_73] : memref<18x18x8xf32, #tpu.memory_space<vmem>>, vector<16x16x8xf32>
    %c0_74 = arith.constant 0 : index
    %c1_75 = arith.constant 1 : index
    %c0_76 = arith.constant 0 : index
    %38 = vector.load %arg8[%c0_74, %c1_75, %c0_76] : memref<18x18x8xf32, #tpu.memory_space<vmem>>, vector<16x16x8xf32>
    %c0_77 = arith.constant 0 : index
    %c2_78 = arith.constant 2 : index
    %c0_79 = arith.constant 0 : index
    %39 = vector.load %arg8[%c0_77, %c2_78, %c0_79] : memref<18x18x8xf32, #tpu.memory_space<vmem>>, vector<16x16x8xf32>
    %c1_80 = arith.constant 1 : index
    %c0_81 = arith.constant 0 : index
    %c0_82 = arith.constant 0 : index
    %40 = vector.load %arg8[%c1_80, %c0_81, %c0_82] : memref<18x18x8xf32, #tpu.memory_space<vmem>>, vector<16x16x8xf32>
    %c1_83 = arith.constant 1 : index
    %c1_84 = arith.constant 1 : index
    %c0_85 = arith.constant 0 : index
    %41 = vector.load %arg8[%c1_83, %c1_84, %c0_85] : memref<18x18x8xf32, #tpu.memory_space<vmem>>, vector<16x16x8xf32>
    %c1_86 = arith.constant 1 : index
    %c2_87 = arith.constant 2 : index
    %c0_88 = arith.constant 0 : index
    %42 = vector.load %arg8[%c1_86, %c2_87, %c0_88] : memref<18x18x8xf32, #tpu.memory_space<vmem>>, vector<16x16x8xf32>
    %c2_89 = arith.constant 2 : index
    %c0_90 = arith.constant 0 : index
    %c0_91 = arith.constant 0 : index
    %43 = vector.load %arg8[%c2_89, %c0_90, %c0_91] : memref<18x18x8xf32, #tpu.memory_space<vmem>>, vector<16x16x8xf32>
    %c2_92 = arith.constant 2 : index
    %c1_93 = arith.constant 1 : index
    %c0_94 = arith.constant 0 : index
    %44 = vector.load %arg8[%c2_92, %c1_93, %c0_94] : memref<18x18x8xf32, #tpu.memory_space<vmem>>, vector<16x16x8xf32>
    %c2_95 = arith.constant 2 : index
    %c2_96 = arith.constant 2 : index
    %c0_97 = arith.constant 0 : index
    %45 = vector.load %arg8[%c2_95, %c2_96, %c0_97] : memref<18x18x8xf32, #tpu.memory_space<vmem>>, vector<16x16x8xf32>
    %46 = tpu.concatenate %37, %38, %39, %40, %41, %42, %43, %44, %45 in 2 : vector<16x16x8xf32>, vector<16x16x8xf32>, vector<16x16x8xf32>, vector<16x16x8xf32>, vector<16x16x8xf32>, vector<16x16x8xf32>, vector<16x16x8xf32>, vector<16x16x8xf32>, vector<16x16x8xf32> -> vector<16x16x72xf32>
    %c0_98 = arith.constant 0 : index
    %c0_99 = arith.constant 0 : index
    %47 = vector.load %arg4[%c0_98, %c0_99] : memref<72x8xf32, #tpu.memory_space<vmem>>, vector<72x8xf32>
    %cst_100 = arith.constant dense<0.000000e+00> : vector<16x16x8xf32>
    %48 = tpu.matmul %46, %47, %cst_100 {dimension_numbers = #tpu.dot_dimension_numbers<[2], [0], [0, 1], [1], [0, 0, 0, 1, 1, 1], [], []>} : vector<16x16x72xf32>, vector<72x8xf32>, vector<16x16x8xf32> -> vector<16x16x8xf32>
    %c0_101 = arith.constant 0 : index
    %c0_102 = arith.constant 0 : index
    %c0_103 = arith.constant 0 : index
    %49 = vector.load %arg5[%c0_101, %c0_102, %c0_103] : memref<1x1x8xf32, #tpu.memory_space<vmem>>, vector<1x1x8xf32>
    %50 = vector.broadcast %49 : vector<1x1x8xf32> to vector<16x16x8xf32>
    %51 = arith.addf %48, %50 : vector<16x16x8xf32>
    %cst_104 = arith.constant 5.000000e-01 : f32
    %52 = vector.broadcast %cst_104 : f32 to vector<16x16x8xf32>
    %53 = arith.mulf %52, %51 : vector<16x16x8xf32>
    %54 = arith.addf %1, %53 : vector<16x16x8xf32>
    %c0_105 = arith.constant 0 : index
    %c0_106 = arith.constant 0 : index
    %c0_107 = arith.constant 0 : index
    %c0_108 = arith.constant 0 : index
    %55 = vector.load %arg6[%c0_105, %c0_106, %c0_107, %c0_108] : memref<1x16x16x8xf32, #tpu.memory_space<vmem>>, vector<1x16x16x8xf32>
    %56 = vector.shape_cast %55 : vector<1x16x16x8xf32> to vector<16x16x8xf32>
    %57 = vector.shape_cast %54 : vector<16x16x8xf32> to vector<1x16x16x8xf32>
    tpu.vector_store %arg6[%c0_105, %c0_106, %c0_107, %c0_108], %57 {strides = array<i32>} : memref<1x16x16x8xf32, #tpu.memory_space<vmem>>, vector<1x16x16x8xf32>,
    return
  }
  func.func @transform_0(%arg0: i32) -> (i32, i32, i32, i32) {
    %c0_i32 = arith.constant 0 : i32
    %c0_i32_0 = arith.constant 0 : i32
    %c0_i32_1 = arith.constant 0 : i32
    %c0_i32_2 = arith.constant 0 : i32
    return %arg0, %c0_i32, %c0_i32_0, %c0_i32_1 : i32, i32, i32, i32
  }
  func.func @transform_1(%arg0: i32) -> (i32, i32) {
    %c0_i32 = arith.constant 0 : i32
    %c0_i32_0 = arith.constant 0 : i32
    %c0_i32_1 = arith.constant 0 : i32
    return %c0_i32, %c0_i32_0 : i32, i32
  }
  func.func @transform_2(%arg0: i32) -> (i32, i32, i32) {
    %c0_i32 = arith.constant 0 : i32
    %c0_i32_0 = arith.constant 0 : i32
    %c0_i32_1 = arith.constant 0 : i32
    %c0_i32_2 = arith.constant 0 : i32
    return %c0_i32, %c0_i32_0, %c0_i32_1 : i32, i32, i32
  }
  func.func @transform_3(%arg0: i32) -> (i32, i32) {
    %c0_i32 = arith.constant 0 : i32
    %c0_i32_0 = arith.constant 0 : i32
    %c0_i32_1 = arith.constant 0 : i32
    return %c0_i32, %c0_i32_0 : i32, i32
  }
  func.func @transform_4(%arg0: i32) -> (i32, i32, i32) {
    %c0_i32 = arith.constant 0 : i32
    %c0_i32_0 = arith.constant 0 : i32
    %c0_i32_1 = arith.constant 0 : i32
    %c0_i32_2 = arith.constant 0 : i32
    return %c0_i32, %c0_i32_0, %c0_i32_1 : i32, i32, i32
  }
  func.func @transform_5(%arg0: i32) -> (i32, i32, i32, i32) {
    %c0_i32 = arith.constant 0 : i32
    %c0_i32_0 = arith.constant 0 : i32
    %c0_i32_1 = arith.constant 0 : i32
    %c0_i32_2 = arith.constant 0 : i32
    return %arg0, %c0_i32, %c0_i32_0, %c0_i32_1 : i32, i32, i32, i32
  }
}

</mosaic_0001>

<llo_original>
// kernel: tpu_custom_call.1
$region0: #{tpu_custom_call.1}
  #allocation0 [shape = 'u32[]', space=smem, size = 0x4, offset = 0x4, fixed_abs, tag = 'smem constant byte address 0x4 - core index']
  #allocation1 [shape = 'u32[144,128]{1,0:T(1,128)}', space=vmem, size = 0x12000, scoped, tag = 'internal scratch']
  #allocation2 [shape = 'f32[18,18,8]{2,1,0:T(8,128)}', space=vmem, size = 0x36000, scoped, tag = 'scratch operand']
  #allocation3 [shape = 'f32[18,18,8]{2,1,0:T(8,128)}', space=vmem, size = 0x36000, scoped, tag = 'scratch operand']
  %s0 = inlined_call_operand.vmem [shape: f32[2,16,16,8], index: 0, kind: input, shape index: {}]
  %s1 = inlined_call_operand.vmem [shape: f32[72,8], index: 1, kind: input, shape index: {}]
  %s2 = inlined_call_operand.vmem [shape: f32[1,1,8], index: 2, kind: input, shape index: {}]
  %s3 = inlined_call_operand.vmem [shape: f32[72,8], index: 3, kind: input, shape index: {}]
  %s4 = inlined_call_operand.vmem [shape: f32[1,1,8], index: 4, kind: input, shape index: {}]
  %s5 = inlined_call_operand.vmem [shape: f32[2,16,16,8], index: 5, kind: output, shape index: {}]
  %s6 = sld [smem:[#allocation0]]
  $region53: #{tpu_custom_call.1} parent=0
    _
  %s8 = ssub.s32 1, %s6
  %s9 = scalar_select 0, %s8, %s6
  loop: start=0, step=1, limit=4
  $region2: #{tpu_custom_call.1} parent=0 // loop_pre_header
    _
  $region3: #{tpu_custom_call.1} parent=0 // loop_header
    %s11 = sphi 0, %s15
    %p12 = scmp.ge.s32.totalorder %s11, 4
    %s21 = sphi 0, %s23
    %s24 = sphi 0, %s21
    %s25 = sphi 0, %s24
    %s41 = sphi 0, %s25
    %s45 = sphi 0, %s45
    %s47 = sphi 0, %s45
    %s48 = sphi 0, %s47
    %s62 = sphi 0, %s48
    %s66 = sphi 0, %s66
    %s68 = sphi 0, %s66
    %s69 = sphi 0, %s68
    %s83 = sphi 0, %s69
    %s87 = sphi 0, %s87
    %s89 = sphi 0, %s87
    %s90 = sphi 0, %s89
    %s104 = sphi 0, %s90
    %s108 = sphi 0, %s108
    %s110 = sphi 0, %s108
    %s111 = sphi 0, %s110
    %s125 = sphi 0, %s111
    %s131 = sphi 0, %s133
    %s134 = sphi 0, %s131
    %s135 = sphi 0, %s134
    %s151 = sphi 0, %s135
  $region4: #{tpu_custom_call.1} parent=0 // loop_header_branch
    %14 = sbr.rel (%p12) target = $region8
  $region5: #{tpu_custom_call.1} parent=0 // loop_body
    %s16 = ssub.s32 %s11, 1
    %s17 = ssub.s32 %s11, 2
    %s18 = sadd.s32 %s11, 1
    %s19 = ssub.s32 %s11, %s18
    %p20 = scmp.eq.s32.totalorder %s19, 0
    %s22 = sadd.s32 %s21, 1
    %s23 = scalar_select %p20, %s21, %s22
    %p26 = pneg %p20
    %p27 = scmp.eq.s32.totalorder %s11, 1
    %p28 = por %p26, %p27
    %p29 = scmp.ne.s32.totalorder %s21, %s24
    %p30 = scmp.eq.s32.totalorder %s11, 0
    %p31 = por %p29, %p30
    %p32 = scmp.ne.s32.totalorder %s21, %s24
    %p33 = scmp.eq.s32.totalorder %s16, 1
    %p34 = por %p32, %p33
    %p35 = scmp.ne.s32.totalorder %s24, %s25
    %p36 = scmp.eq.s32.totalorder %s16, 0
    %p37 = por %p35, %p36
    %p38 = scmp.ne.s32.totalorder %s24, %s25
    %p39 = scmp.eq.s32.totalorder %s17, 1
    %p40 = por %p38, %p39
    %p42 = scmp.ne.s32.totalorder %s25, %s41
    %p43 = scmp.eq.s32.totalorder %s17, 0
    %p44 = por %p42, %p43
    %s46 = sadd.s32 %s45, 1
    %p49 = scmp.eq.s32.totalorder %s11, 1
    %p50 = scmp.ne.s32.totalorder %s45, %s47
    %p51 = scmp.eq.s32.totalorder %s11, 0
    %p52 = por %p50, %p51
    %p53 = scmp.ne.s32.totalorder %s45, %s47
    %p54 = scmp.eq.s32.totalorder %s16, 1
    %p55 = por %p53, %p54
    %p56 = scmp.ne.s32.totalorder %s47, %s48
    %p57 = scmp.eq.s32.totalorder %s16, 0
    %p58 = por %p56, %p57
    %p59 = scmp.ne.s32.totalorder %s47, %s48
    %p60 = scmp.eq.s32.totalorder %s17, 1
    %p61 = por %p59, %p60
    %p63 = scmp.ne.s32.totalorder %s48, %s62
    %p64 = scmp.eq.s32.totalorder %s17, 0
    %p65 = por %p63, %p64
    %s67 = sadd.s32 %s66, 1
    %p70 = scmp.eq.s32.totalorder %s11, 1
    %p71 = scmp.ne.s32.totalorder %s66, %s68
    %p72 = scmp.eq.s32.totalorder %s11, 0
    %p73 = por %p71, %p72
    %p74 = scmp.ne.s32.totalorder %s66, %s68
    %p75 = scmp.eq.s32.totalorder %s16, 1
    %p76 = por %p74, %p75
    %p77 = scmp.ne.s32.totalorder %s68, %s69
    %p78 = scmp.eq.s32.totalorder %s16, 0
    %p79 = por %p77, %p78
    %p80 = scmp.ne.s32.totalorder %s68, %s69
    %p81 = scmp.eq.s32.totalorder %s17, 1
    %p82 = por %p80, %p81
    %p84 = scmp.ne.s32.totalorder %s69, %s83
    %p85 = scmp.eq.s32.totalorder %s17, 0
    %p86 = por %p84, %p85
    %s88 = sadd.s32 %s87, 1
    %p91 = scmp.eq.s32.totalorder %s11, 1
    %p92 = scmp.ne.s32.totalorder %s87, %s89
    %p93 = scmp.eq.s32.totalorder %s11, 0
    %p94 = por %p92, %p93
    %p95 = scmp.ne.s32.totalorder %s87, %s89
    %p96 = scmp.eq.s32.totalorder %s16, 1
    %p97 = por %p95, %p96
    %p98 = scmp.ne.s32.totalorder %s89, %s90
    %p99 = scmp.eq.s32.totalorder %s16, 0
    %p100 = por %p98, %p99
    %p101 = scmp.ne.s32.totalorder %s89, %s90
    %p102 = scmp.eq.s32.totalorder %s17, 1
    %p103 = por %p101, %p102
    %p105 = scmp.ne.s32.totalorder %s90, %s104
    %p106 = scmp.eq.s32.totalorder %s17, 0
    %p107 = por %p105, %p106
    %s109 = sadd.s32 %s108, 1
    %p112 = scmp.eq.s32.totalorder %s11, 1
    %p113 = scmp.ne.s32.totalorder %s108, %s110
    %p114 = scmp.eq.s32.totalorder %s11, 0
    %p115 = por %p113, %p114
    %p116 = scmp.ne.s32.totalorder %s108, %s110
    %p117 = scmp.eq.s32.totalorder %s16, 1
    %p118 = por %p116, %p117
    %p119 = scmp.ne.s32.totalorder %s110, %s111
    %p120 = scmp.eq.s32.totalorder %s16, 0
    %p121 = por %p119, %p120
    %p122 = scmp.ne.s32.totalorder %s110, %s111
    %p123 = scmp.eq.s32.totalorder %s17, 1
    %p124 = por %p122, %p123
    %p126 = scmp.ne.s32.totalorder %s111, %s125
    %p127 = scmp.eq.s32.totalorder %s17, 0
    %p128 = por %p126, %p127
    %s129 = ssub.s32 %s11, %s18
    %p130 = scmp.eq.s32.totalorder %s129, 0
    %s132 = sadd.s32 %s131, 1
    %s133 = scalar_select %p130, %s131, %s132
    %p136 = pneg %p130
    %p137 = scmp.eq.s32.totalorder %s11, 1
    %p138 = por %p136, %p137
    %p139 = scmp.ne.s32.totalorder %s131, %s134
    %p140 = scmp.eq.s32.totalorder %s11, 0
    %p141 = por %p139, %p140
    %p142 = scmp.ne.s32.totalorder %s131, %s134
    %p143 = scmp.eq.s32.totalorder %s16, 1
    %p144 = por %p142, %p143
    %p145 = scmp.ne.s32.totalorder %s134, %s135
    %p146 = scmp.eq.s32.totalorder %s16, 0
    %p147 = por %p145, %p146
    %p148 = scmp.ne.s32.totalorder %s134, %s135
    %p149 = scmp.eq.s32.totalorder %s17, 1
    %p150 = por %p148, %p149
    %p152 = scmp.ne.s32.totalorder %s135, %s151
    %p153 = scmp.eq.s32.totalorder %s17, 0
    %p154 = por %p152, %p153
    %p155 = scmp.le.s32.totalorder 1, %s11
    %p156 = scmp.lt.s32.totalorder %s11, 3
    %p157 = pnand %p155, %p156
    %p158 = pneg %p157
    // Predicated region
    $region9: #{tpu_custom_call.1} parent=5 // pred_check
      _
    $region10: #{tpu_custom_call.1} parent=5 // pred_check_branch
      %160 = sbr.rel (%p157) target = $region12
    $region11: #{tpu_custom_call.1} parent=5 // pred_region
      %s161 = ssub.s32 %s11, 1
      // Predicated region
      $region13: #{tpu_custom_call.1} parent=11 // pred_check
        %p162 = pneg %p58
      $region14: #{tpu_custom_call.1} parent=11 // pred_check_branch
        %164 = sbr.rel (%p162) target = $region16
      $region15: #{tpu_custom_call.1} parent=11 // pred_region
        _
      $region16: #{tpu_custom_call.1} parent=11 // pred_fallthru
        _
      // Predicated region
      $region17: #{tpu_custom_call.1} parent=11 // pred_check
        %p165 = pneg %p79
      $region18: #{tpu_custom_call.1} parent=11 // pred_check_branch
        %167 = sbr.rel (%p165) target = $region20
      $region19: #{tpu_custom_call.1} parent=11 // pred_region
        _
      $region20: #{tpu_custom_call.1} parent=11 // pred_fallthru
        _
      // Predicated region
      $region21: #{tpu_custom_call.1} parent=11 // pred_check
        %p168 = pneg %p100
      $region22: #{tpu_custom_call.1} parent=11 // pred_check_branch
        %170 = sbr.rel (%p168) target = $region24
      $region23: #{tpu_custom_call.1} parent=11 // pred_region
        _
      $region24: #{tpu_custom_call.1} parent=11 // pred_fallthru
        _
      // Predicated region
      $region25: #{tpu_custom_call.1} parent=11 // pred_check
        %p171 = pneg %p121
      $region26: #{tpu_custom_call.1} parent=11 // pred_check_branch
        %173 = sbr.rel (%p171) target = $region28
      $region27: #{tpu_custom_call.1} parent=11 // pred_region
        _
      $region28: #{tpu_custom_call.1} parent=11 // pred_fallthru
        _
    $region12: #{tpu_custom_call.1} parent=5 // pred_fallthru
      _
    %p174 = scmp.lt.s32.totalorder %s11, 2
    // Predicated region
    $region29: #{tpu_custom_call.1} parent=5 // pred_check
      %p175 = pneg %p174
    $region30: #{tpu_custom_call.1} parent=5 // pred_check_branch
      %177 = sbr.rel (%p175) target = $region32
    $region31: #{tpu_custom_call.1} parent=5 // pred_region
      // Predicated region
      $region33: #{tpu_custom_call.1} parent=31 // pred_check
        %p178 = pneg %p31
      $region34: #{tpu_custom_call.1} parent=31 // pred_check_branch
        %180 = sbr.rel (%p178) target = $region36
      $region35: #{tpu_custom_call.1} parent=31 // pred_region
        %p181 = scmp.lt.s32.totalorder %s11, 1
        %s182 = scalar_select %p181, %s11, 1
        %s183 = smul.addr %s182, 32
        %s184 = smul.addr %s183, 8
        %s185 = scalar_lea.vmem %s0, %s184
      $region36: #{tpu_custom_call.1} parent=31 // pred_fallthru
        _
    $region32: #{tpu_custom_call.1} parent=5 // pred_fallthru
      _
    %p186 = scmp.le.s32.totalorder 1, %s11
    %p187 = scmp.lt.s32.totalorder %s11, 3
    %p188 = pnand %p186, %p187
    %p189 = pneg %p188
    // Predicated region
    $region37: #{tpu_custom_call.1} parent=5 // pred_check
      _
    $region38: #{tpu_custom_call.1} parent=5 // pred_check_branch
      %191 = sbr.rel (%p188) target = $region40
    $region39: #{tpu_custom_call.1} parent=5 // pred_region
      %s192 = ssub.s32 %s11, 1
      %p193 = scmp.lt.s32.totalorder %s16, 1
      %s194 = scalar_select %p193, %s16, 1
      %s195 = smul.addr %s194, 32
      %s196 = smul.addr %s195, 8
      %s197 = scalar_lea.vmem %s0, %s196
      %p198 = pneg %p37
      %p199 = pneg %p34
      %p200 = pneg %p58
      %p201 = pneg %p55
      %p202 = pneg %p79
      %p203 = pneg %p76
      %p204 = pneg %p100
      %p205 = pneg %p97
      %p206 = pneg %p121
      %p207 = pneg %p118
      %p208 = pneg %p147
      %p209 = pneg %p144
      %p210 = scmp.lt.s32.totalorder %s16, 1
      %s211 = scalar_select %p210, %s16, 1
      %s212 = smul.addr %s211, 32
      %s213 = smul.addr %s212, 8
      %s214 = scalar_lea.vmem %s5, %s213
      %p215 = scmp.lt.s32.totalorder %s16, 1
      %s216 = scalar_select %p215, %s16, 1
      %s217 = smul.addr %s216, 32
      %s218 = smul.addr %s217, 8
      %s219 = scalar_lea.vmem %s0, %s218
      %p220 = scmp.lt.s32.totalorder %s16, 1
      %s221 = scalar_select %p220, %s16, 1
      %s222 = smul.addr %s221, 32
      %s223 = smul.addr %s222, 8
      %s224 = scalar_lea.vmem %s5, %s223
      %v225 = vld [vmem:[%s219] sm:$0xff]
      %v226 = vld [vmem:[%s219 + $0x8] sm:$0xff]
      %v227 = vld [vmem:[%s219 + $0x10] sm:$0xff]
      %v228 = vld [vmem:[%s219 + $0x18] sm:$0xff]
      %v229 = vld [vmem:[%s219 + $0x20] sm:$0xff]
      %v230 = vld [vmem:[%s219 + $0x28] sm:$0xff]
      %v231 = vld [vmem:[%s219 + $0x30] sm:$0xff]
      %v232 = vld [vmem:[%s219 + $0x38] sm:$0xff]
      %v233 = vld [vmem:[%s219 + $0x40] sm:$0xff]
      %v234 = vld [vmem:[%s219 + $0x48] sm:$0xff]
      %v235 = vld [vmem:[%s219 + $0x50] sm:$0xff]
      %v236 = vld [vmem:[%s219 + $0x58] sm:$0xff]
      %v237 = vld [vmem:[%s219 + $0x60] sm:$0xff]
      %v238 = vld [vmem:[%s219 + $0x68] sm:$0xff]
      %v239 = vld [vmem:[%s219 + $0x70] sm:$0xff]
      %v240 = vld [vmem:[%s219 + $0x78] sm:$0xff]
      %v241 = vld [vmem:[%s219 + $0x80] sm:$0xff]
      %v242 = vld [vmem:[%s219 + $0x88] sm:$0xff]
      %v243 = vld [vmem:[%s219 + $0x90] sm:$0xff]
      %v244 = vld [vmem:[%s219 + $0x98] sm:$0xff]
      %v245 = vld [vmem:[%s219 + $0xa0] sm:$0xff]
      %v246 = vld [vmem:[%s219 + $0xa8] sm:$0xff]
      %v247 = vld [vmem:[%s219 + $0xb0] sm:$0xff]
      %v248 = vld [vmem:[%s219 + $0xb8] sm:$0xff]
      %v249 = vld [vmem:[%s219 + $0xc0] sm:$0xff]
      %v250 = vld [vmem:[%s219 + $0xc8] sm:$0xff]
      %v251 = vld [vmem:[%s219 + $0xd0] sm:$0xff]
      %v252 = vld [vmem:[%s219 + $0xd8] sm:$0xff]
      %v253 = vld [vmem:[%s219 + $0xe0] sm:$0xff]
      %v254 = vld [vmem:[%s219 + $0xe8] sm:$0xff]
      %v255 = vld [vmem:[%s219 + $0xf0] sm:$0xff]
      %v256 = vld [vmem:[%s219 + $0xf8] sm:$0xff]
      %vm257 = vcmask 64512
      %258 = vst.msk [vmem:[#allocation2] sm:$0xff] %vm257, 0.0
      %259 = vst.msk [vmem:[#allocation2 + $0x8] sm:$0xff] %vm257, 0.0
      %vm260 = vcmask 58368
      %261 = vst.msk [vmem:[#allocation2 + $0x10] sm:$0x3] %vm260, 0.0
      %s262 = scalar_lea.vmem [#allocation2], 408
      %263 = vst.msk [vmem:[%s262] sm:$0xff] %vm257, 0.0
      %264 = vst.msk [vmem:[%s262 + $0x8] sm:$0xff] %vm257, 0.0
      %265 = vst.msk [vmem:[%s262 + $0x10] sm:$0x3] %vm260, 0.0
      %vm266 = vcmask 57344
      %267 = vst.msk [vmem:[#allocation2] sm:$0x1] %vm266, 0.0
      %268 = vst.msk [vmem:[#allocation2 + $0x18] sm:$0x1] %vm266, 0.0
      %269 = vst.msk [vmem:[#allocation2 + $0x30] sm:$0x1] %vm266, 0.0
      %270 = vst.msk [vmem:[#allocation2 + $0x48] sm:$0x1] %vm266, 0.0
      %271 = vst.msk [vmem:[#allocation2 + $0x60] sm:$0x1] %vm266, 0.0
      %272 = vst.msk [vmem:[#allocation2 + $0x78] sm:$0x1] %vm266, 0.0
      %273 = vst.msk [vmem:[#allocation2 + $0x90] sm:$0x1] %vm266, 0.0
      %274 = vst.msk [vmem:[#allocation2 + $0xa8] sm:$0x1] %vm266, 0.0
      %275 = vst.msk [vmem:[#allocation2 + $0xc0] sm:$0x1] %vm266, 0.0
      %276 = vst.msk [vmem:[#allocation2 + $0xd8] sm:$0x1] %vm266, 0.0
      %277 = vst.msk [vmem:[#allocation2 + $0xf0] sm:$0x1] %vm266, 0.0
      %278 = vst.msk [vmem:[#allocation2 + $0x108] sm:$0x1] %vm266, 0.0
      %279 = vst.msk [vmem:[#allocation2 + $0x120] sm:$0x1] %vm266, 0.0
      %280 = vst.msk [vmem:[#allocation2 + $0x138] sm:$0x1] %vm266, 0.0
      %281 = vst.msk [vmem:[#allocation2 + $0x150] sm:$0x1] %vm266, 0.0
      %282 = vst.msk [vmem:[#allocation2 + $0x168] sm:$0x1] %vm266, 0.0
      %283 = vst.msk [vmem:[#allocation2 + $0x180] sm:$0x1] %vm266, 0.0
      %284 = vst.msk [vmem:[#allocation2 + $0x198] sm:$0x1] %vm266, 0.0
      %285 = vst.msk [vmem:[#allocation2 + $0x11] sm:$0x1] %vm266, 0.0
      %286 = vst.msk [vmem:[#allocation2 + $0x29] sm:$0x1] %vm266, 0.0
      %287 = vst.msk [vmem:[#allocation2 + $0x41] sm:$0x1] %vm266, 0.0
      %288 = vst.msk [vmem:[#allocation2 + $0x59] sm:$0x1] %vm266, 0.0
      %289 = vst.msk [vmem:[#allocation2 + $0x71] sm:$0x1] %vm266, 0.0
      %290 = vst.msk [vmem:[#allocation2 + $0x89] sm:$0x1] %vm266, 0.0
      %291 = vst.msk [vmem:[#allocation2 + $0xa1] sm:$0x1] %vm266, 0.0
      %292 = vst.msk [vmem:[#allocation2 + $0xb9] sm:$0x1] %vm266, 0.0
      %293 = vst.msk [vmem:[#allocation2 + $0xd1] sm:$0x1] %vm266, 0.0
      %294 = vst.msk [vmem:[#allocation2 + $0xe9] sm:$0x1] %vm266, 0.0
      %295 = vst.msk [vmem:[#allocation2 + $0x101] sm:$0x1] %vm266, 0.0
      %296 = vst.msk [vmem:[#allocation2 + $0x119] sm:$0x1] %vm266, 0.0
      %297 = vst.msk [vmem:[#allocation2 + $0x131] sm:$0x1] %vm266, 0.0
      %298 = vst.msk [vmem:[#allocation2 + $0x149] sm:$0x1] %vm266, 0.0
      %299 = vst.msk [vmem:[#allocation2 + $0x161] sm:$0x1] %vm266, 0.0
      %300 = vst.msk [vmem:[#allocation2 + $0x179] sm:$0x1] %vm266, 0.0
      %301 = vst.msk [vmem:[#allocation2 + $0x191] sm:$0x1] %vm266, 0.0
      %302 = vst.msk [vmem:[#allocation2 + $0x1a9] sm:$0x1] %vm266, 0.0
      %s303 = scalar_lea.vmem [#allocation2], 24
      %304 = vst.msk [vmem:[%s303 + $0x1] sm:$0xff] %vm257, %v225
      %305 = vst.msk [vmem:[%s303 + $0x9] sm:$0xff] %vm257, %v226
      %306 = vst.msk [vmem:[%s303 + $0x19] sm:$0xff] %vm257, %v227
      %307 = vst.msk [vmem:[%s303 + $0x21] sm:$0xff] %vm257, %v228
      %308 = vst.msk [vmem:[%s303 + $0x31] sm:$0xff] %vm257, %v229
      %309 = vst.msk [vmem:[%s303 + $0x39] sm:$0xff] %vm257, %v230
      %310 = vst.msk [vmem:[%s303 + $0x49] sm:$0xff] %vm257, %v231
      %311 = vst.msk [vmem:[%s303 + $0x51] sm:$0xff] %vm257, %v232
      %312 = vst.msk [vmem:[%s303 + $0x61] sm:$0xff] %vm257, %v233
      %313 = vst.msk [vmem:[%s303 + $0x69] sm:$0xff] %vm257, %v234
      %314 = vst.msk [vmem:[%s303 + $0x79] sm:$0xff] %vm257, %v235
      %315 = vst.msk [vmem:[%s303 + $0x81] sm:$0xff] %vm257, %v236
      %316 = vst.msk [vmem:[%s303 + $0x91] sm:$0xff] %vm257, %v237
      %317 = vst.msk [vmem:[%s303 + $0x99] sm:$0xff] %vm257, %v238
      %318 = vst.msk [vmem:[%s303 + $0xa9] sm:$0xff] %vm257, %v239
      %319 = vst.msk [vmem:[%s303 + $0xb1] sm:$0xff] %vm257, %v240
      %320 = vst.msk [vmem:[%s303 + $0xc1] sm:$0xff] %vm257, %v241
      %321 = vst.msk [vmem:[%s303 + $0xc9] sm:$0xff] %vm257, %v242
      %322 = vst.msk [vmem:[%s303 + $0xd9] sm:$0xff] %vm257, %v243
      %323 = vst.msk [vmem:[%s303 + $0xe1] sm:$0xff] %vm257, %v244
      %324 = vst.msk [vmem:[%s303 + $0xf1] sm:$0xff] %vm257, %v245
      %325 = vst.msk [vmem:[%s303 + $0xf9] sm:$0xff] %vm257, %v246
      %326 = vst.msk [vmem:[%s303 + $0x109] sm:$0xff] %vm257, %v247
      %327 = vst.msk [vmem:[%s303 + $0x111] sm:$0xff] %vm257, %v248
      %328 = vst.msk [vmem:[%s303 + $0x121] sm:$0xff] %vm257, %v249
      %329 = vst.msk [vmem:[%s303 + $0x129] sm:$0xff] %vm257, %v250
      %330 = vst.msk [vmem:[%s303 + $0x139] sm:$0xff] %vm257, %v251
      %331 = vst.msk [vmem:[%s303 + $0x141] sm:$0xff] %vm257, %v252
      %332 = vst.msk [vmem:[%s303 + $0x151] sm:$0xff] %vm257, %v253
      %333 = vst.msk [vmem:[%s303 + $0x159] sm:$0xff] %vm257, %v254
      %334 = vst.msk [vmem:[%s303 + $0x169] sm:$0xff] %vm257, %v255
      %335 = vst.msk [vmem:[%s303 + $0x171] sm:$0xff] %vm257, %v256
      %v336 = vld [vmem:[#allocation2] sm:$0xff]
      %v337 = vld [vmem:[#allocation2 + $0x8] sm:$0xff]
      %v338 = vld [vmem:[#allocation2 + $0x18] sm:$0xff]
      %v339 = vld [vmem:[#allocation2 + $0x20] sm:$0xff]
      %v340 = vld [vmem:[#allocation2 + $0x30] sm:$0xff]
      %v341 = vld [vmem:[#allocation2 + $0x38] sm:$0xff]
      %v342 = vld [vmem:[#allocation2 + $0x48] sm:$0xff]
      %v343 = vld [vmem:[#allocation2 + $0x50] sm:$0xff]
      %v344 = vld [vmem:[#allocation2 + $0x60] sm:$0xff]
      %v345 = vld [vmem:[#allocation2 + $0x68] sm:$0xff]
      %v346 = vld [vmem:[#allocation2 + $0x78] sm:$0xff]
      %v347 = vld [vmem:[#allocation2 + $0x80] sm:$0xff]
      %v348 = vld [vmem:[#allocation2 + $0x90] sm:$0xff]
      %v349 = vld [vmem:[#allocation2 + $0x98] sm:$0xff]
      %v350 = vld [vmem:[#allocation2 + $0xa8] sm:$0xff]
      %v351 = vld [vmem:[#allocation2 + $0xb0] sm:$0xff]
      %v352 = vld [vmem:[#allocation2 + $0xc0] sm:$0xff]
      %v353 = vld [vmem:[#allocation2 + $0xc8] sm:$0xff]
      %v354 = vld [vmem:[#allocation2 + $0xd8] sm:$0xff]
      %v355 = vld [vmem:[#allocation2 + $0xe0] sm:$0xff]
      %v356 = vld [vmem:[#allocation2 + $0xf0] sm:$0xff]
      %v357 = vld [vmem:[#allocation2 + $0xf8] sm:$0xff]
      %v358 = vld [vmem:[#allocation2 + $0x108] sm:$0xff]
      %v359 = vld [vmem:[#allocation2 + $0x110] sm:$0xff]
      %v360 = vld [vmem:[#allocation2 + $0x120] sm:$0xff]
      %v361 = vld [vmem:[#allocation2 + $0x128] sm:$0xff]
      %v362 = vld [vmem:[#allocation2 + $0x138] sm:$0xff]
      %v363 = vld [vmem:[#allocation2 + $0x140] sm:$0xff]
      %v364 = vld [vmem:[#allocation2 + $0x150] sm:$0xff]
      %v365 = vld [vmem:[#allocation2 + $0x158] sm:$0xff]
      %v366 = vld [vmem:[#allocation2 + $0x168] sm:$0xff]
      %v367 = vld [vmem:[#allocation2 + $0x170] sm:$0xff]
      %v368 = vld [vmem:[#allocation2 + $0x1] sm:$0xff]
      %v369 = vld [vmem:[#allocation2 + $0x9] sm:$0xff]
      %v370 = vld [vmem:[#allocation2 + $0x19] sm:$0xff]
      %v371 = vld [vmem:[#allocation2 + $0x21] sm:$0xff]
      %v372 = vld [vmem:[#allocation2 + $0x31] sm:$0xff]
      %v373 = vld [vmem:[#allocation2 + $0x39] sm:$0xff]
      %v374 = vld [vmem:[#allocation2 + $0x49] sm:$0xff]
      %v375 = vld [vmem:[#allocation2 + $0x51] sm:$0xff]
      %v376 = vld [vmem:[#allocation2 + $0x61] sm:$0xff]
      %v377 = vld [vmem:[#allocation2 + $0x69] sm:$0xff]
      %v378 = vld [vmem:[#allocation2 + $0x79] sm:$0xff]
      %v379 = vld [vmem:[#allocation2 + $0x81] sm:$0xff]
      %v380 = vld [vmem:[#allocation2 + $0x91] sm:$0xff]
      %v381 = vld [vmem:[#allocation2 + $0x99] sm:$0xff]
      %v382 = vld [vmem:[#allocation2 + $0xa9] sm:$0xff]
      %v383 = vld [vmem:[#allocation2 + $0xb1] sm:$0xff]
      %v384 = vld [vmem:[#allocation2 + $0xc1] sm:$0xff]
      %v385 = vld [vmem:[#allocation2 + $0xc9] sm:$0xff]
      %v386 = vld [vmem:[#allocation2 + $0xd9] sm:$0xff]
      %v387 = vld [vmem:[#allocation2 + $0xe1] sm:$0xff]
      %v388 = vld [vmem:[#allocation2 + $0xf1] sm:$0xff]
      %v389 = vld [vmem:[#allocation2 + $0xf9] sm:$0xff]
      %v390 = vld [vmem:[#allocation2 + $0x109] sm:$0xff]
      %v391 = vld [vmem:[#allocation2 + $0x111] sm:$0xff]
      %v392 = vld [vmem:[#allocation2 + $0x121] sm:$0xff]
      %v393 = vld [vmem:[#allocation2 + $0x129] sm:$0xff]
      %v394 = vld [vmem:[#allocation2 + $0x139] sm:$0xff]
      %v395 = vld [vmem:[#allocation2 + $0x141] sm:$0xff]
      %v396 = vld [vmem:[#allocation2 + $0x151] sm:$0xff]
      %v397 = vld [vmem:[#allocation2 + $0x159] sm:$0xff]
      %v398 = vld [vmem:[#allocation2 + $0x169] sm:$0xff]
      %v399 = vld [vmem:[#allocation2 + $0x171] sm:$0xff]
      %v400 = vld [vmem:[#allocation2 + $0x2] sm:$0xff]
      %v401 = vld [vmem:[#allocation2 + $0xa] sm:$0xff]
      %v402 = vld [vmem:[#allocation2 + $0x1a] sm:$0xff]
      %v403 = vld [vmem:[#allocation2 + $0x22] sm:$0xff]
      %v404 = vld [vmem:[#allocation2 + $0x32] sm:$0xff]
      %v405 = vld [vmem:[#allocation2 + $0x3a] sm:$0xff]
      %v406 = vld [vmem:[#allocation2 + $0x4a] sm:$0xff]
      %v407 = vld [vmem:[#allocation2 + $0x52] sm:$0xff]
      %v408 = vld [vmem:[#allocation2 + $0x62] sm:$0xff]
      %v409 = vld [vmem:[#allocation2 + $0x6a] sm:$0xff]
      %v410 = vld [vmem:[#allocation2 + $0x7a] sm:$0xff]
      %v411 = vld [vmem:[#allocation2 + $0x82] sm:$0xff]
      %v412 = vld [vmem:[#allocation2 + $0x92] sm:$0xff]
      %v413 = vld [vmem:[#allocation2 + $0x9a] sm:$0xff]
      %v414 = vld [vmem:[#allocation2 + $0xaa] sm:$0xff]
      %v415 = vld [vmem:[#allocation2 + $0xb2] sm:$0xff]
      %v416 = vld [vmem:[#allocation2 + $0xc2] sm:$0xff]
      %v417 = vld [vmem:[#allocation2 + $0xca] sm:$0xff]
      %v418 = vld [vmem:[#allocation2 + $0xda] sm:$0xff]
      %v419 = vld [vmem:[#allocation2 + $0xe2] sm:$0xff]
      %v420 = vld [vmem:[#allocation2 + $0xf2] sm:$0xff]
      %v421 = vld [vmem:[#allocation2 + $0xfa] sm:$0xff]
      %v422 = vld [vmem:[#allocation2 + $0x10a] sm:$0xff]
      %v423 = vld [vmem:[#allocation2 + $0x112] sm:$0xff]
      %v424 = vld [vmem:[#allocation2 + $0x122] sm:$0xff]
      %v425 = vld [vmem:[#allocation2 + $0x12a] sm:$0xff]
      %v426 = vld [vmem:[#allocation2 + $0x13a] sm:$0xff]
      %v427 = vld [vmem:[#allocation2 + $0x142] sm:$0xff]
      %v428 = vld [vmem:[#allocation2 + $0x152] sm:$0xff]
      %v429 = vld [vmem:[#allocation2 + $0x15a] sm:$0xff]
      %v430 = vld [vmem:[#allocation2 + $0x16a] sm:$0xff]
      %v431 = vld [vmem:[#allocation2 + $0x172] sm:$0xff]
      %v432 = vld [vmem:[%s303] sm:$0xff]
      %v433 = vld [vmem:[%s303 + $0x8] sm:$0xff]
      %v434 = vld [vmem:[%s303 + $0x18] sm:$0xff]
      %v435 = vld [vmem:[%s303 + $0x20] sm:$0xff]
      %v436 = vld [vmem:[%s303 + $0x30] sm:$0xff]
      %v437 = vld [vmem:[%s303 + $0x38] sm:$0xff]
      %v438 = vld [vmem:[%s303 + $0x48] sm:$0xff]
      %v439 = vld [vmem:[%s303 + $0x50] sm:$0xff]
      %v440 = vld [vmem:[%s303 + $0x60] sm:$0xff]
      %v441 = vld [vmem:[%s303 + $0x68] sm:$0xff]
      %v442 = vld [vmem:[%s303 + $0x78] sm:$0xff]
      %v443 = vld [vmem:[%s303 + $0x80] sm:$0xff]
      %v444 = vld [vmem:[%s303 + $0x90] sm:$0xff]
      %v445 = vld [vmem:[%s303 + $0x98] sm:$0xff]
      %v446 = vld [vmem:[%s303 + $0xa8] sm:$0xff]
      %v447 = vld [vmem:[%s303 + $0xb0] sm:$0xff]
      %v448 = vld [vmem:[%s303 + $0xc0] sm:$0xff]
      %v449 = vld [vmem:[%s303 + $0xc8] sm:$0xff]
      %v450 = vld [vmem:[%s303 + $0xd8] sm:$0xff]
      %v451 = vld [vmem:[%s303 + $0xe0] sm:$0xff]
      %v452 = vld [vmem:[%s303 + $0xf0] sm:$0xff]
      %v453 = vld [vmem:[%s303 + $0xf8] sm:$0xff]
      %v454 = vld [vmem:[%s303 + $0x108] sm:$0xff]
      %v455 = vld [vmem:[%s303 + $0x110] sm:$0xff]
      %v456 = vld [vmem:[%s303 + $0x120] sm:$0xff]
      %v457 = vld [vmem:[%s303 + $0x128] sm:$0xff]
      %v458 = vld [vmem:[%s303 + $0x138] sm:$0xff]
      %v459 = vld [vmem:[%s303 + $0x140] sm:$0xff]
      %v460 = vld [vmem:[%s303 + $0x150] sm:$0xff]
      %v461 = vld [vmem:[%s303 + $0x158] sm:$0xff]
      %v462 = vld [vmem:[%s303 + $0x168] sm:$0xff]
      %v463 = vld [vmem:[%s303 + $0x170] sm:$0xff]
      %v464 = vld [vmem:[%s303 + $0x1] sm:$0xff]
      %v465 = vld [vmem:[%s303 + $0x9] sm:$0xff]
      %v466 = vld [vmem:[%s303 + $0x19] sm:$0xff]
      %v467 = vld [vmem:[%s303 + $0x21] sm:$0xff]
      %v468 = vld [vmem:[%s303 + $0x31] sm:$0xff]
      %v469 = vld [vmem:[%s303 + $0x39] sm:$0xff]
      %v470 = vld [vmem:[%s303 + $0x49] sm:$0xff]
      %v471 = vld [vmem:[%s303 + $0x51] sm:$0xff]
      %v472 = vld [vmem:[%s303 + $0x61] sm:$0xff]
      %v473 = vld [vmem:[%s303 + $0x69] sm:$0xff]
      %v474 = vld [vmem:[%s303 + $0x79] sm:$0xff]
      %v475 = vld [vmem:[%s303 + $0x81] sm:$0xff]
      %v476 = vld [vmem:[%s303 + $0x91] sm:$0xff]
      %v477 = vld [vmem:[%s303 + $0x99] sm:$0xff]
      %v478 = vld [vmem:[%s303 + $0xa9] sm:$0xff]
      %v479 = vld [vmem:[%s303 + $0xb1] sm:$0xff]
      %v480 = vld [vmem:[%s303 + $0xc1] sm:$0xff]
      %v481 = vld [vmem:[%s303 + $0xc9] sm:$0xff]
      %v482 = vld [vmem:[%s303 + $0xd9] sm:$0xff]
      %v483 = vld [vmem:[%s303 + $0xe1] sm:$0xff]
      %v484 = vld [vmem:[%s303 + $0xf1] sm:$0xff]
      %v485 = vld [vmem:[%s303 + $0xf9] sm:$0xff]
      %v486 = vld [vmem:[%s303 + $0x109] sm:$0xff]
      %v487 = vld [vmem:[%s303 + $0x111] sm:$0xff]
      %v488 = vld [vmem:[%s303 + $0x121] sm:$0xff]
      %v489 = vld [vmem:[%s303 + $0x129] sm:$0xff]
      %v490 = vld [vmem:[%s303 + $0x139] sm:$0xff]
      %v491 = vld [vmem:[%s303 + $0x141] sm:$0xff]
      %v492 = vld [vmem:[%s303 + $0x151] sm:$0xff]
      %v493 = vld [vmem:[%s303 + $0x159] sm:$0xff]
      %v494 = vld [vmem:[%s303 + $0x169] sm:$0xff]
      %v495 = vld [vmem:[%s303 + $0x171] sm:$0xff]
      %v496 = vld [vmem:[%s303 + $0x2] sm:$0xff]
      %v497 = vld [vmem:[%s303 + $0xa] sm:$0xff]
      %v498 = vld [vmem:[%s303 + $0x1a] sm:$0xff]
      %v499 = vld [vmem:[%s303 + $0x22] sm:$0xff]
      %v500 = vld [vmem:[%s303 + $0x32] sm:$0xff]
      %v501 = vld [vmem:[%s303 + $0x3a] sm:$0xff]
      %v502 = vld [vmem:[%s303 + $0x4a] sm:$0xff]
      %v503 = vld [vmem:[%s303 + $0x52] sm:$0xff]
      %v504 = vld [vmem:[%s303 + $0x62] sm:$0xff]
      %v505 = vld [vmem:[%s303 + $0x6a] sm:$0xff]
      %v506 = vld [vmem:[%s303 + $0x7a] sm:$0xff]
      %v507 = vld [vmem:[%s303 + $0x82] sm:$0xff]
      %v508 = vld [vmem:[%s303 + $0x92] sm:$0xff]
      %v509 = vld [vmem:[%s303 + $0x9a] sm:$0xff]
      %v510 = vld [vmem:[%s303 + $0xaa] sm:$0xff]
      %v511 = vld [vmem:[%s303 + $0xb2] sm:$0xff]
      %v512 = vld [vmem:[%s303 + $0xc2] sm:$0xff]
      %v513 = vld [vmem:[%s303 + $0xca] sm:$0xff]
      %v514 = vld [vmem:[%s303 + $0xda] sm:$0xff]
      %v515 = vld [vmem:[%s303 + $0xe2] sm:$0xff]
      %v516 = vld [vmem:[%s303 + $0xf2] sm:$0xff]
      %v517 = vld [vmem:[%s303 + $0xfa] sm:$0xff]
      %v518 = vld [vmem:[%s303 + $0x10a] sm:$0xff]
      %v519 = vld [vmem:[%s303 + $0x112] sm:$0xff]
      %v520 = vld [vmem:[%s303 + $0x122] sm:$0xff]
      %v521 = vld [vmem:[%s303 + $0x12a] sm:$0xff]
      %v522 = vld [vmem:[%s303 + $0x13a] sm:$0xff]
      %v523 = vld [vmem:[%s303 + $0x142] sm:$0xff]
      %v524 = vld [vmem:[%s303 + $0x152] sm:$0xff]
      %v525 = vld [vmem:[%s303 + $0x15a] sm:$0xff]
      %v526 = vld [vmem:[%s303 + $0x16a] sm:$0xff]
      %v527 = vld [vmem:[%s303 + $0x172] sm:$0xff]
      %s528 = scalar_lea.vmem [#allocation2], 48
      %v529 = vld [vmem:[%s528] sm:$0xff]
      %v530 = vld [vmem:[%s528 + $0x8] sm:$0xff]
      %v531 = vld [vmem:[%s528 + $0x18] sm:$0xff]
      %v532 = vld [vmem:[%s528 + $0x20] sm:$0xff]
      %v533 = vld [vmem:[%s528 + $0x30] sm:$0xff]
      %v534 = vld [vmem:[%s528 + $0x38] sm:$0xff]
      %v535 = vld [vmem:[%s528 + $0x48] sm:$0xff]
      %v536 = vld [vmem:[%s528 + $0x50] sm:$0xff]
      %v537 = vld [vmem:[%s528 + $0x60] sm:$0xff]
      %v538 = vld [vmem:[%s528 + $0x68] sm:$0xff]
      %v539 = vld [vmem:[%s528 + $0x78] sm:$0xff]
      %v540 = vld [vmem:[%s528 + $0x80] sm:$0xff]
      %v541 = vld [vmem:[%s528 + $0x90] sm:$0xff]
      %v542 = vld [vmem:[%s528 + $0x98] sm:$0xff]
      %v543 = vld [vmem:[%s528 + $0xa8] sm:$0xff]
      %v544 = vld [vmem:[%s528 + $0xb0] sm:$0xff]
      %v545 = vld [vmem:[%s528 + $0xc0] sm:$0xff]
      %v546 = vld [vmem:[%s528 + $0xc8] sm:$0xff]
      %v547 = vld [vmem:[%s528 + $0xd8] sm:$0xff]
      %v548 = vld [vmem:[%s528 + $0xe0] sm:$0xff]
      %v549 = vld [vmem:[%s528 + $0xf0] sm:$0xff]
      %v550 = vld [vmem:[%s528 + $0xf8] sm:$0xff]
      %v551 = vld [vmem:[%s528 + $0x108] sm:$0xff]
      %v552 = vld [vmem:[%s528 + $0x110] sm:$0xff]
      %v553 = vld [vmem:[%s528 + $0x120] sm:$0xff]
      %v554 = vld [vmem:[%s528 + $0x128] sm:$0xff]
      %v555 = vld [vmem:[%s528 + $0x138] sm:$0xff]
      %v556 = vld [vmem:[%s528 + $0x140] sm:$0xff]
      %v557 = vld [vmem:[%s528 + $0x150] sm:$0xff]
      %v558 = vld [vmem:[%s528 + $0x158] sm:$0xff]
      %v559 = vld [vmem:[%s528 + $0x168] sm:$0xff]
      %v560 = vld [vmem:[%s528 + $0x170] sm:$0xff]
      %v561 = vld [vmem:[%s528 + $0x1] sm:$0xff]
      %v562 = vld [vmem:[%s528 + $0x9] sm:$0xff]
      %v563 = vld [vmem:[%s528 + $0x19] sm:$0xff]
      %v564 = vld [vmem:[%s528 + $0x21] sm:$0xff]
      %v565 = vld [vmem:[%s528 + $0x31] sm:$0xff]
      %v566 = vld [vmem:[%s528 + $0x39] sm:$0xff]
      %v567 = vld [vmem:[%s528 + $0x49] sm:$0xff]
      %v568 = vld [vmem:[%s528 + $0x51] sm:$0xff]
      %v569 = vld [vmem:[%s528 + $0x61] sm:$0xff]
      %v570 = vld [vmem:[%s528 + $0x69] sm:$0xff]
      %v571 = vld [vmem:[%s528 + $0x79] sm:$0xff]
      %v572 = vld [vmem:[%s528 + $0x81] sm:$0xff]
      %v573 = vld [vmem:[%s528 + $0x91] sm:$0xff]
      %v574 = vld [vmem:[%s528 + $0x99] sm:$0xff]
      %v575 = vld [vmem:[%s528 + $0xa9] sm:$0xff]
      %v576 = vld [vmem:[%s528 + $0xb1] sm:$0xff]
      %v577 = vld [vmem:[%s528 + $0xc1] sm:$0xff]
      %v578 = vld [vmem:[%s528 + $0xc9] sm:$0xff]
      %v579 = vld [vmem:[%s528 + $0xd9] sm:$0xff]
      %v580 = vld [vmem:[%s528 + $0xe1] sm:$0xff]
      %v581 = vld [vmem:[%s528 + $0xf1] sm:$0xff]
      %v582 = vld [vmem:[%s528 + $0xf9] sm:$0xff]
      %v583 = vld [vmem:[%s528 + $0x109] sm:$0xff]
      %v584 = vld [vmem:[%s528 + $0x111] sm:$0xff]
      %v585 = vld [vmem:[%s528 + $0x121] sm:$0xff]
      %v586 = vld [vmem:[%s528 + $0x129] sm:$0xff]
      %v587 = vld [vmem:[%s528 + $0x139] sm:$0xff]
      %v588 = vld [vmem:[%s528 + $0x141] sm:$0xff]
      %v589 = vld [vmem:[%s528 + $0x151] sm:$0xff]
      %v590 = vld [vmem:[%s528 + $0x159] sm:$0xff]
      %v591 = vld [vmem:[%s528 + $0x169] sm:$0xff]
      %v592 = vld [vmem:[%s528 + $0x171] sm:$0xff]
      %v593 = vld [vmem:[%s528 + $0x2] sm:$0xff]
      %v594 = vld [vmem:[%s528 + $0xa] sm:$0xff]
      %v595 = vld [vmem:[%s528 + $0x1a] sm:$0xff]
      %v596 = vld [vmem:[%s528 + $0x22] sm:$0xff]
      %v597 = vld [vmem:[%s528 + $0x32] sm:$0xff]
      %v598 = vld [vmem:[%s528 + $0x3a] sm:$0xff]
      %v599 = vld [vmem:[%s528 + $0x4a] sm:$0xff]
      %v600 = vld [vmem:[%s528 + $0x52] sm:$0xff]
      %v601 = vld [vmem:[%s528 + $0x62] sm:$0xff]
      %v602 = vld [vmem:[%s528 + $0x6a] sm:$0xff]
      %v603 = vld [vmem:[%s528 + $0x7a] sm:$0xff]
      %v604 = vld [vmem:[%s528 + $0x82] sm:$0xff]
      %v605 = vld [vmem:[%s528 + $0x92] sm:$0xff]
      %v606 = vld [vmem:[%s528 + $0x9a] sm:$0xff]
      %v607 = vld [vmem:[%s528 + $0xaa] sm:$0xff]
      %v608 = vld [vmem:[%s528 + $0xb2] sm:$0xff]
      %v609 = vld [vmem:[%s528 + $0xc2] sm:$0xff]
      %v610 = vld [vmem:[%s528 + $0xca] sm:$0xff]
      %v611 = vld [vmem:[%s528 + $0xda] sm:$0xff]
      %v612 = vld [vmem:[%s528 + $0xe2] sm:$0xff]
      %v613 = vld [vmem:[%s528 + $0xf2] sm:$0xff]
      %v614 = vld [vmem:[%s528 + $0xfa] sm:$0xff]
      %v615 = vld [vmem:[%s528 + $0x10a] sm:$0xff]
      %v616 = vld [vmem:[%s528 + $0x112] sm:$0xff]
      %v617 = vld [vmem:[%s528 + $0x122] sm:$0xff]
      %v618 = vld [vmem:[%s528 + $0x12a] sm:$0xff]
      %v619 = vld [vmem:[%s528 + $0x13a] sm:$0xff]
      %v620 = vld [vmem:[%s528 + $0x142] sm:$0xff]
      %v621 = vld [vmem:[%s528 + $0x152] sm:$0xff]
      %v622 = vld [vmem:[%s528 + $0x15a] sm:$0xff]
      %v623 = vld [vmem:[%s528 + $0x16a] sm:$0xff]
      %v624 = vld [vmem:[%s528 + $0x172] sm:$0xff]
      %657 = vrot.lane.b32.xlu0 %v368, 8
      %v658 = vpop.permute.xlu0 %657
      %659 = vrot.lane.b32.xlu0 %v369, 8
      %v660 = vpop.permute.xlu0 %659
      %661 = vrot.lane.b32.xlu0 %v370, 8
      %v662 = vpop.permute.xlu0 %661
      %663 = vrot.lane.b32.xlu0 %v371, 8
      %v664 = vpop.permute.xlu0 %663
      %665 = vrot.lane.b32.xlu0 %v372, 8
      %v666 = vpop.permute.xlu0 %665
      %667 = vrot.lane.b32.xlu0 %v373, 8
      %v668 = vpop.permute.xlu0 %667
      %669 = vrot.lane.b32.xlu0 %v374, 8
      %v670 = vpop.permute.xlu0 %669
      %671 = vrot.lane.b32.xlu0 %v375, 8
      %v672 = vpop.permute.xlu0 %671
      %673 = vrot.lane.b32.xlu0 %v376, 8
      %v674 = vpop.permute.xlu0 %673
      %675 = vrot.lane.b32.xlu0 %v377, 8
      %v676 = vpop.permute.xlu0 %675
      %677 = vrot.lane.b32.xlu0 %v378, 8
      %v678 = vpop.permute.xlu0 %677
      %679 = vrot.lane.b32.xlu0 %v379, 8
      %v680 = vpop.permute.xlu0 %679
      %681 = vrot.lane.b32.xlu0 %v380, 8
      %v682 = vpop.permute.xlu0 %681
      %683 = vrot.lane.b32.xlu0 %v381, 8
      %v684 = vpop.permute.xlu0 %683
      %685 = vrot.lane.b32.xlu0 %v382, 8
      %v686 = vpop.permute.xlu0 %685
      %687 = vrot.lane.b32.xlu0 %v383, 8
      %v688 = vpop.permute.xlu0 %687
      %689 = vrot.lane.b32.xlu0 %v384, 8
      %v690 = vpop.permute.xlu0 %689
      %691 = vrot.lane.b32.xlu0 %v385, 8
      %v692 = vpop.permute.xlu0 %691
      %693 = vrot.lane.b32.xlu0 %v386, 8
      %v694 = vpop.permute.xlu0 %693
      %695 = vrot.lane.b32.xlu0 %v387, 8
      %v696 = vpop.permute.xlu0 %695
      %697 = vrot.lane.b32.xlu0 %v388, 8
      %v698 = vpop.permute.xlu0 %697
      %699 = vrot.lane.b32.xlu0 %v389, 8
      %v700 = vpop.permute.xlu0 %699
      %701 = vrot.lane.b32.xlu0 %v390, 8
      %v702 = vpop.permute.xlu0 %701
      %703 = vrot.lane.b32.xlu0 %v391, 8
      %v704 = vpop.permute.xlu0 %703
      %705 = vrot.lane.b32.xlu0 %v392, 8
      %v706 = vpop.permute.xlu0 %705
      %707 = vrot.lane.b32.xlu0 %v393, 8
      %v708 = vpop.permute.xlu0 %707
      %709 = vrot.lane.b32.xlu0 %v394, 8
      %v710 = vpop.permute.xlu0 %709
      %711 = vrot.lane.b32.xlu0 %v395, 8
      %v712 = vpop.permute.xlu0 %711
      %713 = vrot.lane.b32.xlu0 %v396, 8
      %v714 = vpop.permute.xlu0 %713
      %715 = vrot.lane.b32.xlu0 %v397, 8
      %v716 = vpop.permute.xlu0 %715
      %717 = vrot.lane.b32.xlu0 %v398, 8
      %v718 = vpop.permute.xlu0 %717
      %719 = vrot.lane.b32.xlu0 %v399, 8
      %v720 = vpop.permute.xlu0 %719
      %785 = vrot.lane.b32.xlu0 %v400, 16
      %v786 = vpop.permute.xlu0 %785
      %787 = vrot.lane.b32.xlu0 %v401, 16
      %v788 = vpop.permute.xlu0 %787
      %789 = vrot.lane.b32.xlu0 %v402, 16
      %v790 = vpop.permute.xlu0 %789
      %791 = vrot.lane.b32.xlu0 %v403, 16
      %v792 = vpop.permute.xlu0 %791
      %793 = vrot.lane.b32.xlu0 %v404, 16
      %v794 = vpop.permute.xlu0 %793
      %795 = vrot.lane.b32.xlu0 %v405, 16
      %v796 = vpop.permute.xlu0 %795
      %797 = vrot.lane.b32.xlu0 %v406, 16
      %v798 = vpop.permute.xlu0 %797
      %799 = vrot.lane.b32.xlu0 %v407, 16
      %v800 = vpop.permute.xlu0 %799
      %801 = vrot.lane.b32.xlu0 %v408, 16
      %v802 = vpop.permute.xlu0 %801
      %803 = vrot.lane.b32.xlu0 %v409, 16
      %v804 = vpop.permute.xlu0 %803
      %805 = vrot.lane.b32.xlu0 %v410, 16
      %v806 = vpop.permute.xlu0 %805
      %807 = vrot.lane.b32.xlu0 %v411, 16
      %v808 = vpop.permute.xlu0 %807
      %809 = vrot.lane.b32.xlu0 %v412, 16
      %v810 = vpop.permute.xlu0 %809
      %811 = vrot.lane.b32.xlu0 %v413, 16
      %v812 = vpop.permute.xlu0 %811
      %813 = vrot.lane.b32.xlu0 %v414, 16
      %v814 = vpop.permute.xlu0 %813
      %815 = vrot.lane.b32.xlu0 %v415, 16
      %v816 = vpop.permute.xlu0 %815
      %817 = vrot.lane.b32.xlu0 %v416, 16
      %v818 = vpop.permute.xlu0 %817
      %819 = vrot.lane.b32.xlu0 %v417, 16
      %v820 = vpop.permute.xlu0 %819
      %821 = vrot.lane.b32.xlu0 %v418, 16
      %v822 = vpop.permute.xlu0 %821
      %823 = vrot.lane.b32.xlu0 %v419, 16
      %v824 = vpop.permute.xlu0 %823
      %825 = vrot.lane.b32.xlu0 %v420, 16
      %v826 = vpop.permute.xlu0 %825
      %827 = vrot.lane.b32.xlu0 %v421, 16
      %v828 = vpop.permute.xlu0 %827
      %829 = vrot.lane.b32.xlu0 %v422, 16
      %v830 = vpop.permute.xlu0 %829
      %831 = vrot.lane.b32.xlu0 %v423, 16
      %v832 = vpop.permute.xlu0 %831
      %833 = vrot.lane.b32.xlu0 %v424, 16
      %v834 = vpop.permute.xlu0 %833
      %835 = vrot.lane.b32.xlu0 %v425, 16
      %v836 = vpop.permute.xlu0 %835
      %837 = vrot.lane.b32.xlu0 %v426, 16
      %v838 = vpop.permute.xlu0 %837
      %839 = vrot.lane.b32.xlu0 %v427, 16
      %v840 = vpop.permute.xlu0 %839
      %841 = vrot.lane.b32.xlu0 %v428, 16
      %v842 = vpop.permute.xlu0 %841
      %843 = vrot.lane.b32.xlu0 %v429, 16
      %v844 = vpop.permute.xlu0 %843
      %845 = vrot.lane.b32.xlu0 %v430, 16
      %v846 = vpop.permute.xlu0 %845
      %847 = vrot.lane.b32.xlu0 %v431, 16
      %v848 = vpop.permute.xlu0 %847
      %913 = vrot.lane.b32.xlu0 %v432, 24
      %v914 = vpop.permute.xlu0 %913
      %915 = vrot.lane.b32.xlu0 %v433, 24
      %v916 = vpop.permute.xlu0 %915
      %917 = vrot.lane.b32.xlu0 %v434, 24
      %v918 = vpop.permute.xlu0 %917
      %919 = vrot.lane.b32.xlu0 %v435, 24
      %v920 = vpop.permute.xlu0 %919
      %921 = vrot.lane.b32.xlu0 %v436, 24
      %v922 = vpop.permute.xlu0 %921
      %923 = vrot.lane.b32.xlu0 %v437, 24
      %v924 = vpop.permute.xlu0 %923
      %925 = vrot.lane.b32.xlu0 %v438, 24
      %v926 = vpop.permute.xlu0 %925
      %927 = vrot.lane.b32.xlu0 %v439, 24
      %v928 = vpop.permute.xlu0 %927
      %929 = vrot.lane.b32.xlu0 %v440, 24
      %v930 = vpop.permute.xlu0 %929
      %931 = vrot.lane.b32.xlu0 %v441, 24
      %v932 = vpop.permute.xlu0 %931
      %933 = vrot.lane.b32.xlu0 %v442, 24
      %v934 = vpop.permute.xlu0 %933
      %935 = vrot.lane.b32.xlu0 %v443, 24
      %v936 = vpop.permute.xlu0 %935
      %937 = vrot.lane.b32.xlu0 %v444, 24
      %v938 = vpop.permute.xlu0 %937
      %939 = vrot.lane.b32.xlu0 %v445, 24
      %v940 = vpop.permute.xlu0 %939
      %941 = vrot.lane.b32.xlu0 %v446, 24
      %v942 = vpop.permute.xlu0 %941
      %943 = vrot.lane.b32.xlu0 %v447, 24
      %v944 = vpop.permute.xlu0 %943
      %945 = vrot.lane.b32.xlu0 %v448, 24
      %v946 = vpop.permute.xlu0 %945
      %947 = vrot.lane.b32.xlu0 %v449, 24
      %v948 = vpop.permute.xlu0 %947
      %949 = vrot.lane.b32.xlu0 %v450, 24
      %v950 = vpop.permute.xlu0 %949
      %951 = vrot.lane.b32.xlu0 %v451, 24
      %v952 = vpop.permute.xlu0 %951
      %953 = vrot.lane.b32.xlu0 %v452, 24
      %v954 = vpop.permute.xlu0 %953
      %955 = vrot.lane.b32.xlu0 %v453, 24
      %v956 = vpop.permute.xlu0 %955
      %957 = vrot.lane.b32.xlu0 %v454, 24
      %v958 = vpop.permute.xlu0 %957
      %959 = vrot.lane.b32.xlu0 %v455, 24
      %v960 = vpop.permute.xlu0 %959
      %961 = vrot.lane.b32.xlu0 %v456, 24
      %v962 = vpop.permute.xlu0 %961
      %963 = vrot.lane.b32.xlu0 %v457, 24
      %v964 = vpop.permute.xlu0 %963
      %965 = vrot.lane.b32.xlu0 %v458, 24
      %v966 = vpop.permute.xlu0 %965
      %967 = vrot.lane.b32.xlu0 %v459, 24
      %v968 = vpop.permute.xlu0 %967
      %969 = vrot.lane.b32.xlu0 %v460, 24
      %v970 = vpop.permute.xlu0 %969
      %971 = vrot.lane.b32.xlu0 %v461, 24
      %v972 = vpop.permute.xlu0 %971
      %973 = vrot.lane.b32.xlu0 %v462, 24
      %v974 = vpop.permute.xlu0 %973
      %975 = vrot.lane.b32.xlu0 %v463, 24
      %v976 = vpop.permute.xlu0 %975
      %1041 = vrot.lane.b32.xlu0 %v464, 32
      %v1042 = vpop.permute.xlu0 %1041
      %1043 = vrot.lane.b32.xlu0 %v465, 32
      %v1044 = vpop.permute.xlu0 %1043
      %1045 = vrot.lane.b32.xlu0 %v466, 32
      %v1046 = vpop.permute.xlu0 %1045
      %1047 = vrot.lane.b32.xlu0 %v467, 32
      %v1048 = vpop.permute.xlu0 %1047
      %1049 = vrot.lane.b32.xlu0 %v468, 32
      %v1050 = vpop.permute.xlu0 %1049
      %1051 = vrot.lane.b32.xlu0 %v469, 32
      %v1052 = vpop.permute.xlu0 %1051
      %1053 = vrot.lane.b32.xlu0 %v470, 32
      %v1054 = vpop.permute.xlu0 %1053
      %1055 = vrot.lane.b32.xlu0 %v471, 32
      %v1056 = vpop.permute.xlu0 %1055
      %1057 = vrot.lane.b32.xlu0 %v472, 32
      %v1058 = vpop.permute.xlu0 %1057
      %1059 = vrot.lane.b32.xlu0 %v473, 32
      %v1060 = vpop.permute.xlu0 %1059
      %1061 = vrot.lane.b32.xlu0 %v474, 32
      %v1062 = vpop.permute.xlu0 %1061
      %1063 = vrot.lane.b32.xlu0 %v475, 32
      %v1064 = vpop.permute.xlu0 %1063
      %1065 = vrot.lane.b32.xlu0 %v476, 32
      %v1066 = vpop.permute.xlu0 %1065
      %1067 = vrot.lane.b32.xlu0 %v477, 32
      %v1068 = vpop.permute.xlu0 %1067
      %1069 = vrot.lane.b32.xlu0 %v478, 32
      %v1070 = vpop.permute.xlu0 %1069
      %1071 = vrot.lane.b32.xlu0 %v479, 32
      %v1072 = vpop.permute.xlu0 %1071
      %1073 = vrot.lane.b32.xlu0 %v480, 32
      %v1074 = vpop.permute.xlu0 %1073
      %1075 = vrot.lane.b32.xlu0 %v481, 32
      %v1076 = vpop.permute.xlu0 %1075
      %1077 = vrot.lane.b32.xlu0 %v482, 32
      %v1078 = vpop.permute.xlu0 %1077
      %1079 = vrot.lane.b32.xlu0 %v483, 32
      %v1080 = vpop.permute.xlu0 %1079
      %1081 = vrot.lane.b32.xlu0 %v484, 32
      %v1082 = vpop.permute.xlu0 %1081
      %1083 = vrot.lane.b32.xlu0 %v485, 32
      %v1084 = vpop.permute.xlu0 %1083
      %1085 = vrot.lane.b32.xlu0 %v486, 32
      %v1086 = vpop.permute.xlu0 %1085
      %1087 = vrot.lane.b32.xlu0 %v487, 32
      %v1088 = vpop.permute.xlu0 %1087
      %1089 = vrot.lane.b32.xlu0 %v488, 32
      %v1090 = vpop.permute.xlu0 %1089
      %1091 = vrot.lane.b32.xlu0 %v489, 32
      %v1092 = vpop.permute.xlu0 %1091
      %1093 = vrot.lane.b32.xlu0 %v490, 32
      %v1094 = vpop.permute.xlu0 %1093
      %1095 = vrot.lane.b32.xlu0 %v491, 32
      %v1096 = vpop.permute.xlu0 %1095
      %1097 = vrot.lane.b32.xlu0 %v492, 32
      %v1098 = vpop.permute.xlu0 %1097
      %1099 = vrot.lane.b32.xlu0 %v493, 32
      %v1100 = vpop.permute.xlu0 %1099
      %1101 = vrot.lane.b32.xlu0 %v494, 32
      %v1102 = vpop.permute.xlu0 %1101
      %1103 = vrot.lane.b32.xlu0 %v495, 32
      %v1104 = vpop.permute.xlu0 %1103
      %1169 = vrot.lane.b32.xlu0 %v496, 40
      %v1170 = vpop.permute.xlu0 %1169
      %1171 = vrot.lane.b32.xlu0 %v497, 40
      %v1172 = vpop.permute.xlu0 %1171
      %1173 = vrot.lane.b32.xlu0 %v498, 40
      %v1174 = vpop.permute.xlu0 %1173
      %1175 = vrot.lane.b32.xlu0 %v499, 40
      %v1176 = vpop.permute.xlu0 %1175
      %1177 = vrot.lane.b32.xlu0 %v500, 40
      %v1178 = vpop.permute.xlu0 %1177
      %1179 = vrot.lane.b32.xlu0 %v501, 40
      %v1180 = vpop.permute.xlu0 %1179
      %1181 = vrot.lane.b32.xlu0 %v502, 40
      %v1182 = vpop.permute.xlu0 %1181
      %1183 = vrot.lane.b32.xlu0 %v503, 40
      %v1184 = vpop.permute.xlu0 %1183
      %1185 = vrot.lane.b32.xlu0 %v504, 40
      %v1186 = vpop.permute.xlu0 %1185
      %1187 = vrot.lane.b32.xlu0 %v505, 40
      %v1188 = vpop.permute.xlu0 %1187
      %1189 = vrot.lane.b32.xlu0 %v506, 40
      %v1190 = vpop.permute.xlu0 %1189
      %1191 = vrot.lane.b32.xlu0 %v507, 40
      %v1192 = vpop.permute.xlu0 %1191
      %1193 = vrot.lane.b32.xlu0 %v508, 40
      %v1194 = vpop.permute.xlu0 %1193
      %1195 = vrot.lane.b32.xlu0 %v509, 40
      %v1196 = vpop.permute.xlu0 %1195
      %1197 = vrot.lane.b32.xlu0 %v510, 40
      %v1198 = vpop.permute.xlu0 %1197
      %1199 = vrot.lane.b32.xlu0 %v511, 40
      %v1200 = vpop.permute.xlu0 %1199
      %1201 = vrot.lane.b32.xlu0 %v512, 40
      %v1202 = vpop.permute.xlu0 %1201
      %1203 = vrot.lane.b32.xlu0 %v513, 40
      %v1204 = vpop.permute.xlu0 %1203
      %1205 = vrot.lane.b32.xlu0 %v514, 40
      %v1206 = vpop.permute.xlu0 %1205
      %1207 = vrot.lane.b32.xlu0 %v515, 40
      %v1208 = vpop.permute.xlu0 %1207
      %1209 = vrot.lane.b32.xlu0 %v516, 40
      %v1210 = vpop.permute.xlu0 %1209
      %1211 = vrot.lane.b32.xlu0 %v517, 40
      %v1212 = vpop.permute.xlu0 %1211
      %1213 = vrot.lane.b32.xlu0 %v518, 40
      %v1214 = vpop.permute.xlu0 %1213
      %1215 = vrot.lane.b32.xlu0 %v519, 40
      %v1216 = vpop.permute.xlu0 %1215
      %1217 = vrot.lane.b32.xlu0 %v520, 40
      %v1218 = vpop.permute.xlu0 %1217
      %1219 = vrot.lane.b32.xlu0 %v521, 40
      %v1220 = vpop.permute.xlu0 %1219
      %1221 = vrot.lane.b32.xlu0 %v522, 40
      %v1222 = vpop.permute.xlu0 %1221
      %1223 = vrot.lane.b32.xlu0 %v523, 40
      %v1224 = vpop.permute.xlu0 %1223
      %1225 = vrot.lane.b32.xlu0 %v524, 40
      %v1226 = vpop.permute.xlu0 %1225
      %1227 = vrot.lane.b32.xlu0 %v525, 40
      %v1228 = vpop.permute.xlu0 %1227
      %1229 = vrot.lane.b32.xlu0 %v526, 40
      %v1230 = vpop.permute.xlu0 %1229
      %1231 = vrot.lane.b32.xlu0 %v527, 40
      %v1232 = vpop.permute.xlu0 %1231
      %1297 = vrot.lane.b32.xlu0 %v529, 48
      %v1298 = vpop.permute.xlu0 %1297
      %1299 = vrot.lane.b32.xlu0 %v530, 48
      %v1300 = vpop.permute.xlu0 %1299
      %1301 = vrot.lane.b32.xlu0 %v531, 48
      %v1302 = vpop.permute.xlu0 %1301
      %1303 = vrot.lane.b32.xlu0 %v532, 48
      %v1304 = vpop.permute.xlu0 %1303
      %1305 = vrot.lane.b32.xlu0 %v533, 48
      %v1306 = vpop.permute.xlu0 %1305
      %1307 = vrot.lane.b32.xlu0 %v534, 48
      %v1308 = vpop.permute.xlu0 %1307
      %1309 = vrot.lane.b32.xlu0 %v535, 48
      %v1310 = vpop.permute.xlu0 %1309
      %1311 = vrot.lane.b32.xlu0 %v536, 48
      %v1312 = vpop.permute.xlu0 %1311
      %1313 = vrot.lane.b32.xlu0 %v537, 48
      %v1314 = vpop.permute.xlu0 %1313
      %1315 = vrot.lane.b32.xlu0 %v538, 48
      %v1316 = vpop.permute.xlu0 %1315
      %1317 = vrot.lane.b32.xlu0 %v539, 48
      %v1318 = vpop.permute.xlu0 %1317
      %1319 = vrot.lane.b32.xlu0 %v540, 48
      %v1320 = vpop.permute.xlu0 %1319
      %1321 = vrot.lane.b32.xlu0 %v541, 48
      %v1322 = vpop.permute.xlu0 %1321
      %1323 = vrot.lane.b32.xlu0 %v542, 48
      %v1324 = vpop.permute.xlu0 %1323
      %1325 = vrot.lane.b32.xlu0 %v543, 48
      %v1326 = vpop.permute.xlu0 %1325
      %1327 = vrot.lane.b32.xlu0 %v544, 48
      %v1328 = vpop.permute.xlu0 %1327
      %1329 = vrot.lane.b32.xlu0 %v545, 48
      %v1330 = vpop.permute.xlu0 %1329
      %1331 = vrot.lane.b32.xlu0 %v546, 48
      %v1332 = vpop.permute.xlu0 %1331
      %1333 = vrot.lane.b32.xlu0 %v547, 48
      %v1334 = vpop.permute.xlu0 %1333
      %1335 = vrot.lane.b32.xlu0 %v548, 48
      %v1336 = vpop.permute.xlu0 %1335
      %1337 = vrot.lane.b32.xlu0 %v549, 48
      %v1338 = vpop.permute.xlu0 %1337
      %1339 = vrot.lane.b32.xlu0 %v550, 48
      %v1340 = vpop.permute.xlu0 %1339
      %1341 = vrot.lane.b32.xlu0 %v551, 48
      %v1342 = vpop.permute.xlu0 %1341
      %1343 = vrot.lane.b32.xlu0 %v552, 48
      %v1344 = vpop.permute.xlu0 %1343
      %1345 = vrot.lane.b32.xlu0 %v553, 48
      %v1346 = vpop.permute.xlu0 %1345
      %1347 = vrot.lane.b32.xlu0 %v554, 48
      %v1348 = vpop.permute.xlu0 %1347
      %1349 = vrot.lane.b32.xlu0 %v555, 48
      %v1350 = vpop.permute.xlu0 %1349
      %1351 = vrot.lane.b32.xlu0 %v556, 48
      %v1352 = vpop.permute.xlu0 %1351
      %1353 = vrot.lane.b32.xlu0 %v557, 48
      %v1354 = vpop.permute.xlu0 %1353
      %1355 = vrot.lane.b32.xlu0 %v558, 48
      %v1356 = vpop.permute.xlu0 %1355
      %1357 = vrot.lane.b32.xlu0 %v559, 48
      %v1358 = vpop.permute.xlu0 %1357
      %1359 = vrot.lane.b32.xlu0 %v560, 48
      %v1360 = vpop.permute.xlu0 %1359
      %1425 = vrot.lane.b32.xlu0 %v561, 56
      %v1426 = vpop.permute.xlu0 %1425
      %1427 = vrot.lane.b32.xlu0 %v562, 56
      %v1428 = vpop.permute.xlu0 %1427
      %1429 = vrot.lane.b32.xlu0 %v563, 56
      %v1430 = vpop.permute.xlu0 %1429
      %1431 = vrot.lane.b32.xlu0 %v564, 56
      %v1432 = vpop.permute.xlu0 %1431
      %1433 = vrot.lane.b32.xlu0 %v565, 56
      %v1434 = vpop.permute.xlu0 %1433
      %1435 = vrot.lane.b32.xlu0 %v566, 56
      %v1436 = vpop.permute.xlu0 %1435
      %1437 = vrot.lane.b32.xlu0 %v567, 56
      %v1438 = vpop.permute.xlu0 %1437
      %1439 = vrot.lane.b32.xlu0 %v568, 56
      %v1440 = vpop.permute.xlu0 %1439
      %1441 = vrot.lane.b32.xlu0 %v569, 56
      %v1442 = vpop.permute.xlu0 %1441
      %1443 = vrot.lane.b32.xlu0 %v570, 56
      %v1444 = vpop.permute.xlu0 %1443
      %1445 = vrot.lane.b32.xlu0 %v571, 56
      %v1446 = vpop.permute.xlu0 %1445
      %1447 = vrot.lane.b32.xlu0 %v572, 56
      %v1448 = vpop.permute.xlu0 %1447
      %1449 = vrot.lane.b32.xlu0 %v573, 56
      %v1450 = vpop.permute.xlu0 %1449
      %1451 = vrot.lane.b32.xlu0 %v574, 56
      %v1452 = vpop.permute.xlu0 %1451
      %1453 = vrot.lane.b32.xlu0 %v575, 56
      %v1454 = vpop.permute.xlu0 %1453
      %1455 = vrot.lane.b32.xlu0 %v576, 56
      %v1456 = vpop.permute.xlu0 %1455
      %1457 = vrot.lane.b32.xlu0 %v577, 56
      %v1458 = vpop.permute.xlu0 %1457
      %1459 = vrot.lane.b32.xlu0 %v578, 56
      %v1460 = vpop.permute.xlu0 %1459
      %1461 = vrot.lane.b32.xlu0 %v579, 56
      %v1462 = vpop.permute.xlu0 %1461
      %1463 = vrot.lane.b32.xlu0 %v580, 56
      %v1464 = vpop.permute.xlu0 %1463
      %1465 = vrot.lane.b32.xlu0 %v581, 56
      %v1466 = vpop.permute.xlu0 %1465
      %1467 = vrot.lane.b32.xlu0 %v582, 56
      %v1468 = vpop.permute.xlu0 %1467
      %1469 = vrot.lane.b32.xlu0 %v583, 56
      %v1470 = vpop.permute.xlu0 %1469
      %1471 = vrot.lane.b32.xlu0 %v584, 56
      %v1472 = vpop.permute.xlu0 %1471
      %1473 = vrot.lane.b32.xlu0 %v585, 56
      %v1474 = vpop.permute.xlu0 %1473
      %1475 = vrot.lane.b32.xlu0 %v586, 56
      %v1476 = vpop.permute.xlu0 %1475
      %1477 = vrot.lane.b32.xlu0 %v587, 56
      %v1478 = vpop.permute.xlu0 %1477
      %1479 = vrot.lane.b32.xlu0 %v588, 56
      %v1480 = vpop.permute.xlu0 %1479
      %1481 = vrot.lane.b32.xlu0 %v589, 56
      %v1482 = vpop.permute.xlu0 %1481
      %1483 = vrot.lane.b32.xlu0 %v590, 56
      %v1484 = vpop.permute.xlu0 %1483
      %1485 = vrot.lane.b32.xlu0 %v591, 56
      %v1486 = vpop.permute.xlu0 %1485
      %1487 = vrot.lane.b32.xlu0 %v592, 56
      %v1488 = vpop.permute.xlu0 %1487
      %1553 = vrot.lane.b32.xlu0 %v593, 64
      %v1554 = vpop.permute.xlu0 %1553
      %1555 = vrot.lane.b32.xlu0 %v594, 64
      %v1556 = vpop.permute.xlu0 %1555
      %1557 = vrot.lane.b32.xlu0 %v595, 64
      %v1558 = vpop.permute.xlu0 %1557
      %1559 = vrot.lane.b32.xlu0 %v596, 64
      %v1560 = vpop.permute.xlu0 %1559
      %1561 = vrot.lane.b32.xlu0 %v597, 64
      %v1562 = vpop.permute.xlu0 %1561
      %1563 = vrot.lane.b32.xlu0 %v598, 64
      %v1564 = vpop.permute.xlu0 %1563
      %1565 = vrot.lane.b32.xlu0 %v599, 64
      %v1566 = vpop.permute.xlu0 %1565
      %1567 = vrot.lane.b32.xlu0 %v600, 64
      %v1568 = vpop.permute.xlu0 %1567
      %1569 = vrot.lane.b32.xlu0 %v601, 64
      %v1570 = vpop.permute.xlu0 %1569
      %1571 = vrot.lane.b32.xlu0 %v602, 64
      %v1572 = vpop.permute.xlu0 %1571
      %1573 = vrot.lane.b32.xlu0 %v603, 64
      %v1574 = vpop.permute.xlu0 %1573
      %1575 = vrot.lane.b32.xlu0 %v604, 64
      %v1576 = vpop.permute.xlu0 %1575
      %1577 = vrot.lane.b32.xlu0 %v605, 64
      %v1578 = vpop.permute.xlu0 %1577
      %1579 = vrot.lane.b32.xlu0 %v606, 64
      %v1580 = vpop.permute.xlu0 %1579
      %1581 = vrot.lane.b32.xlu0 %v607, 64
      %v1582 = vpop.permute.xlu0 %1581
      %1583 = vrot.lane.b32.xlu0 %v608, 64
      %v1584 = vpop.permute.xlu0 %1583
      %1585 = vrot.lane.b32.xlu0 %v609, 64
      %v1586 = vpop.permute.xlu0 %1585
      %1587 = vrot.lane.b32.xlu0 %v610, 64
      %v1588 = vpop.permute.xlu0 %1587
      %1589 = vrot.lane.b32.xlu0 %v611, 64
      %v1590 = vpop.permute.xlu0 %1589
      %1591 = vrot.lane.b32.xlu0 %v612, 64
      %v1592 = vpop.permute.xlu0 %1591
      %1593 = vrot.lane.b32.xlu0 %v613, 64
      %v1594 = vpop.permute.xlu0 %1593
      %1595 = vrot.lane.b32.xlu0 %v614, 64
      %v1596 = vpop.permute.xlu0 %1595
      %1597 = vrot.lane.b32.xlu0 %v615, 64
      %v1598 = vpop.permute.xlu0 %1597
      %1599 = vrot.lane.b32.xlu0 %v616, 64
      %v1600 = vpop.permute.xlu0 %1599
      %1601 = vrot.lane.b32.xlu0 %v617, 64
      %v1602 = vpop.permute.xlu0 %1601
      %1603 = vrot.lane.b32.xlu0 %v618, 64
      %v1604 = vpop.permute.xlu0 %1603
      %1605 = vrot.lane.b32.xlu0 %v619, 64
      %v1606 = vpop.permute.xlu0 %1605
      %1607 = vrot.lane.b32.xlu0 %v620, 64
      %v1608 = vpop.permute.xlu0 %1607
      %1609 = vrot.lane.b32.xlu0 %v621, 64
      %v1610 = vpop.permute.xlu0 %1609
      %1611 = vrot.lane.b32.xlu0 %v622, 64
      %v1612 = vpop.permute.xlu0 %1611
      %1613 = vrot.lane.b32.xlu0 %v623, 64
      %v1614 = vpop.permute.xlu0 %1613
      %1615 = vrot.lane.b32.xlu0 %v624, 64
      %v1616 = vpop.permute.xlu0 %1615
      %v1649 = vsel %vm257, %v336, %v658
      %v1650 = vsel %vm257, %v337, %v660
      %v1651 = vsel %vm257, %v338, %v662
      %v1652 = vsel %vm257, %v339, %v664
      %v1653 = vsel %vm257, %v340, %v666
      %v1654 = vsel %vm257, %v341, %v668
      %v1655 = vsel %vm257, %v342, %v670
      %v1656 = vsel %vm257, %v343, %v672
      %v1657 = vsel %vm257, %v344, %v674
      %v1658 = vsel %vm257, %v345, %v676
      %v1659 = vsel %vm257, %v346, %v678
      %v1660 = vsel %vm257, %v347, %v680
      %v1661 = vsel %vm257, %v348, %v682
      %v1662 = vsel %vm257, %v349, %v684
      %v1663 = vsel %vm257, %v350, %v686
      %v1664 = vsel %vm257, %v351, %v688
      %v1665 = vsel %vm257, %v352, %v690
      %v1666 = vsel %vm257, %v353, %v692
      %v1667 = vsel %vm257, %v354, %v694
      %v1668 = vsel %vm257, %v355, %v696
      %v1669 = vsel %vm257, %v356, %v698
      %v1670 = vsel %vm257, %v357, %v700
      %v1671 = vsel %vm257, %v358, %v702
      %v1672 = vsel %vm257, %v359, %v704
      %v1673 = vsel %vm257, %v360, %v706
      %v1674 = vsel %vm257, %v361, %v708
      %v1675 = vsel %vm257, %v362, %v710
      %v1676 = vsel %vm257, %v363, %v712
      %v1677 = vsel %vm257, %v364, %v714
      %v1678 = vsel %vm257, %v365, %v716
      %v1679 = vsel %vm257, %v366, %v718
      %v1680 = vsel %vm257, %v367, %v720
      %vm1681 = vcmask 130048
      %v1682 = vsel %vm1681, %v1649, %v786
      %v1683 = vsel %vm1681, %v1650, %v788
      %v1684 = vsel %vm1681, %v1651, %v790
      %v1685 = vsel %vm1681, %v1652, %v792
      %v1686 = vsel %vm1681, %v1653, %v794
      %v1687 = vsel %vm1681, %v1654, %v796
      %v1688 = vsel %vm1681, %v1655, %v798
      %v1689 = vsel %vm1681, %v1656, %v800
      %v1690 = vsel %vm1681, %v1657, %v802
      %v1691 = vsel %vm1681, %v1658, %v804
      %v1692 = vsel %vm1681, %v1659, %v806
      %v1693 = vsel %vm1681, %v1660, %v808
      %v1694 = vsel %vm1681, %v1661, %v810
      %v1695 = vsel %vm1681, %v1662, %v812
      %v1696 = vsel %vm1681, %v1663, %v814
      %v1697 = vsel %vm1681, %v1664, %v816
      %v1698 = vsel %vm1681, %v1665, %v818
      %v1699 = vsel %vm1681, %v1666, %v820
      %v1700 = vsel %vm1681, %v1667, %v822
      %v1701 = vsel %vm1681, %v1668, %v824
      %v1702 = vsel %vm1681, %v1669, %v826
      %v1703 = vsel %vm1681, %v1670, %v828
      %v1704 = vsel %vm1681, %v1671, %v830
      %v1705 = vsel %vm1681, %v1672, %v832
      %v1706 = vsel %vm1681, %v1673, %v834
      %v1707 = vsel %vm1681, %v1674, %v836
      %v1708 = vsel %vm1681, %v1675, %v838
      %v1709 = vsel %vm1681, %v1676, %v840
      %v1710 = vsel %vm1681, %v1677, %v842
      %v1711 = vsel %vm1681, %v1678, %v844
      %v1712 = vsel %vm1681, %v1679, %v846
      %v1713 = vsel %vm1681, %v1680, %v848
      %vm1714 = vcmask 195584
      %v1715 = vsel %vm1714, %v1682, %v914
      %v1716 = vsel %vm1714, %v1683, %v916
      %v1717 = vsel %vm1714, %v1684, %v918
      %v1718 = vsel %vm1714, %v1685, %v920
      %v1719 = vsel %vm1714, %v1686, %v922
      %v1720 = vsel %vm1714, %v1687, %v924
      %v1721 = vsel %vm1714, %v1688, %v926
      %v1722 = vsel %vm1714, %v1689, %v928
      %v1723 = vsel %vm1714, %v1690, %v930
      %v1724 = vsel %vm1714, %v1691, %v932
      %v1725 = vsel %vm1714, %v1692, %v934
      %v1726 = vsel %vm1714, %v1693, %v936
      %v1727 = vsel %vm1714, %v1694, %v938
      %v1728 = vsel %vm1714, %v1695, %v940
      %v1729 = vsel %vm1714, %v1696, %v942
      %v1730 = vsel %vm1714, %v1697, %v944
      %v1731 = vsel %vm1714, %v1698, %v946
      %v1732 = vsel %vm1714, %v1699, %v948
      %v1733 = vsel %vm1714, %v1700, %v950
      %v1734 = vsel %vm1714, %v1701, %v952
      %v1735 = vsel %vm1714, %v1702, %v954
      %v1736 = vsel %vm1714, %v1703, %v956
      %v1737 = vsel %vm1714, %v1704, %v958
      %v1738 = vsel %vm1714, %v1705, %v960
      %v1739 = vsel %vm1714, %v1706, %v962
      %v1740 = vsel %vm1714, %v1707, %v964
      %v1741 = vsel %vm1714, %v1708, %v966
      %v1742 = vsel %vm1714, %v1709, %v968
      %v1743 = vsel %vm1714, %v1710, %v970
      %v1744 = vsel %vm1714, %v1711, %v972
      %v1745 = vsel %vm1714, %v1712, %v974
      %v1746 = vsel %vm1714, %v1713, %v976
      %vm1747 = vcmask 261120
      %v1748 = vsel %vm1747, %v1715, %v1042
      %v1749 = vsel %vm1747, %v1716, %v1044
      %v1750 = vsel %vm1747, %v1717, %v1046
      %v1751 = vsel %vm1747, %v1718, %v1048
      %v1752 = vsel %vm1747, %v1719, %v1050
      %v1753 = vsel %vm1747, %v1720, %v1052
      %v1754 = vsel %vm1747, %v1721, %v1054
      %v1755 = vsel %vm1747, %v1722, %v1056
      %v1756 = vsel %vm1747, %v1723, %v1058
      %v1757 = vsel %vm1747, %v1724, %v1060
      %v1758 = vsel %vm1747, %v1725, %v1062
      %v1759 = vsel %vm1747, %v1726, %v1064
      %v1760 = vsel %vm1747, %v1727, %v1066
      %v1761 = vsel %vm1747, %v1728, %v1068
      %v1762 = vsel %vm1747, %v1729, %v1070
      %v1763 = vsel %vm1747, %v1730, %v1072
      %v1764 = vsel %vm1747, %v1731, %v1074
      %v1765 = vsel %vm1747, %v1732, %v1076
      %v1766 = vsel %vm1747, %v1733, %v1078
      %v1767 = vsel %vm1747, %v1734, %v1080
      %v1768 = vsel %vm1747, %v1735, %v1082
      %v1769 = vsel %vm1747, %v1736, %v1084
      %v1770 = vsel %vm1747, %v1737, %v1086
      %v1771 = vsel %vm1747, %v1738, %v1088
      %v1772 = vsel %vm1747, %v1739, %v1090
      %v1773 = vsel %vm1747, %v1740, %v1092
      %v1774 = vsel %vm1747, %v1741, %v1094
      %v1775 = vsel %vm1747, %v1742, %v1096
      %v1776 = vsel %vm1747, %v1743, %v1098
      %v1777 = vsel %vm1747, %v1744, %v1100
      %v1778 = vsel %vm1747, %v1745, %v1102
      %v1779 = vsel %vm1747, %v1746, %v1104
      %vm1780 = vcmask 326656
      %v1781 = vsel %vm1780, %v1748, %v1170
      %v1782 = vsel %vm1780, %v1749, %v1172
      %v1783 = vsel %vm1780, %v1750, %v1174
      %v1784 = vsel %vm1780, %v1751, %v1176
      %v1785 = vsel %vm1780, %v1752, %v1178
      %v1786 = vsel %vm1780, %v1753, %v1180
      %v1787 = vsel %vm1780, %v1754, %v1182
      %v1788 = vsel %vm1780, %v1755, %v1184
      %v1789 = vsel %vm1780, %v1756, %v1186
      %v1790 = vsel %vm1780, %v1757, %v1188
      %v1791 = vsel %vm1780, %v1758, %v1190
      %v1792 = vsel %vm1780, %v1759, %v1192
      %v1793 = vsel %vm1780, %v1760, %v1194
      %v1794 = vsel %vm1780, %v1761, %v1196
      %v1795 = vsel %vm1780, %v1762, %v1198
      %v1796 = vsel %vm1780, %v1763, %v1200
      %v1797 = vsel %vm1780, %v1764, %v1202
      %v1798 = vsel %vm1780, %v1765, %v1204
      %v1799 = vsel %vm1780, %v1766, %v1206
      %v1800 = vsel %vm1780, %v1767, %v1208
      %v1801 = vsel %vm1780, %v1768, %v1210
      %v1802 = vsel %vm1780, %v1769, %v1212
      %v1803 = vsel %vm1780, %v1770, %v1214
      %v1804 = vsel %vm1780, %v1771, %v1216
      %v1805 = vsel %vm1780, %v1772, %v1218
      %v1806 = vsel %vm1780, %v1773, %v1220
      %v1807 = vsel %vm1780, %v1774, %v1222
      %v1808 = vsel %vm1780, %v1775, %v1224
      %v1809 = vsel %vm1780, %v1776, %v1226
      %v1810 = vsel %vm1780, %v1777, %v1228
      %v1811 = vsel %vm1780, %v1778, %v1230
      %v1812 = vsel %vm1780, %v1779, %v1232
      %vm1813 = vcmask 392192
      %v1814 = vsel %vm1813, %v1781, %v1298
      %v1815 = vsel %vm1813, %v1782, %v1300
      %v1816 = vsel %vm1813, %v1783, %v1302
      %v1817 = vsel %vm1813, %v1784, %v1304
      %v1818 = vsel %vm1813, %v1785, %v1306
      %v1819 = vsel %vm1813, %v1786, %v1308
      %v1820 = vsel %vm1813, %v1787, %v1310
      %v1821 = vsel %vm1813, %v1788, %v1312
      %v1822 = vsel %vm1813, %v1789, %v1314
      %v1823 = vsel %vm1813, %v1790, %v1316
      %v1824 = vsel %vm1813, %v1791, %v1318
      %v1825 = vsel %vm1813, %v1792, %v1320
      %v1826 = vsel %vm1813, %v1793, %v1322
      %v1827 = vsel %vm1813, %v1794, %v1324
      %v1828 = vsel %vm1813, %v1795, %v1326
      %v1829 = vsel %vm1813, %v1796, %v1328
      %v1830 = vsel %vm1813, %v1797, %v1330
      %v1831 = vsel %vm1813, %v1798, %v1332
      %v1832 = vsel %vm1813, %v1799, %v1334
      %v1833 = vsel %vm1813, %v1800, %v1336
      %v1834 = vsel %vm1813, %v1801, %v1338
      %v1835 = vsel %vm1813, %v1802, %v1340
      %v1836 = vsel %vm1813, %v1803, %v1342
      %v1837 = vsel %vm1813, %v1804, %v1344
      %v1838 = vsel %vm1813, %v1805, %v1346
      %v1839 = vsel %vm1813, %v1806, %v1348
      %v1840 = vsel %vm1813, %v1807, %v1350
      %v1841 = vsel %vm1813, %v1808, %v1352
      %v1842 = vsel %vm1813, %v1809, %v1354
      %v1843 = vsel %vm1813, %v1810, %v1356
      %v1844 = vsel %vm1813, %v1811, %v1358
      %v1845 = vsel %vm1813, %v1812, %v1360
      %vm1846 = vcmask 457728
      %v1847 = vsel %vm1846, %v1814, %v1426
      %v1848 = vsel %vm1846, %v1815, %v1428
      %v1849 = vsel %vm1846, %v1816, %v1430
      %v1850 = vsel %vm1846, %v1817, %v1432
      %v1851 = vsel %vm1846, %v1818, %v1434
      %v1852 = vsel %vm1846, %v1819, %v1436
      %v1853 = vsel %vm1846, %v1820, %v1438
      %v1854 = vsel %vm1846, %v1821, %v1440
      %v1855 = vsel %vm1846, %v1822, %v1442
      %v1856 = vsel %vm1846, %v1823, %v1444
      %v1857 = vsel %vm1846, %v1824, %v1446
      %v1858 = vsel %vm1846, %v1825, %v1448
      %v1859 = vsel %vm1846, %v1826, %v1450
      %v1860 = vsel %vm1846, %v1827, %v1452
      %v1861 = vsel %vm1846, %v1828, %v1454
      %v1862 = vsel %vm1846, %v1829, %v1456
      %v1863 = vsel %vm1846, %v1830, %v1458
      %v1864 = vsel %vm1846, %v1831, %v1460
      %v1865 = vsel %vm1846, %v1832, %v1462
      %v1866 = vsel %vm1846, %v1833, %v1464
      %v1867 = vsel %vm1846, %v1834, %v1466
      %v1868 = vsel %vm1846, %v1835, %v1468
      %v1869 = vsel %vm1846, %v1836, %v1470
      %v1870 = vsel %vm1846, %v1837, %v1472
      %v1871 = vsel %vm1846, %v1838, %v1474
      %v1872 = vsel %vm1846, %v1839, %v1476
      %v1873 = vsel %vm1846, %v1840, %v1478
      %v1874 = vsel %vm1846, %v1841, %v1480
      %v1875 = vsel %vm1846, %v1842, %v1482
      %v1876 = vsel %vm1846, %v1843, %v1484
      %v1877 = vsel %vm1846, %v1844, %v1486
      %v1878 = vsel %vm1846, %v1845, %v1488
      %vm1879 = vcmask 523264
      %v1880 = vsel %vm1879, %v1847, %v1554
      %v1881 = vsel %vm1879, %v1848, %v1556
      %v1882 = vsel %vm1879, %v1849, %v1558
      %v1883 = vsel %vm1879, %v1850, %v1560
      %v1884 = vsel %vm1879, %v1851, %v1562
      %v1885 = vsel %vm1879, %v1852, %v1564
      %v1886 = vsel %vm1879, %v1853, %v1566
      %v1887 = vsel %vm1879, %v1854, %v1568
      %v1888 = vsel %vm1879, %v1855, %v1570
      %v1889 = vsel %vm1879, %v1856, %v1572
      %v1890 = vsel %vm1879, %v1857, %v1574
      %v1891 = vsel %vm1879, %v1858, %v1576
      %v1892 = vsel %vm1879, %v1859, %v1578
      %v1893 = vsel %vm1879, %v1860, %v1580
      %v1894 = vsel %vm1879, %v1861, %v1582
      %v1895 = vsel %vm1879, %v1862, %v1584
      %v1896 = vsel %vm1879, %v1863, %v1586
      %v1897 = vsel %vm1879, %v1864, %v1588
      %v1898 = vsel %vm1879, %v1865, %v1590
      %v1899 = vsel %vm1879, %v1866, %v1592
      %v1900 = vsel %vm1879, %v1867, %v1594
      %v1901 = vsel %vm1879, %v1868, %v1596
      %v1902 = vsel %vm1879, %v1869, %v1598
      %v1903 = vsel %vm1879, %v1870, %v1600
      %v1904 = vsel %vm1879, %v1871, %v1602
      %v1905 = vsel %vm1879, %v1872, %v1604
      %v1906 = vsel %vm1879, %v1873, %v1606
      %v1907 = vsel %vm1879, %v1874, %v1608
      %v1908 = vsel %vm1879, %v1875, %v1610
      %v1909 = vsel %vm1879, %v1876, %v1612
      %v1910 = vsel %vm1879, %v1877, %v1614
      %v1911 = vsel %vm1879, %v1878, %v1616
      %v1912 = vld [vmem:[%s1] sm:$0xff]
      %v1913 = vld [vmem:[%s1 + $0x8] sm:$0xff]
      %v1914 = vld [vmem:[%s1 + $0x10] sm:$0xff]
      %v1915 = vld [vmem:[%s1 + $0x18] sm:$0xff]
      %v1916 = vld [vmem:[%s1 + $0x20] sm:$0xff]
      %v1917 = vld [vmem:[%s1 + $0x28] sm:$0xff]
      %v1918 = vld [vmem:[%s1 + $0x30] sm:$0xff]
      %v1919 = vld [vmem:[%s1 + $0x38] sm:$0xff]
      %v1920 = vld [vmem:[%s1 + $0x40] sm:$0xff]
      %v1921 = vld [vmem:[%s2] sm:$0x1]
      %v1923 = vlaneseq
      %v1924 = vshrl.u32 %v1923, 7
      %v1925 = vsub.s32 0, %v1924
      %v1926 = vrot.slane %v1921, %v1925
      %vm1928 = vcmask 588800
      %v1930 = vsel %vm1928, %v1880, 0
      %v1933 = vsel %vm1928, %v1881, 0
      %v1936 = vsel %vm1928, %v1882, 0
      %v1939 = vsel %vm1928, %v1883, 0
      %v1942 = vsel %vm1928, %v1884, 0
      %v1945 = vsel %vm1928, %v1885, 0
      %v1948 = vsel %vm1928, %v1886, 0
      %v1951 = vsel %vm1928, %v1887, 0
      %v1954 = vsel %vm1928, %v1888, 0
      %v1957 = vsel %vm1928, %v1889, 0
      %v1960 = vsel %vm1928, %v1890, 0
      %v1963 = vsel %vm1928, %v1891, 0
      %v1966 = vsel %vm1928, %v1892, 0
      %v1969 = vsel %vm1928, %v1893, 0
      %v1972 = vsel %vm1928, %v1894, 0
      %v1975 = vsel %vm1928, %v1895, 0
      %v1978 = vsel %vm1928, %v1896, 0
      %v1981 = vsel %vm1928, %v1897, 0
      %v1984 = vsel %vm1928, %v1898, 0
      %v1987 = vsel %vm1928, %v1899, 0
      %v1990 = vsel %vm1928, %v1900, 0
      %v1993 = vsel %vm1928, %v1901, 0
      %v1996 = vsel %vm1928, %v1902, 0
      %v1999 = vsel %vm1928, %v1903, 0
      %v2002 = vsel %vm1928, %v1904, 0
      %v2005 = vsel %vm1928, %v1905, 0
      %v2008 = vsel %vm1928, %v1906, 0
      %v2011 = vsel %vm1928, %v1907, 0
      %v2014 = vsel %vm1928, %v1908, 0
      %v2017 = vsel %vm1928, %v1909, 0
      %v2020 = vsel %vm1928, %v1910, 0
      %v2023 = vsel %vm1928, %v1911, 0
      %2025 = vmatprep.subr.mxu0 0.0
      %2026 = vmatpush1.msra.mxu0 0.0
      %2027 = vmatprep.subr.mxu0 0.0
      %2028 = vmatpush1.msra.mxu0 0.0
      %2029 = vmatprep.subr.mxu0 0.0
      %2030 = vmatpush1.msra.mxu0 0.0
      %2031 = vmatprep.subr.mxu0 0.0
      %2032 = vmatpush1.msra.mxu0 0.0
      %2033 = vmatprep.subr.mxu0 0.0
      %2034 = vmatpush1.msra.mxu0 0.0
      %2035 = vmatprep.subr.mxu0 0.0
      %2036 = vmatpush1.msra.mxu0 0.0
      %2037 = vmatprep.subr.mxu0 0.0
      %2038 = vmatpush1.msra.mxu0 0.0
      %2039 = vmatprep.subr.mxu0 0.0
      %2040 = vmatpush1.msra.mxu0 %v1920
      %2041 = vmatprep.subr.mxu0 0.0
      %2042 = vmatpush1.msra.mxu0 %v1919
      %2043 = vmatprep.subr.mxu0 0.0
      %2044 = vmatpush1.msra.mxu0 %v1918
      %2045 = vmatprep.subr.mxu0 0.0
      %2046 = vmatpush1.msra.mxu0 %v1917
      %2047 = vmatprep.subr.mxu0 0.0
      %2048 = vmatpush1.msra.mxu0 %v1916
      %2049 = vmatprep.subr.mxu0 0.0
      %2050 = vmatpush1.msra.mxu0 %v1915
      %2051 = vmatprep.subr.mxu0 0.0
      %2052 = vmatpush1.msra.mxu0 %v1914
      %2053 = vmatprep.subr.mxu0 0.0
      %2054 = vmatpush1.msra.mxu0 %v1913
      %2055 = vmatprep.subr.mxu0 0.0
      %2056 = vmatpush1.msra.mxu0 %v1912
      %2057 = vmatprep.subr.mxu0 0.0
      %2058 = vmatpush2.msra.mxu0 0.0
      %2059 = vmatprep.subr.mxu0 0.0
      %2060 = vmatpush2.msra.mxu0 0.0
      %2061 = vmatprep.subr.mxu0 0.0
      %2062 = vmatpush2.msra.mxu0 0.0
      %2063 = vmatprep.subr.mxu0 0.0
      %2064 = vmatpush2.msra.mxu0 0.0
      %2065 = vmatprep.subr.mxu0 0.0
      %2066 = vmatpush2.msra.mxu0 0.0
      %2067 = vmatprep.subr.mxu0 0.0
      %2068 = vmatpush2.msra.mxu0 0.0
      %2069 = vmatprep.subr.mxu0 0.0
      %2070 = vmatpush2.msra.mxu0 0.0
      %2071 = vmatprep.subr.mxu0 0.0
      %2072 = vmatpush2.msra.mxu0 0.0
      %2073 = vmatprep.subr.mxu0 0.0
      %2074 = vmatpush2.msra.mxu0 0.0
      %2075 = vmatprep.subr.mxu0 0.0
      %2076 = vmatpush2.msra.mxu0 0.0
      %2077 = vmatprep.subr.mxu0 0.0
      %2078 = vmatpush2.msra.mxu0 0.0
      %2079 = vmatprep.subr.mxu0 0.0
      %2080 = vmatpush2.msra.mxu0 0.0
      %2081 = vmatprep.subr.mxu0 0.0
      %2082 = vmatpush2.msra.mxu0 0.0
      %2083 = vmatprep.subr.mxu0 0.0
      %2084 = vmatpush2.msra.mxu0 0.0
      %2085 = vmatprep.subr.mxu0 0.0
      %2086 = vmatpush2.msra.mxu0 0.0
      %2087 = vmatprep.subr.mxu0 0.0
      %2088 = vmatpush2.msra.mxu0 0.0
      %2089 = vmatprep.mubr.f32.mxu0 0.0
      %2090 = vmatmul.mubr.f32.gmra.mxu0 %v1930
      %v2091 = vpop.f32.mrf.mxu0
      %v2092 = vadd.f32 %v1926, %v2091
      %v2093 = vpop.f32.mrf.mxu0
      %2094 = vmatprep.mubr.f32.mxu0 0.0
      %2095 = vmatmul.mubr.f32.gmra.mxu0 %v1933
      %v2096 = vpop.f32.mrf.mxu0
      %v2097 = vadd.f32 %v1926, %v2096
      %v2098 = vpop.f32.mrf.mxu0
      %2099 = vmatprep.mubr.f32.mxu0 0.0
      %2100 = vmatmul.mubr.f32.gmra.mxu0 %v1936
      %v2101 = vpop.f32.mrf.mxu0
      %v2102 = vadd.f32 %v1926, %v2101
      %v2103 = vpop.f32.mrf.mxu0
      %2104 = vmatprep.mubr.f32.mxu0 0.0
      %2105 = vmatmul.mubr.f32.gmra.mxu0 %v1939
      %v2106 = vpop.f32.mrf.mxu0
      %v2107 = vadd.f32 %v1926, %v2106
      %v2108 = vpop.f32.mrf.mxu0
      %2109 = vmatprep.mubr.f32.mxu0 0.0
      %2110 = vmatmul.mubr.f32.gmra.mxu0 %v1942
      %v2111 = vpop.f32.mrf.mxu0
      %v2112 = vadd.f32 %v1926, %v2111
      %v2113 = vpop.f32.mrf.mxu0
      %2114 = vmatprep.mubr.f32.mxu0 0.0
      %2115 = vmatmul.mubr.f32.gmra.mxu0 %v1945
      %v2116 = vpop.f32.mrf.mxu0
      %v2117 = vadd.f32 %v1926, %v2116
      %v2118 = vpop.f32.mrf.mxu0
      %2119 = vmatprep.mubr.f32.mxu0 0.0
      %2120 = vmatmul.mubr.f32.gmra.mxu0 %v1948
      %v2121 = vpop.f32.mrf.mxu0
      %v2122 = vadd.f32 %v1926, %v2121
      %v2123 = vpop.f32.mrf.mxu0
      %2124 = vmatprep.mubr.f32.mxu0 0.0
      %2125 = vmatmul.mubr.f32.gmra.mxu0 %v1951
      %v2126 = vpop.f32.mrf.mxu0
      %v2127 = vadd.f32 %v1926, %v2126
      %v2128 = vpop.f32.mrf.mxu0
      %2129 = vmatprep.mubr.f32.mxu0 0.0
      %2130 = vmatmul.mubr.f32.gmra.mxu0 %v1954
      %v2131 = vpop.f32.mrf.mxu0
      %v2132 = vadd.f32 %v1926, %v2131
      %v2133 = vpop.f32.mrf.mxu0
      %2134 = vmatprep.mubr.f32.mxu0 0.0
      %2135 = vmatmul.mubr.f32.gmra.mxu0 %v1957
      %v2136 = vpop.f32.mrf.mxu0
      %v2137 = vadd.f32 %v1926, %v2136
      %v2138 = vpop.f32.mrf.mxu0
      %2139 = vmatprep.mubr.f32.mxu0 0.0
      %2140 = vmatmul.mubr.f32.gmra.mxu0 %v1960
      %v2141 = vpop.f32.mrf.mxu0
      %v2142 = vadd.f32 %v1926, %v2141
      %v2143 = vpop.f32.mrf.mxu0
      %2144 = vmatprep.mubr.f32.mxu0 0.0
      %2145 = vmatmul.mubr.f32.gmra.mxu0 %v1963
      %v2146 = vpop.f32.mrf.mxu0
      %v2147 = vadd.f32 %v1926, %v2146
      %v2148 = vpop.f32.mrf.mxu0
      %2149 = vmatprep.mubr.f32.mxu0 0.0
      %2150 = vmatmul.mubr.f32.gmra.mxu0 %v1966
      %v2151 = vpop.f32.mrf.mxu0
      %v2152 = vadd.f32 %v1926, %v2151
      %v2153 = vpop.f32.mrf.mxu0
      %2154 = vmatprep.mubr.f32.mxu0 0.0
      %2155 = vmatmul.mubr.f32.gmra.mxu0 %v1969
      %v2156 = vpop.f32.mrf.mxu0
      %v2157 = vadd.f32 %v1926, %v2156
      %v2158 = vpop.f32.mrf.mxu0
      %2159 = vmatprep.mubr.f32.mxu0 0.0
      %2160 = vmatmul.mubr.f32.gmra.mxu0 %v1972
      %v2161 = vpop.f32.mrf.mxu0
      %v2162 = vadd.f32 %v1926, %v2161
      %v2163 = vpop.f32.mrf.mxu0
      %2164 = vmatprep.mubr.f32.mxu0 0.0
      %2165 = vmatmul.mubr.f32.gmra.mxu0 %v1975
      %v2166 = vpop.f32.mrf.mxu0
      %v2167 = vadd.f32 %v1926, %v2166
      %v2168 = vpop.f32.mrf.mxu0
      %2169 = vmatprep.mubr.f32.mxu0 0.0
      %2170 = vmatmul.mubr.f32.gmra.mxu0 %v1978
      %v2171 = vpop.f32.mrf.mxu0
      %v2172 = vadd.f32 %v1926, %v2171
      %v2173 = vpop.f32.mrf.mxu0
      %2174 = vmatprep.mubr.f32.mxu0 0.0
      %2175 = vmatmul.mubr.f32.gmra.mxu0 %v1981
      %v2176 = vpop.f32.mrf.mxu0
      %v2177 = vadd.f32 %v1926, %v2176
      %v2178 = vpop.f32.mrf.mxu0
      %2179 = vmatprep.mubr.f32.mxu0 0.0
      %2180 = vmatmul.mubr.f32.gmra.mxu0 %v1984
      %v2181 = vpop.f32.mrf.mxu0
      %v2182 = vadd.f32 %v1926, %v2181
      %v2183 = vpop.f32.mrf.mxu0
      %2184 = vmatprep.mubr.f32.mxu0 0.0
      %2185 = vmatmul.mubr.f32.gmra.mxu0 %v1987
      %v2186 = vpop.f32.mrf.mxu0
      %v2187 = vadd.f32 %v1926, %v2186
      %v2188 = vpop.f32.mrf.mxu0
      %2189 = vmatprep.mubr.f32.mxu0 0.0
      %2190 = vmatmul.mubr.f32.gmra.mxu0 %v1990
      %v2191 = vpop.f32.mrf.mxu0
      %v2192 = vadd.f32 %v1926, %v2191
      %v2193 = vpop.f32.mrf.mxu0
      %2194 = vmatprep.mubr.f32.mxu0 0.0
      %2195 = vmatmul.mubr.f32.gmra.mxu0 %v1993
      %v2196 = vpop.f32.mrf.mxu0
      %v2197 = vadd.f32 %v1926, %v2196
      %v2198 = vpop.f32.mrf.mxu0
      %2199 = vmatprep.mubr.f32.mxu0 0.0
      %2200 = vmatmul.mubr.f32.gmra.mxu0 %v1996
      %v2201 = vpop.f32.mrf.mxu0
      %v2202 = vadd.f32 %v1926, %v2201
      %v2203 = vpop.f32.mrf.mxu0
      %2204 = vmatprep.mubr.f32.mxu0 0.0
      %2205 = vmatmul.mubr.f32.gmra.mxu0 %v1999
      %v2206 = vpop.f32.mrf.mxu0
      %v2207 = vadd.f32 %v1926, %v2206
      %v2208 = vpop.f32.mrf.mxu0
      %2209 = vmatprep.mubr.f32.mxu0 0.0
      %2210 = vmatmul.mubr.f32.gmra.mxu0 %v2002
      %v2211 = vpop.f32.mrf.mxu0
      %v2212 = vadd.f32 %v1926, %v2211
      %v2213 = vpop.f32.mrf.mxu0
      %2214 = vmatprep.mubr.f32.mxu0 0.0
      %2215 = vmatmul.mubr.f32.gmra.mxu0 %v2005
      %v2216 = vpop.f32.mrf.mxu0
      %v2217 = vadd.f32 %v1926, %v2216
      %v2218 = vpop.f32.mrf.mxu0
      %2219 = vmatprep.mubr.f32.mxu0 0.0
      %2220 = vmatmul.mubr.f32.gmra.mxu0 %v2008
      %v2221 = vpop.f32.mrf.mxu0
      %v2222 = vadd.f32 %v1926, %v2221
      %v2223 = vpop.f32.mrf.mxu0
      %2224 = vmatprep.mubr.f32.mxu0 0.0
      %2225 = vmatmul.mubr.f32.gmra.mxu0 %v2011
      %v2226 = vpop.f32.mrf.mxu0
      %v2227 = vadd.f32 %v1926, %v2226
      %v2228 = vpop.f32.mrf.mxu0
      %2229 = vmatprep.mubr.f32.mxu0 0.0
      %2230 = vmatmul.mubr.f32.gmra.mxu0 %v2014
      %v2231 = vpop.f32.mrf.mxu0
      %v2232 = vadd.f32 %v1926, %v2231
      %v2233 = vpop.f32.mrf.mxu0
      %2234 = vmatprep.mubr.f32.mxu0 0.0
      %2235 = vmatmul.mubr.f32.gmra.mxu0 %v2017
      %v2236 = vpop.f32.mrf.mxu0
      %v2237 = vadd.f32 %v1926, %v2236
      %v2238 = vpop.f32.mrf.mxu0
      %2239 = vmatprep.mubr.f32.mxu0 0.0
      %2240 = vmatmul.mubr.f32.gmra.mxu0 %v2020
      %v2241 = vpop.f32.mrf.mxu0
      %v2242 = vadd.f32 %v1926, %v2241
      %v2243 = vpop.f32.mrf.mxu0
      %2244 = vmatprep.mubr.f32.mxu0 0.0
      %2245 = vmatmul.mubr.f32.gmra.mxu0 %v2023
      %v2246 = vpop.f32.mrf.mxu0
      %v2247 = vadd.f32 %v1926, %v2246
      %v2248 = vpop.f32.mrf.mxu0
      %2249 = vdwg.mxu0
      %v2250 = vmax.f32 %v2092, 0.0
      %v2251 = vmax.f32 %v2097, 0.0
      %v2252 = vmax.f32 %v2102, 0.0
      %v2253 = vmax.f32 %v2107, 0.0
      %v2254 = vmax.f32 %v2112, 0.0
      %v2255 = vmax.f32 %v2117, 0.0
      %v2256 = vmax.f32 %v2122, 0.0
      %v2257 = vmax.f32 %v2127, 0.0
      %v2258 = vmax.f32 %v2132, 0.0
      %v2259 = vmax.f32 %v2137, 0.0
      %v2260 = vmax.f32 %v2142, 0.0
      %v2261 = vmax.f32 %v2147, 0.0
      %v2262 = vmax.f32 %v2152, 0.0
      %v2263 = vmax.f32 %v2157, 0.0
      %v2264 = vmax.f32 %v2162, 0.0
      %v2265 = vmax.f32 %v2167, 0.0
      %v2266 = vmax.f32 %v2172, 0.0
      %v2267 = vmax.f32 %v2177, 0.0
      %v2268 = vmax.f32 %v2182, 0.0
      %v2269 = vmax.f32 %v2187, 0.0
      %v2270 = vmax.f32 %v2192, 0.0
      %v2271 = vmax.f32 %v2197, 0.0
      %v2272 = vmax.f32 %v2202, 0.0
      %v2273 = vmax.f32 %v2207, 0.0
      %v2274 = vmax.f32 %v2212, 0.0
      %v2275 = vmax.f32 %v2217, 0.0
      %v2276 = vmax.f32 %v2222, 0.0
      %v2277 = vmax.f32 %v2227, 0.0
      %v2278 = vmax.f32 %v2232, 0.0
      %v2279 = vmax.f32 %v2237, 0.0
      %v2280 = vmax.f32 %v2242, 0.0
      %v2281 = vmax.f32 %v2247, 0.0
      %2282 = vst.msk [vmem:[#allocation3] sm:$0xff] %vm257, 0.0
      %2283 = vst.msk [vmem:[#allocation3 + $0x8] sm:$0xff] %vm257, 0.0
      %2284 = vst.msk [vmem:[#allocation3 + $0x10] sm:$0x3] %vm260, 0.0
      %s2285 = scalar_lea.vmem [#allocation3], 408
      %2286 = vst.msk [vmem:[%s2285] sm:$0xff] %vm257, 0.0
      %2287 = vst.msk [vmem:[%s2285 + $0x8] sm:$0xff] %vm257, 0.0
      %2288 = vst.msk [vmem:[%s2285 + $0x10] sm:$0x3] %vm260, 0.0
      %2289 = vst.msk [vmem:[#allocation3] sm:$0x1] %vm266, 0.0
      %2290 = vst.msk [vmem:[#allocation3 + $0x18] sm:$0x1] %vm266, 0.0
      %2291 = vst.msk [vmem:[#allocation3 + $0x30] sm:$0x1] %vm266, 0.0
      %2292 = vst.msk [vmem:[#allocation3 + $0x48] sm:$0x1] %vm266, 0.0
      %2293 = vst.msk [vmem:[#allocation3 + $0x60] sm:$0x1] %vm266, 0.0
      %2294 = vst.msk [vmem:[#allocation3 + $0x78] sm:$0x1] %vm266, 0.0
      %2295 = vst.msk [vmem:[#allocation3 + $0x90] sm:$0x1] %vm266, 0.0
      %2296 = vst.msk [vmem:[#allocation3 + $0xa8] sm:$0x1] %vm266, 0.0
      %2297 = vst.msk [vmem:[#allocation3 + $0xc0] sm:$0x1] %vm266, 0.0
      %2298 = vst.msk [vmem:[#allocation3 + $0xd8] sm:$0x1] %vm266, 0.0
      %2299 = vst.msk [vmem:[#allocation3 + $0xf0] sm:$0x1] %vm266, 0.0
      %2300 = vst.msk [vmem:[#allocation3 + $0x108] sm:$0x1] %vm266, 0.0
      %2301 = vst.msk [vmem:[#allocation3 + $0x120] sm:$0x1] %vm266, 0.0
      %2302 = vst.msk [vmem:[#allocation3 + $0x138] sm:$0x1] %vm266, 0.0
      %2303 = vst.msk [vmem:[#allocation3 + $0x150] sm:$0x1] %vm266, 0.0
      %2304 = vst.msk [vmem:[#allocation3 + $0x168] sm:$0x1] %vm266, 0.0
      %2305 = vst.msk [vmem:[#allocation3 + $0x180] sm:$0x1] %vm266, 0.0
      %2306 = vst.msk [vmem:[#allocation3 + $0x198] sm:$0x1] %vm266, 0.0
      %2307 = vst.msk [vmem:[#allocation3 + $0x11] sm:$0x1] %vm266, 0.0
      %2308 = vst.msk [vmem:[#allocation3 + $0x29] sm:$0x1] %vm266, 0.0
      %2309 = vst.msk [vmem:[#allocation3 + $0x41] sm:$0x1] %vm266, 0.0
      %2310 = vst.msk [vmem:[#allocation3 + $0x59] sm:$0x1] %vm266, 0.0
      %2311 = vst.msk [vmem:[#allocation3 + $0x71] sm:$0x1] %vm266, 0.0
      %2312 = vst.msk [vmem:[#allocation3 + $0x89] sm:$0x1] %vm266, 0.0
      %2313 = vst.msk [vmem:[#allocation3 + $0xa1] sm:$0x1] %vm266, 0.0
      %2314 = vst.msk [vmem:[#allocation3 + $0xb9] sm:$0x1] %vm266, 0.0
      %2315 = vst.msk [vmem:[#allocation3 + $0xd1] sm:$0x1] %vm266, 0.0
      %2316 = vst.msk [vmem:[#allocation3 + $0xe9] sm:$0x1] %vm266, 0.0
      %2317 = vst.msk [vmem:[#allocation3 + $0x101] sm:$0x1] %vm266, 0.0
      %2318 = vst.msk [vmem:[#allocation3 + $0x119] sm:$0x1] %vm266, 0.0
      %2319 = vst.msk [vmem:[#allocation3 + $0x131] sm:$0x1] %vm266, 0.0
      %2320 = vst.msk [vmem:[#allocation3 + $0x149] sm:$0x1] %vm266, 0.0
      %2321 = vst.msk [vmem:[#allocation3 + $0x161] sm:$0x1] %vm266, 0.0
      %2322 = vst.msk [vmem:[#allocation3 + $0x179] sm:$0x1] %vm266, 0.0
      %2323 = vst.msk [vmem:[#allocation3 + $0x191] sm:$0x1] %vm266, 0.0
      %2324 = vst.msk [vmem:[#allocation3 + $0x1a9] sm:$0x1] %vm266, 0.0
      %s2325 = scalar_lea.vmem [#allocation3], 24
      %2326 = vst.msk [vmem:[%s2325 + $0x1] sm:$0xff] %vm257, %v2250
      %2327 = vst.msk [vmem:[%s2325 + $0x9] sm:$0xff] %vm257, %v2251
      %2328 = vst.msk [vmem:[%s2325 + $0x19] sm:$0xff] %vm257, %v2252
      %2329 = vst.msk [vmem:[%s2325 + $0x21] sm:$0xff] %vm257, %v2253
      %2330 = vst.msk [vmem:[%s2325 + $0x31] sm:$0xff] %vm257, %v2254
      %2331 = vst.msk [vmem:[%s2325 + $0x39] sm:$0xff] %vm257, %v2255
      %2332 = vst.msk [vmem:[%s2325 + $0x49] sm:$0xff] %vm257, %v2256
      %2333 = vst.msk [vmem:[%s2325 + $0x51] sm:$0xff] %vm257, %v2257
      %2334 = vst.msk [vmem:[%s2325 + $0x61] sm:$0xff] %vm257, %v2258
      %2335 = vst.msk [vmem:[%s2325 + $0x69] sm:$0xff] %vm257, %v2259
      %2336 = vst.msk [vmem:[%s2325 + $0x79] sm:$0xff] %vm257, %v2260
      %2337 = vst.msk [vmem:[%s2325 + $0x81] sm:$0xff] %vm257, %v2261
      %2338 = vst.msk [vmem:[%s2325 + $0x91] sm:$0xff] %vm257, %v2262
      %2339 = vst.msk [vmem:[%s2325 + $0x99] sm:$0xff] %vm257, %v2263
      %2340 = vst.msk [vmem:[%s2325 + $0xa9] sm:$0xff] %vm257, %v2264
      %2341 = vst.msk [vmem:[%s2325 + $0xb1] sm:$0xff] %vm257, %v2265
      %2342 = vst.msk [vmem:[%s2325 + $0xc1] sm:$0xff] %vm257, %v2266
      %2343 = vst.msk [vmem:[%s2325 + $0xc9] sm:$0xff] %vm257, %v2267
      %2344 = vst.msk [vmem:[%s2325 + $0xd9] sm:$0xff] %vm257, %v2268
      %2345 = vst.msk [vmem:[%s2325 + $0xe1] sm:$0xff] %vm257, %v2269
      %2346 = vst.msk [vmem:[%s2325 + $0xf1] sm:$0xff] %vm257, %v2270
      %2347 = vst.msk [vmem:[%s2325 + $0xf9] sm:$0xff] %vm257, %v2271
      %2348 = vst.msk [vmem:[%s2325 + $0x109] sm:$0xff] %vm257, %v2272
      %2349 = vst.msk [vmem:[%s2325 + $0x111] sm:$0xff] %vm257, %v2273
      %2350 = vst.msk [vmem:[%s2325 + $0x121] sm:$0xff] %vm257, %v2274
      %2351 = vst.msk [vmem:[%s2325 + $0x129] sm:$0xff] %vm257, %v2275
      %2352 = vst.msk [vmem:[%s2325 + $0x139] sm:$0xff] %vm257, %v2276
      %2353 = vst.msk [vmem:[%s2325 + $0x141] sm:$0xff] %vm257, %v2277
      %2354 = vst.msk [vmem:[%s2325 + $0x151] sm:$0xff] %vm257, %v2278
      %2355 = vst.msk [vmem:[%s2325 + $0x159] sm:$0xff] %vm257, %v2279
      %2356 = vst.msk [vmem:[%s2325 + $0x169] sm:$0xff] %vm257, %v2280
      %2357 = vst.msk [vmem:[%s2325 + $0x171] sm:$0xff] %vm257, %v2281
      %v2358 = vld [vmem:[#allocation3] sm:$0xff]
      %v2359 = vld [vmem:[#allocation3 + $0x8] sm:$0xff]
      %v2360 = vld [vmem:[#allocation3 + $0x18] sm:$0xff]
      %v2361 = vld [vmem:[#allocation3 + $0x20] sm:$0xff]
      %v2362 = vld [vmem:[#allocation3 + $0x30] sm:$0xff]
      %v2363 = vld [vmem:[#allocation3 + $0x38] sm:$0xff]
      %v2364 = vld [vmem:[#allocation3 + $0x48] sm:$0xff]
      %v2365 = vld [vmem:[#allocation3 + $0x50] sm:$0xff]
      %v2366 = vld [vmem:[#allocation3 + $0x60] sm:$0xff]
      %v2367 = vld [vmem:[#allocation3 + $0x68] sm:$0xff]
      %v2368 = vld [vmem:[#allocation3 + $0x78] sm:$0xff]
      %v2369 = vld [vmem:[#allocation3 + $0x80] sm:$0xff]
      %v2370 = vld [vmem:[#allocation3 + $0x90] sm:$0xff]
      %v2371 = vld [vmem:[#allocation3 + $0x98] sm:$0xff]
      %v2372 = vld [vmem:[#allocation3 + $0xa8] sm:$0xff]
      %v2373 = vld [vmem:[#allocation3 + $0xb0] sm:$0xff]
      %v2374 = vld [vmem:[#allocation3 + $0xc0] sm:$0xff]
      %v2375 = vld [vmem:[#allocation3 + $0xc8] sm:$0xff]
      %v2376 = vld [vmem:[#allocation3 + $0xd8] sm:$0xff]
      %v2377 = vld [vmem:[#allocation3 + $0xe0] sm:$0xff]
      %v2378 = vld [vmem:[#allocation3 + $0xf0] sm:$0xff]
      %v2379 = vld [vmem:[#allocation3 + $0xf8] sm:$0xff]
      %v2380 = vld [vmem:[#allocation3 + $0x108] sm:$0xff]
      %v2381 = vld [vmem:[#allocation3 + $0x110] sm:$0xff]
      %v2382 = vld [vmem:[#allocation3 + $0x120] sm:$0xff]
      %v2383 = vld [vmem:[#allocation3 + $0x128] sm:$0xff]
      %v2384 = vld [vmem:[#allocation3 + $0x138] sm:$0xff]
      %v2385 = vld [vmem:[#allocation3 + $0x140] sm:$0xff]
      %v2386 = vld [vmem:[#allocation3 + $0x150] sm:$0xff]
      %v2387 = vld [vmem:[#allocation3 + $0x158] sm:$0xff]
      %v2388 = vld [vmem:[#allocation3 + $0x168] sm:$0xff]
      %v2389 = vld [vmem:[#allocation3 + $0x170] sm:$0xff]
      %v2390 = vld [vmem:[#allocation3 + $0x1] sm:$0xff]
      %v2391 = vld [vmem:[#allocation3 + $0x9] sm:$0xff]
      %v2392 = vld [vmem:[#allocation3 + $0x19] sm:$0xff]
      %v2393 = vld [vmem:[#allocation3 + $0x21] sm:$0xff]
      %v2394 = vld [vmem:[#allocation3 + $0x31] sm:$0xff]
      %v2395 = vld [vmem:[#allocation3 + $0x39] sm:$0xff]
      %v2396 = vld [vmem:[#allocation3 + $0x49] sm:$0xff]
      %v2397 = vld [vmem:[#allocation3 + $0x51] sm:$0xff]
      %v2398 = vld [vmem:[#allocation3 + $0x61] sm:$0xff]
      %v2399 = vld [vmem:[#allocation3 + $0x69] sm:$0xff]
      %v2400 = vld [vmem:[#allocation3 + $0x79] sm:$0xff]
      %v2401 = vld [vmem:[#allocation3 + $0x81] sm:$0xff]
      %v2402 = vld [vmem:[#allocation3 + $0x91] sm:$0xff]
      %v2403 = vld [vmem:[#allocation3 + $0x99] sm:$0xff]
      %v2404 = vld [vmem:[#allocation3 + $0xa9] sm:$0xff]
      %v2405 = vld [vmem:[#allocation3 + $0xb1] sm:$0xff]
      %v2406 = vld [vmem:[#allocation3 + $0xc1] sm:$0xff]
      %v2407 = vld [vmem:[#allocation3 + $0xc9] sm:$0xff]
      %v2408 = vld [vmem:[#allocation3 + $0xd9] sm:$0xff]
      %v2409 = vld [vmem:[#allocation3 + $0xe1] sm:$0xff]
      %v2410 = vld [vmem:[#allocation3 + $0xf1] sm:$0xff]
      %v2411 = vld [vmem:[#allocation3 + $0xf9] sm:$0xff]
      %v2412 = vld [vmem:[#allocation3 + $0x109] sm:$0xff]
      %v2413 = vld [vmem:[#allocation3 + $0x111] sm:$0xff]
      %v2414 = vld [vmem:[#allocation3 + $0x121] sm:$0xff]
      %v2415 = vld [vmem:[#allocation3 + $0x129] sm:$0xff]
      %v2416 = vld [vmem:[#allocation3 + $0x139] sm:$0xff]
      %v2417 = vld [vmem:[#allocation3 + $0x141] sm:$0xff]
      %v2418 = vld [vmem:[#allocation3 + $0x151] sm:$0xff]
      %v2419 = vld [vmem:[#allocation3 + $0x159] sm:$0xff]
      %v2420 = vld [vmem:[#allocation3 + $0x169] sm:$0xff]
      %v2421 = vld [vmem:[#allocation3 + $0x171] sm:$0xff]
      %v2422 = vld [vmem:[#allocation3 + $0x2] sm:$0xff]
      %v2423 = vld [vmem:[#allocation3 + $0xa] sm:$0xff]
      %v2424 = vld [vmem:[#allocation3 + $0x1a] sm:$0xff]
      %v2425 = vld [vmem:[#allocation3 + $0x22] sm:$0xff]
      %v2426 = vld [vmem:[#allocation3 + $0x32] sm:$0xff]
      %v2427 = vld [vmem:[#allocation3 + $0x3a] sm:$0xff]
      %v2428 = vld [vmem:[#allocation3 + $0x4a] sm:$0xff]
      %v2429 = vld [vmem:[#allocation3 + $0x52] sm:$0xff]
      %v2430 = vld [vmem:[#allocation3 + $0x62] sm:$0xff]
      %v2431 = vld [vmem:[#allocation3 + $0x6a] sm:$0xff]
      %v2432 = vld [vmem:[#allocation3 + $0x7a] sm:$0xff]
      %v2433 = vld [vmem:[#allocation3 + $0x82] sm:$0xff]
      %v2434 = vld [vmem:[#allocation3 + $0x92] sm:$0xff]
      %v2435 = vld [vmem:[#allocation3 + $0x9a] sm:$0xff]
      %v2436 = vld [vmem:[#allocation3 + $0xaa] sm:$0xff]
      %v2437 = vld [vmem:[#allocation3 + $0xb2] sm:$0xff]
      %v2438 = vld [vmem:[#allocation3 + $0xc2] sm:$0xff]
      %v2439 = vld [vmem:[#allocation3 + $0xca] sm:$0xff]
      %v2440 = vld [vmem:[#allocation3 + $0xda] sm:$0xff]
      %v2441 = vld [vmem:[#allocation3 + $0xe2] sm:$0xff]
      %v2442 = vld [vmem:[#allocation3 + $0xf2] sm:$0xff]
      %v2443 = vld [vmem:[#allocation3 + $0xfa] sm:$0xff]
      %v2444 = vld [vmem:[#allocation3 + $0x10a] sm:$0xff]
      %v2445 = vld [vmem:[#allocation3 + $0x112] sm:$0xff]
      %v2446 = vld [vmem:[#allocation3 + $0x122] sm:$0xff]
      %v2447 = vld [vmem:[#allocation3 + $0x12a] sm:$0xff]
      %v2448 = vld [vmem:[#allocation3 + $0x13a] sm:$0xff]
      %v2449 = vld [vmem:[#allocation3 + $0x142] sm:$0xff]
      %v2450 = vld [vmem:[#allocation3 + $0x152] sm:$0xff]
      %v2451 = vld [vmem:[#allocation3 + $0x15a] sm:$0xff]
      %v2452 = vld [vmem:[#allocation3 + $0x16a] sm:$0xff]
      %v2453 = vld [vmem:[#allocation3 + $0x172] sm:$0xff]
      %v2454 = vld [vmem:[%s2325] sm:$0xff]
      %v2455 = vld [vmem:[%s2325 + $0x8] sm:$0xff]
      %v2456 = vld [vmem:[%s2325 + $0x18] sm:$0xff]
      %v2457 = vld [vmem:[%s2325 + $0x20] sm:$0xff]
      %v2458 = vld [vmem:[%s2325 + $0x30] sm:$0xff]
      %v2459 = vld [vmem:[%s2325 + $0x38] sm:$0xff]
      %v2460 = vld [vmem:[%s2325 + $0x48] sm:$0xff]
      %v2461 = vld [vmem:[%s2325 + $0x50] sm:$0xff]
      %v2462 = vld [vmem:[%s2325 + $0x60] sm:$0xff]
      %v2463 = vld [vmem:[%s2325 + $0x68] sm:$0xff]
      %v2464 = vld [vmem:[%s2325 + $0x78] sm:$0xff]
      %v2465 = vld [vmem:[%s2325 + $0x80] sm:$0xff]
      %v2466 = vld [vmem:[%s2325 + $0x90] sm:$0xff]
      %v2467 = vld [vmem:[%s2325 + $0x98] sm:$0xff]
      %v2468 = vld [vmem:[%s2325 + $0xa8] sm:$0xff]
      %v2469 = vld [vmem:[%s2325 + $0xb0] sm:$0xff]
      %v2470 = vld [vmem:[%s2325 + $0xc0] sm:$0xff]
      %v2471 = vld [vmem:[%s2325 + $0xc8] sm:$0xff]
      %v2472 = vld [vmem:[%s2325 + $0xd8] sm:$0xff]
      %v2473 = vld [vmem:[%s2325 + $0xe0] sm:$0xff]
      %v2474 = vld [vmem:[%s2325 + $0xf0] sm:$0xff]
      %v2475 = vld [vmem:[%s2325 + $0xf8] sm:$0xff]
      %v2476 = vld [vmem:[%s2325 + $0x108] sm:$0xff]
      %v2477 = vld [vmem:[%s2325 + $0x110] sm:$0xff]
      %v2478 = vld [vmem:[%s2325 + $0x120] sm:$0xff]
      %v2479 = vld [vmem:[%s2325 + $0x128] sm:$0xff]
      %v2480 = vld [vmem:[%s2325 + $0x138] sm:$0xff]
      %v2481 = vld [vmem:[%s2325 + $0x140] sm:$0xff]
      %v2482 = vld [vmem:[%s2325 + $0x150] sm:$0xff]
      %v2483 = vld [vmem:[%s2325 + $0x158] sm:$0xff]
      %v2484 = vld [vmem:[%s2325 + $0x168] sm:$0xff]
      %v2485 = vld [vmem:[%s2325 + $0x170] sm:$0xff]
      %v2486 = vld [vmem:[%s2325 + $0x1] sm:$0xff]
      %v2487 = vld [vmem:[%s2325 + $0x9] sm:$0xff]
      %v2488 = vld [vmem:[%s2325 + $0x19] sm:$0xff]
      %v2489 = vld [vmem:[%s2325 + $0x21] sm:$0xff]
      %v2490 = vld [vmem:[%s2325 + $0x31] sm:$0xff]
      %v2491 = vld [vmem:[%s2325 + $0x39] sm:$0xff]
      %v2492 = vld [vmem:[%s2325 + $0x49] sm:$0xff]
      %v2493 = vld [vmem:[%s2325 + $0x51] sm:$0xff]
      %v2494 = vld [vmem:[%s2325 + $0x61] sm:$0xff]
      %v2495 = vld [vmem:[%s2325 + $0x69] sm:$0xff]
      %v2496 = vld [vmem:[%s2325 + $0x79] sm:$0xff]
      %v2497 = vld [vmem:[%s2325 + $0x81] sm:$0xff]
      %v2498 = vld [vmem:[%s2325 + $0x91] sm:$0xff]
      %v2499 = vld [vmem:[%s2325 + $0x99] sm:$0xff]
      %v2500 = vld [vmem:[%s2325 + $0xa9] sm:$0xff]
      %v2501 = vld [vmem:[%s2325 + $0xb1] sm:$0xff]
      %v2502 = vld [vmem:[%s2325 + $0xc1] sm:$0xff]
      %v2503 = vld [vmem:[%s2325 + $0xc9] sm:$0xff]
      %v2504 = vld [vmem:[%s2325 + $0xd9] sm:$0xff]
      %v2505 = vld [vmem:[%s2325 + $0xe1] sm:$0xff]
      %v2506 = vld [vmem:[%s2325 + $0xf1] sm:$0xff]
      %v2507 = vld [vmem:[%s2325 + $0xf9] sm:$0xff]
      %v2508 = vld [vmem:[%s2325 + $0x109] sm:$0xff]
      %v2509 = vld [vmem:[%s2325 + $0x111] sm:$0xff]
      %v2510 = vld [vmem:[%s2325 + $0x121] sm:$0xff]
      %v2511 = vld [vmem:[%s2325 + $0x129] sm:$0xff]
      %v2512 = vld [vmem:[%s2325 + $0x139] sm:$0xff]
      %v2513 = vld [vmem:[%s2325 + $0x141] sm:$0xff]
      %v2514 = vld [vmem:[%s2325 + $0x151] sm:$0xff]
      %v2515 = vld [vmem:[%s2325 + $0x159] sm:$0xff]
      %v2516 = vld [vmem:[%s2325 + $0x169] sm:$0xff]
      %v2517 = vld [vmem:[%s2325 + $0x171] sm:$0xff]
      %v2518 = vld [vmem:[%s2325 + $0x2] sm:$0xff]
      %v2519 = vld [vmem:[%s2325 + $0xa] sm:$0xff]
      %v2520 = vld [vmem:[%s2325 + $0x1a] sm:$0xff]
      %v2521 = vld [vmem:[%s2325 + $0x22] sm:$0xff]
      %v2522 = vld [vmem:[%s2325 + $0x32] sm:$0xff]
      %v2523 = vld [vmem:[%s2325 + $0x3a] sm:$0xff]
      %v2524 = vld [vmem:[%s2325 + $0x4a] sm:$0xff]
      %v2525 = vld [vmem:[%s2325 + $0x52] sm:$0xff]
      %v2526 = vld [vmem:[%s2325 + $0x62] sm:$0xff]
      %v2527 = vld [vmem:[%s2325 + $0x6a] sm:$0xff]
      %v2528 = vld [vmem:[%s2325 + $0x7a] sm:$0xff]
      %v2529 = vld [vmem:[%s2325 + $0x82] sm:$0xff]
      %v2530 = vld [vmem:[%s2325 + $0x92] sm:$0xff]
      %v2531 = vld [vmem:[%s2325 + $0x9a] sm:$0xff]
      %v2532 = vld [vmem:[%s2325 + $0xaa] sm:$0xff]
      %v2533 = vld [vmem:[%s2325 + $0xb2] sm:$0xff]
      %v2534 = vld [vmem:[%s2325 + $0xc2] sm:$0xff]
      %v2535 = vld [vmem:[%s2325 + $0xca] sm:$0xff]
      %v2536 = vld [vmem:[%s2325 + $0xda] sm:$0xff]
      %v2537 = vld [vmem:[%s2325 + $0xe2] sm:$0xff]
      %v2538 = vld [vmem:[%s2325 + $0xf2] sm:$0xff]
      %v2539 = vld [vmem:[%s2325 + $0xfa] sm:$0xff]
      %v2540 = vld [vmem:[%s2325 + $0x10a] sm:$0xff]
      %v2541 = vld [vmem:[%s2325 + $0x112] sm:$0xff]
      %v2542 = vld [vmem:[%s2325 + $0x122] sm:$0xff]
      %v2543 = vld [vmem:[%s2325 + $0x12a] sm:$0xff]
      %v2544 = vld [vmem:[%s2325 + $0x13a] sm:$0xff]
      %v2545 = vld [vmem:[%s2325 + $0x142] sm:$0xff]
      %v2546 = vld [vmem:[%s2325 + $0x152] sm:$0xff]
      %v2547 = vld [vmem:[%s2325 + $0x15a] sm:$0xff]
      %v2548 = vld [vmem:[%s2325 + $0x16a] sm:$0xff]
      %v2549 = vld [vmem:[%s2325 + $0x172] sm:$0xff]
      %s2550 = scalar_lea.vmem [#allocation3], 48
      %v2551 = vld [vmem:[%s2550] sm:$0xff]
      %v2552 = vld [vmem:[%s2550 + $0x8] sm:$0xff]
      %v2553 = vld [vmem:[%s2550 + $0x18] sm:$0xff]
      %v2554 = vld [vmem:[%s2550 + $0x20] sm:$0xff]
      %v2555 = vld [vmem:[%s2550 + $0x30] sm:$0xff]
      %v2556 = vld [vmem:[%s2550 + $0x38] sm:$0xff]
      %v2557 = vld [vmem:[%s2550 + $0x48] sm:$0xff]
      %v2558 = vld [vmem:[%s2550 + $0x50] sm:$0xff]
      %v2559 = vld [vmem:[%s2550 + $0x60] sm:$0xff]
      %v2560 = vld [vmem:[%s2550 + $0x68] sm:$0xff]
      %v2561 = vld [vmem:[%s2550 + $0x78] sm:$0xff]
      %v2562 = vld [vmem:[%s2550 + $0x80] sm:$0xff]
      %v2563 = vld [vmem:[%s2550 + $0x90] sm:$0xff]
      %v2564 = vld [vmem:[%s2550 + $0x98] sm:$0xff]
      %v2565 = vld [vmem:[%s2550 + $0xa8] sm:$0xff]
      %v2566 = vld [vmem:[%s2550 + $0xb0] sm:$0xff]
      %v2567 = vld [vmem:[%s2550 + $0xc0] sm:$0xff]
      %v2568 = vld [vmem:[%s2550 + $0xc8] sm:$0xff]
      %v2569 = vld [vmem:[%s2550 + $0xd8] sm:$0xff]
      %v2570 = vld [vmem:[%s2550 + $0xe0] sm:$0xff]
      %v2571 = vld [vmem:[%s2550 + $0xf0] sm:$0xff]
      %v2572 = vld [vmem:[%s2550 + $0xf8] sm:$0xff]
      %v2573 = vld [vmem:[%s2550 + $0x108] sm:$0xff]
      %v2574 = vld [vmem:[%s2550 + $0x110] sm:$0xff]
      %v2575 = vld [vmem:[%s2550 + $0x120] sm:$0xff]
      %v2576 = vld [vmem:[%s2550 + $0x128] sm:$0xff]
      %v2577 = vld [vmem:[%s2550 + $0x138] sm:$0xff]
      %v2578 = vld [vmem:[%s2550 + $0x140] sm:$0xff]
      %v2579 = vld [vmem:[%s2550 + $0x150] sm:$0xff]
      %v2580 = vld [vmem:[%s2550 + $0x158] sm:$0xff]
      %v2581 = vld [vmem:[%s2550 + $0x168] sm:$0xff]
      %v2582 = vld [vmem:[%s2550 + $0x170] sm:$0xff]
      %v2583 = vld [vmem:[%s2550 + $0x1] sm:$0xff]
      %v2584 = vld [vmem:[%s2550 + $0x9] sm:$0xff]
      %v2585 = vld [vmem:[%s2550 + $0x19] sm:$0xff]
      %v2586 = vld [vmem:[%s2550 + $0x21] sm:$0xff]
      %v2587 = vld [vmem:[%s2550 + $0x31] sm:$0xff]
      %v2588 = vld [vmem:[%s2550 + $0x39] sm:$0xff]
      %v2589 = vld [vmem:[%s2550 + $0x49] sm:$0xff]
      %v2590 = vld [vmem:[%s2550 + $0x51] sm:$0xff]
      %v2591 = vld [vmem:[%s2550 + $0x61] sm:$0xff]
      %v2592 = vld [vmem:[%s2550 + $0x69] sm:$0xff]
      %v2593 = vld [vmem:[%s2550 + $0x79] sm:$0xff]
      %v2594 = vld [vmem:[%s2550 + $0x81] sm:$0xff]
      %v2595 = vld [vmem:[%s2550 + $0x91] sm:$0xff]
      %v2596 = vld [vmem:[%s2550 + $0x99] sm:$0xff]
      %v2597 = vld [vmem:[%s2550 + $0xa9] sm:$0xff]
      %v2598 = vld [vmem:[%s2550 + $0xb1] sm:$0xff]
      %v2599 = vld [vmem:[%s2550 + $0xc1] sm:$0xff]
      %v2600 = vld [vmem:[%s2550 + $0xc9] sm:$0xff]
      %v2601 = vld [vmem:[%s2550 + $0xd9] sm:$0xff]
      %v2602 = vld [vmem:[%s2550 + $0xe1] sm:$0xff]
      %v2603 = vld [vmem:[%s2550 + $0xf1] sm:$0xff]
      %v2604 = vld [vmem:[%s2550 + $0xf9] sm:$0xff]
      %v2605 = vld [vmem:[%s2550 + $0x109] sm:$0xff]
      %v2606 = vld [vmem:[%s2550 + $0x111] sm:$0xff]
      %v2607 = vld [vmem:[%s2550 + $0x121] sm:$0xff]
      %v2608 = vld [vmem:[%s2550 + $0x129] sm:$0xff]
      %v2609 = vld [vmem:[%s2550 + $0x139] sm:$0xff]
      %v2610 = vld [vmem:[%s2550 + $0x141] sm:$0xff]
      %v2611 = vld [vmem:[%s2550 + $0x151] sm:$0xff]
      %v2612 = vld [vmem:[%s2550 + $0x159] sm:$0xff]
      %v2613 = vld [vmem:[%s2550 + $0x169] sm:$0xff]
      %v2614 = vld [vmem:[%s2550 + $0x171] sm:$0xff]
      %v2615 = vld [vmem:[%s2550 + $0x2] sm:$0xff]
      %v2616 = vld [vmem:[%s2550 + $0xa] sm:$0xff]
      %v2617 = vld [vmem:[%s2550 + $0x1a] sm:$0xff]
      %v2618 = vld [vmem:[%s2550 + $0x22] sm:$0xff]
      %v2619 = vld [vmem:[%s2550 + $0x32] sm:$0xff]
      %v2620 = vld [vmem:[%s2550 + $0x3a] sm:$0xff]
      %v2621 = vld [vmem:[%s2550 + $0x4a] sm:$0xff]
      %v2622 = vld [vmem:[%s2550 + $0x52] sm:$0xff]
      %v2623 = vld [vmem:[%s2550 + $0x62] sm:$0xff]
      %v2624 = vld [vmem:[%s2550 + $0x6a] sm:$0xff]
      %v2625 = vld [vmem:[%s2550 + $0x7a] sm:$0xff]
      %v2626 = vld [vmem:[%s2550 + $0x82] sm:$0xff]
      %v2627 = vld [vmem:[%s2550 + $0x92] sm:$0xff]
      %v2628 = vld [vmem:[%s2550 + $0x9a] sm:$0xff]
      %v2629 = vld [vmem:[%s2550 + $0xaa] sm:$0xff]
      %v2630 = vld [vmem:[%s2550 + $0xb2] sm:$0xff]
      %v2631 = vld [vmem:[%s2550 + $0xc2] sm:$0xff]
      %v2632 = vld [vmem:[%s2550 + $0xca] sm:$0xff]
      %v2633 = vld [vmem:[%s2550 + $0xda] sm:$0xff]
      %v2634 = vld [vmem:[%s2550 + $0xe2] sm:$0xff]
      %v2635 = vld [vmem:[%s2550 + $0xf2] sm:$0xff]
      %v2636 = vld [vmem:[%s2550 + $0xfa] sm:$0xff]
      %v2637 = vld [vmem:[%s2550 + $0x10a] sm:$0xff]
      %v2638 = vld [vmem:[%s2550 + $0x112] sm:$0xff]
      %v2639 = vld [vmem:[%s2550 + $0x122] sm:$0xff]
      %v2640 = vld [vmem:[%s2550 + $0x12a] sm:$0xff]
      %v2641 = vld [vmem:[%s2550 + $0x13a] sm:$0xff]
      %v2642 = vld [vmem:[%s2550 + $0x142] sm:$0xff]
      %v2643 = vld [vmem:[%s2550 + $0x152] sm:$0xff]
      %v2644 = vld [vmem:[%s2550 + $0x15a] sm:$0xff]
      %v2645 = vld [vmem:[%s2550 + $0x16a] sm:$0xff]
      %v2646 = vld [vmem:[%s2550 + $0x172] sm:$0xff]
      %2679 = vrot.lane.b32.xlu0 %v2390, 8
      %v2680 = vpop.permute.xlu0 %2679
      %2681 = vrot.lane.b32.xlu0 %v2391, 8
      %v2682 = vpop.permute.xlu0 %2681
      %2683 = vrot.lane.b32.xlu0 %v2392, 8
      %v2684 = vpop.permute.xlu0 %2683
      %2685 = vrot.lane.b32.xlu0 %v2393, 8
      %v2686 = vpop.permute.xlu0 %2685
      %2687 = vrot.lane.b32.xlu0 %v2394, 8
      %v2688 = vpop.permute.xlu0 %2687
      %2689 = vrot.lane.b32.xlu0 %v2395, 8
      %v2690 = vpop.permute.xlu0 %2689
      %2691 = vrot.lane.b32.xlu0 %v2396, 8
      %v2692 = vpop.permute.xlu0 %2691
      %2693 = vrot.lane.b32.xlu0 %v2397, 8
      %v2694 = vpop.permute.xlu0 %2693
      %2695 = vrot.lane.b32.xlu0 %v2398, 8
      %v2696 = vpop.permute.xlu0 %2695
      %2697 = vrot.lane.b32.xlu0 %v2399, 8
      %v2698 = vpop.permute.xlu0 %2697
      %2699 = vrot.lane.b32.xlu0 %v2400, 8
      %v2700 = vpop.permute.xlu0 %2699
      %2701 = vrot.lane.b32.xlu0 %v2401, 8
      %v2702 = vpop.permute.xlu0 %2701
      %2703 = vrot.lane.b32.xlu0 %v2402, 8
      %v2704 = vpop.permute.xlu0 %2703
      %2705 = vrot.lane.b32.xlu0 %v2403, 8
      %v2706 = vpop.permute.xlu0 %2705
      %2707 = vrot.lane.b32.xlu0 %v2404, 8
      %v2708 = vpop.permute.xlu0 %2707
      %2709 = vrot.lane.b32.xlu0 %v2405, 8
      %v2710 = vpop.permute.xlu0 %2709
      %2711 = vrot.lane.b32.xlu0 %v2406, 8
      %v2712 = vpop.permute.xlu0 %2711
      %2713 = vrot.lane.b32.xlu0 %v2407, 8
      %v2714 = vpop.permute.xlu0 %2713
      %2715 = vrot.lane.b32.xlu0 %v2408, 8
      %v2716 = vpop.permute.xlu0 %2715
      %2717 = vrot.lane.b32.xlu0 %v2409, 8
      %v2718 = vpop.permute.xlu0 %2717
      %2719 = vrot.lane.b32.xlu0 %v2410, 8
      %v2720 = vpop.permute.xlu0 %2719
      %2721 = vrot.lane.b32.xlu0 %v2411, 8
      %v2722 = vpop.permute.xlu0 %2721
      %2723 = vrot.lane.b32.xlu0 %v2412, 8
      %v2724 = vpop.permute.xlu0 %2723
      %2725 = vrot.lane.b32.xlu0 %v2413, 8
      %v2726 = vpop.permute.xlu0 %2725
      %2727 = vrot.lane.b32.xlu0 %v2414, 8
      %v2728 = vpop.permute.xlu0 %2727
      %2729 = vrot.lane.b32.xlu0 %v2415, 8
      %v2730 = vpop.permute.xlu0 %2729
      %2731 = vrot.lane.b32.xlu0 %v2416, 8
      %v2732 = vpop.permute.xlu0 %2731
      %2733 = vrot.lane.b32.xlu0 %v2417, 8
      %v2734 = vpop.permute.xlu0 %2733
      %2735 = vrot.lane.b32.xlu0 %v2418, 8
      %v2736 = vpop.permute.xlu0 %2735
      %2737 = vrot.lane.b32.xlu0 %v2419, 8
      %v2738 = vpop.permute.xlu0 %2737
      %2739 = vrot.lane.b32.xlu0 %v2420, 8
      %v2740 = vpop.permute.xlu0 %2739
      %2741 = vrot.lane.b32.xlu0 %v2421, 8
      %v2742 = vpop.permute.xlu0 %2741
      %2807 = vrot.lane.b32.xlu0 %v2422, 16
      %v2808 = vpop.permute.xlu0 %2807
      %2809 = vrot.lane.b32.xlu0 %v2423, 16
      %v2810 = vpop.permute.xlu0 %2809
      %2811 = vrot.lane.b32.xlu0 %v2424, 16
      %v2812 = vpop.permute.xlu0 %2811
      %2813 = vrot.lane.b32.xlu0 %v2425, 16
      %v2814 = vpop.permute.xlu0 %2813
      %2815 = vrot.lane.b32.xlu0 %v2426, 16
      %v2816 = vpop.permute.xlu0 %2815
      %2817 = vrot.lane.b32.xlu0 %v2427, 16
      %v2818 = vpop.permute.xlu0 %2817
      %2819 = vrot.lane.b32.xlu0 %v2428, 16
      %v2820 = vpop.permute.xlu0 %2819
      %2821 = vrot.lane.b32.xlu0 %v2429, 16
      %v2822 = vpop.permute.xlu0 %2821
      %2823 = vrot.lane.b32.xlu0 %v2430, 16
      %v2824 = vpop.permute.xlu0 %2823
      %2825 = vrot.lane.b32.xlu0 %v2431, 16
      %v2826 = vpop.permute.xlu0 %2825
      %2827 = vrot.lane.b32.xlu0 %v2432, 16
      %v2828 = vpop.permute.xlu0 %2827
      %2829 = vrot.lane.b32.xlu0 %v2433, 16
      %v2830 = vpop.permute.xlu0 %2829
      %2831 = vrot.lane.b32.xlu0 %v2434, 16
      %v2832 = vpop.permute.xlu0 %2831
      %2833 = vrot.lane.b32.xlu0 %v2435, 16
      %v2834 = vpop.permute.xlu0 %2833
      %2835 = vrot.lane.b32.xlu0 %v2436, 16
      %v2836 = vpop.permute.xlu0 %2835
      %2837 = vrot.lane.b32.xlu0 %v2437, 16
      %v2838 = vpop.permute.xlu0 %2837
      %2839 = vrot.lane.b32.xlu0 %v2438, 16
      %v2840 = vpop.permute.xlu0 %2839
      %2841 = vrot.lane.b32.xlu0 %v2439, 16
      %v2842 = vpop.permute.xlu0 %2841
      %2843 = vrot.lane.b32.xlu0 %v2440, 16
      %v2844 = vpop.permute.xlu0 %2843
      %2845 = vrot.lane.b32.xlu0 %v2441, 16
      %v2846 = vpop.permute.xlu0 %2845
      %2847 = vrot.lane.b32.xlu0 %v2442, 16
      %v2848 = vpop.permute.xlu0 %2847
      %2849 = vrot.lane.b32.xlu0 %v2443, 16
      %v2850 = vpop.permute.xlu0 %2849
      %2851 = vrot.lane.b32.xlu0 %v2444, 16
      %v2852 = vpop.permute.xlu0 %2851
      %2853 = vrot.lane.b32.xlu0 %v2445, 16
      %v2854 = vpop.permute.xlu0 %2853
      %2855 = vrot.lane.b32.xlu0 %v2446, 16
      %v2856 = vpop.permute.xlu0 %2855
      %2857 = vrot.lane.b32.xlu0 %v2447, 16
      %v2858 = vpop.permute.xlu0 %2857
      %2859 = vrot.lane.b32.xlu0 %v2448, 16
      %v2860 = vpop.permute.xlu0 %2859
      %2861 = vrot.lane.b32.xlu0 %v2449, 16
      %v2862 = vpop.permute.xlu0 %2861
      %2863 = vrot.lane.b32.xlu0 %v2450, 16
      %v2864 = vpop.permute.xlu0 %2863
      %2865 = vrot.lane.b32.xlu0 %v2451, 16
      %v2866 = vpop.permute.xlu0 %2865
      %2867 = vrot.lane.b32.xlu0 %v2452, 16
      %v2868 = vpop.permute.xlu0 %2867
      %2869 = vrot.lane.b32.xlu0 %v2453, 16
      %v2870 = vpop.permute.xlu0 %2869
      %2935 = vrot.lane.b32.xlu0 %v2454, 24
      %v2936 = vpop.permute.xlu0 %2935
      %2937 = vrot.lane.b32.xlu0 %v2455, 24
      %v2938 = vpop.permute.xlu0 %2937
      %2939 = vrot.lane.b32.xlu0 %v2456, 24
      %v2940 = vpop.permute.xlu0 %2939
      %2941 = vrot.lane.b32.xlu0 %v2457, 24
      %v2942 = vpop.permute.xlu0 %2941
      %2943 = vrot.lane.b32.xlu0 %v2458, 24
      %v2944 = vpop.permute.xlu0 %2943
      %2945 = vrot.lane.b32.xlu0 %v2459, 24
      %v2946 = vpop.permute.xlu0 %2945
      %2947 = vrot.lane.b32.xlu0 %v2460, 24
      %v2948 = vpop.permute.xlu0 %2947
      %2949 = vrot.lane.b32.xlu0 %v2461, 24
      %v2950 = vpop.permute.xlu0 %2949
      %2951 = vrot.lane.b32.xlu0 %v2462, 24
      %v2952 = vpop.permute.xlu0 %2951
      %2953 = vrot.lane.b32.xlu0 %v2463, 24
      %v2954 = vpop.permute.xlu0 %2953
      %2955 = vrot.lane.b32.xlu0 %v2464, 24
      %v2956 = vpop.permute.xlu0 %2955
      %2957 = vrot.lane.b32.xlu0 %v2465, 24
      %v2958 = vpop.permute.xlu0 %2957
      %2959 = vrot.lane.b32.xlu0 %v2466, 24
      %v2960 = vpop.permute.xlu0 %2959
      %2961 = vrot.lane.b32.xlu0 %v2467, 24
      %v2962 = vpop.permute.xlu0 %2961
      %2963 = vrot.lane.b32.xlu0 %v2468, 24
      %v2964 = vpop.permute.xlu0 %2963
      %2965 = vrot.lane.b32.xlu0 %v2469, 24
      %v2966 = vpop.permute.xlu0 %2965
      %2967 = vrot.lane.b32.xlu0 %v2470, 24
      %v2968 = vpop.permute.xlu0 %2967
      %2969 = vrot.lane.b32.xlu0 %v2471, 24
      %v2970 = vpop.permute.xlu0 %2969
      %2971 = vrot.lane.b32.xlu0 %v2472, 24
      %v2972 = vpop.permute.xlu0 %2971
      %2973 = vrot.lane.b32.xlu0 %v2473, 24
      %v2974 = vpop.permute.xlu0 %2973
      %2975 = vrot.lane.b32.xlu0 %v2474, 24
      %v2976 = vpop.permute.xlu0 %2975
      %2977 = vrot.lane.b32.xlu0 %v2475, 24
      %v2978 = vpop.permute.xlu0 %2977
      %2979 = vrot.lane.b32.xlu0 %v2476, 24
      %v2980 = vpop.permute.xlu0 %2979
      %2981 = vrot.lane.b32.xlu0 %v2477, 24
      %v2982 = vpop.permute.xlu0 %2981
      %2983 = vrot.lane.b32.xlu0 %v2478, 24
      %v2984 = vpop.permute.xlu0 %2983
      %2985 = vrot.lane.b32.xlu0 %v2479, 24
      %v2986 = vpop.permute.xlu0 %2985
      %2987 = vrot.lane.b32.xlu0 %v2480, 24
      %v2988 = vpop.permute.xlu0 %2987
      %2989 = vrot.lane.b32.xlu0 %v2481, 24
      %v2990 = vpop.permute.xlu0 %2989
      %2991 = vrot.lane.b32.xlu0 %v2482, 24
      %v2992 = vpop.permute.xlu0 %2991
      %2993 = vrot.lane.b32.xlu0 %v2483, 24
      %v2994 = vpop.permute.xlu0 %2993
      %2995 = vrot.lane.b32.xlu0 %v2484, 24
      %v2996 = vpop.permute.xlu0 %2995
      %2997 = vrot.lane.b32.xlu0 %v2485, 24
      %v2998 = vpop.permute.xlu0 %2997
      %3063 = vrot.lane.b32.xlu0 %v2486, 32
      %v3064 = vpop.permute.xlu0 %3063
      %3065 = vrot.lane.b32.xlu0 %v2487, 32
      %v3066 = vpop.permute.xlu0 %3065
      %3067 = vrot.lane.b32.xlu0 %v2488, 32
      %v3068 = vpop.permute.xlu0 %3067
      %3069 = vrot.lane.b32.xlu0 %v2489, 32
      %v3070 = vpop.permute.xlu0 %3069
      %3071 = vrot.lane.b32.xlu0 %v2490, 32
      %v3072 = vpop.permute.xlu0 %3071
      %3073 = vrot.lane.b32.xlu0 %v2491, 32
      %v3074 = vpop.permute.xlu0 %3073
      %3075 = vrot.lane.b32.xlu0 %v2492, 32
      %v3076 = vpop.permute.xlu0 %3075
      %3077 = vrot.lane.b32.xlu0 %v2493, 32
      %v3078 = vpop.permute.xlu0 %3077
      %3079 = vrot.lane.b32.xlu0 %v2494, 32
      %v3080 = vpop.permute.xlu0 %3079
      %3081 = vrot.lane.b32.xlu0 %v2495, 32
      %v3082 = vpop.permute.xlu0 %3081
      %3083 = vrot.lane.b32.xlu0 %v2496, 32
      %v3084 = vpop.permute.xlu0 %3083
      %3085 = vrot.lane.b32.xlu0 %v2497, 32
      %v3086 = vpop.permute.xlu0 %3085
      %3087 = vrot.lane.b32.xlu0 %v2498, 32
      %v3088 = vpop.permute.xlu0 %3087
      %3089 = vrot.lane.b32.xlu0 %v2499, 32
      %v3090 = vpop.permute.xlu0 %3089
      %3091 = vrot.lane.b32.xlu0 %v2500, 32
      %v3092 = vpop.permute.xlu0 %3091
      %3093 = vrot.lane.b32.xlu0 %v2501, 32
      %v3094 = vpop.permute.xlu0 %3093
      %3095 = vrot.lane.b32.xlu0 %v2502, 32
      %v3096 = vpop.permute.xlu0 %3095
      %3097 = vrot.lane.b32.xlu0 %v2503, 32
      %v3098 = vpop.permute.xlu0 %3097
      %3099 = vrot.lane.b32.xlu0 %v2504, 32
      %v3100 = vpop.permute.xlu0 %3099
      %3101 = vrot.lane.b32.xlu0 %v2505, 32
      %v3102 = vpop.permute.xlu0 %3101
      %3103 = vrot.lane.b32.xlu0 %v2506, 32
      %v3104 = vpop.permute.xlu0 %3103
      %3105 = vrot.lane.b32.xlu0 %v2507, 32
      %v3106 = vpop.permute.xlu0 %3105
      %3107 = vrot.lane.b32.xlu0 %v2508, 32
      %v3108 = vpop.permute.xlu0 %3107
      %3109 = vrot.lane.b32.xlu0 %v2509, 32
      %v3110 = vpop.permute.xlu0 %3109
      %3111 = vrot.lane.b32.xlu0 %v2510, 32
      %v3112 = vpop.permute.xlu0 %3111
      %3113 = vrot.lane.b32.xlu0 %v2511, 32
      %v3114 = vpop.permute.xlu0 %3113
      %3115 = vrot.lane.b32.xlu0 %v2512, 32
      %v3116 = vpop.permute.xlu0 %3115
      %3117 = vrot.lane.b32.xlu0 %v2513, 32
      %v3118 = vpop.permute.xlu0 %3117
      %3119 = vrot.lane.b32.xlu0 %v2514, 32
      %v3120 = vpop.permute.xlu0 %3119
      %3121 = vrot.lane.b32.xlu0 %v2515, 32
      %v3122 = vpop.permute.xlu0 %3121
      %3123 = vrot.lane.b32.xlu0 %v2516, 32
      %v3124 = vpop.permute.xlu0 %3123
      %3125 = vrot.lane.b32.xlu0 %v2517, 32
      %v3126 = vpop.permute.xlu0 %3125
      %3191 = vrot.lane.b32.xlu0 %v2518, 40
      %v3192 = vpop.permute.xlu0 %3191
      %3193 = vrot.lane.b32.xlu0 %v2519, 40
      %v3194 = vpop.permute.xlu0 %3193
      %3195 = vrot.lane.b32.xlu0 %v2520, 40
      %v3196 = vpop.permute.xlu0 %3195
      %3197 = vrot.lane.b32.xlu0 %v2521, 40
      %v3198 = vpop.permute.xlu0 %3197
      %3199 = vrot.lane.b32.xlu0 %v2522, 40
      %v3200 = vpop.permute.xlu0 %3199
      %3201 = vrot.lane.b32.xlu0 %v2523, 40
      %v3202 = vpop.permute.xlu0 %3201
      %3203 = vrot.lane.b32.xlu0 %v2524, 40
      %v3204 = vpop.permute.xlu0 %3203
      %3205 = vrot.lane.b32.xlu0 %v2525, 40
      %v3206 = vpop.permute.xlu0 %3205
      %3207 = vrot.lane.b32.xlu0 %v2526, 40
      %v3208 = vpop.permute.xlu0 %3207
      %3209 = vrot.lane.b32.xlu0 %v2527, 40
      %v3210 = vpop.permute.xlu0 %3209
      %3211 = vrot.lane.b32.xlu0 %v2528, 40
      %v3212 = vpop.permute.xlu0 %3211
      %3213 = vrot.lane.b32.xlu0 %v2529, 40
      %v3214 = vpop.permute.xlu0 %3213
      %3215 = vrot.lane.b32.xlu0 %v2530, 40
      %v3216 = vpop.permute.xlu0 %3215
      %3217 = vrot.lane.b32.xlu0 %v2531, 40
      %v3218 = vpop.permute.xlu0 %3217
      %3219 = vrot.lane.b32.xlu0 %v2532, 40
      %v3220 = vpop.permute.xlu0 %3219
      %3221 = vrot.lane.b32.xlu0 %v2533, 40
      %v3222 = vpop.permute.xlu0 %3221
      %3223 = vrot.lane.b32.xlu0 %v2534, 40
      %v3224 = vpop.permute.xlu0 %3223
      %3225 = vrot.lane.b32.xlu0 %v2535, 40
      %v3226 = vpop.permute.xlu0 %3225
      %3227 = vrot.lane.b32.xlu0 %v2536, 40
      %v3228 = vpop.permute.xlu0 %3227
      %3229 = vrot.lane.b32.xlu0 %v2537, 40
      %v3230 = vpop.permute.xlu0 %3229
      %3231 = vrot.lane.b32.xlu0 %v2538, 40
      %v3232 = vpop.permute.xlu0 %3231
      %3233 = vrot.lane.b32.xlu0 %v2539, 40
      %v3234 = vpop.permute.xlu0 %3233
      %3235 = vrot.lane.b32.xlu0 %v2540, 40
      %v3236 = vpop.permute.xlu0 %3235
      %3237 = vrot.lane.b32.xlu0 %v2541, 40
      %v3238 = vpop.permute.xlu0 %3237
      %3239 = vrot.lane.b32.xlu0 %v2542, 40
      %v3240 = vpop.permute.xlu0 %3239
      %3241 = vrot.lane.b32.xlu0 %v2543, 40
      %v3242 = vpop.permute.xlu0 %3241
      %3243 = vrot.lane.b32.xlu0 %v2544, 40
      %v3244 = vpop.permute.xlu0 %3243
      %3245 = vrot.lane.b32.xlu0 %v2545, 40
      %v3246 = vpop.permute.xlu0 %3245
      %3247 = vrot.lane.b32.xlu0 %v2546, 40
      %v3248 = vpop.permute.xlu0 %3247
      %3249 = vrot.lane.b32.xlu0 %v2547, 40
      %v3250 = vpop.permute.xlu0 %3249
      %3251 = vrot.lane.b32.xlu0 %v2548, 40
      %v3252 = vpop.permute.xlu0 %3251
      %3253 = vrot.lane.b32.xlu0 %v2549, 40
      %v3254 = vpop.permute.xlu0 %3253
      %3319 = vrot.lane.b32.xlu0 %v2551, 48
      %v3320 = vpop.permute.xlu0 %3319
      %3321 = vrot.lane.b32.xlu0 %v2552, 48
      %v3322 = vpop.permute.xlu0 %3321
      %3323 = vrot.lane.b32.xlu0 %v2553, 48
      %v3324 = vpop.permute.xlu0 %3323
      %3325 = vrot.lane.b32.xlu0 %v2554, 48
      %v3326 = vpop.permute.xlu0 %3325
      %3327 = vrot.lane.b32.xlu0 %v2555, 48
      %v3328 = vpop.permute.xlu0 %3327
      %3329 = vrot.lane.b32.xlu0 %v2556, 48
      %v3330 = vpop.permute.xlu0 %3329
      %3331 = vrot.lane.b32.xlu0 %v2557, 48
      %v3332 = vpop.permute.xlu0 %3331
      %3333 = vrot.lane.b32.xlu0 %v2558, 48
      %v3334 = vpop.permute.xlu0 %3333
      %3335 = vrot.lane.b32.xlu0 %v2559, 48
      %v3336 = vpop.permute.xlu0 %3335
      %3337 = vrot.lane.b32.xlu0 %v2560, 48
      %v3338 = vpop.permute.xlu0 %3337
      %3339 = vrot.lane.b32.xlu0 %v2561, 48
      %v3340 = vpop.permute.xlu0 %3339
      %3341 = vrot.lane.b32.xlu0 %v2562, 48
      %v3342 = vpop.permute.xlu0 %3341
      %3343 = vrot.lane.b32.xlu0 %v2563, 48
      %v3344 = vpop.permute.xlu0 %3343
      %3345 = vrot.lane.b32.xlu0 %v2564, 48
      %v3346 = vpop.permute.xlu0 %3345
      %3347 = vrot.lane.b32.xlu0 %v2565, 48
      %v3348 = vpop.permute.xlu0 %3347
      %3349 = vrot.lane.b32.xlu0 %v2566, 48
      %v3350 = vpop.permute.xlu0 %3349
      %3351 = vrot.lane.b32.xlu0 %v2567, 48
      %v3352 = vpop.permute.xlu0 %3351
      %3353 = vrot.lane.b32.xlu0 %v2568, 48
      %v3354 = vpop.permute.xlu0 %3353
      %3355 = vrot.lane.b32.xlu0 %v2569, 48
      %v3356 = vpop.permute.xlu0 %3355
      %3357 = vrot.lane.b32.xlu0 %v2570, 48
      %v3358 = vpop.permute.xlu0 %3357
      %3359 = vrot.lane.b32.xlu0 %v2571, 48
      %v3360 = vpop.permute.xlu0 %3359
      %3361 = vrot.lane.b32.xlu0 %v2572, 48
      %v3362 = vpop.permute.xlu0 %3361
      %3363 = vrot.lane.b32.xlu0 %v2573, 48
      %v3364 = vpop.permute.xlu0 %3363
      %3365 = vrot.lane.b32.xlu0 %v2574, 48
      %v3366 = vpop.permute.xlu0 %3365
      %3367 = vrot.lane.b32.xlu0 %v2575, 48
      %v3368 = vpop.permute.xlu0 %3367
      %3369 = vrot.lane.b32.xlu0 %v2576, 48
      %v3370 = vpop.permute.xlu0 %3369
      %3371 = vrot.lane.b32.xlu0 %v2577, 48
      %v3372 = vpop.permute.xlu0 %3371
      %3373 = vrot.lane.b32.xlu0 %v2578, 48
      %v3374 = vpop.permute.xlu0 %3373
      %3375 = vrot.lane.b32.xlu0 %v2579, 48
      %v3376 = vpop.permute.xlu0 %3375
      %3377 = vrot.lane.b32.xlu0 %v2580, 48
      %v3378 = vpop.permute.xlu0 %3377
      %3379 = vrot.lane.b32.xlu0 %v2581, 48
      %v3380 = vpop.permute.xlu0 %3379
      %3381 = vrot.lane.b32.xlu0 %v2582, 48
      %v3382 = vpop.permute.xlu0 %3381
      %3447 = vrot.lane.b32.xlu0 %v2583, 56
      %v3448 = vpop.permute.xlu0 %3447
      %3449 = vrot.lane.b32.xlu0 %v2584, 56
      %v3450 = vpop.permute.xlu0 %3449
      %3451 = vrot.lane.b32.xlu0 %v2585, 56
      %v3452 = vpop.permute.xlu0 %3451
      %3453 = vrot.lane.b32.xlu0 %v2586, 56
      %v3454 = vpop.permute.xlu0 %3453
      %3455 = vrot.lane.b32.xlu0 %v2587, 56
      %v3456 = vpop.permute.xlu0 %3455
      %3457 = vrot.lane.b32.xlu0 %v2588, 56
      %v3458 = vpop.permute.xlu0 %3457
      %3459 = vrot.lane.b32.xlu0 %v2589, 56
      %v3460 = vpop.permute.xlu0 %3459
      %3461 = vrot.lane.b32.xlu0 %v2590, 56
      %v3462 = vpop.permute.xlu0 %3461
      %3463 = vrot.lane.b32.xlu0 %v2591, 56
      %v3464 = vpop.permute.xlu0 %3463
      %3465 = vrot.lane.b32.xlu0 %v2592, 56
      %v3466 = vpop.permute.xlu0 %3465
      %3467 = vrot.lane.b32.xlu0 %v2593, 56
      %v3468 = vpop.permute.xlu0 %3467
      %3469 = vrot.lane.b32.xlu0 %v2594, 56
      %v3470 = vpop.permute.xlu0 %3469
      %3471 = vrot.lane.b32.xlu0 %v2595, 56
      %v3472 = vpop.permute.xlu0 %3471
      %3473 = vrot.lane.b32.xlu0 %v2596, 56
      %v3474 = vpop.permute.xlu0 %3473
      %3475 = vrot.lane.b32.xlu0 %v2597, 56
      %v3476 = vpop.permute.xlu0 %3475
      %3477 = vrot.lane.b32.xlu0 %v2598, 56
      %v3478 = vpop.permute.xlu0 %3477
      %3479 = vrot.lane.b32.xlu0 %v2599, 56
      %v3480 = vpop.permute.xlu0 %3479
      %3481 = vrot.lane.b32.xlu0 %v2600, 56
      %v3482 = vpop.permute.xlu0 %3481
      %3483 = vrot.lane.b32.xlu0 %v2601, 56
      %v3484 = vpop.permute.xlu0 %3483
      %3485 = vrot.lane.b32.xlu0 %v2602, 56
      %v3486 = vpop.permute.xlu0 %3485
      %3487 = vrot.lane.b32.xlu0 %v2603, 56
      %v3488 = vpop.permute.xlu0 %3487
      %3489 = vrot.lane.b32.xlu0 %v2604, 56
      %v3490 = vpop.permute.xlu0 %3489
      %3491 = vrot.lane.b32.xlu0 %v2605, 56
      %v3492 = vpop.permute.xlu0 %3491
      %3493 = vrot.lane.b32.xlu0 %v2606, 56
      %v3494 = vpop.permute.xlu0 %3493
      %3495 = vrot.lane.b32.xlu0 %v2607, 56
      %v3496 = vpop.permute.xlu0 %3495
      %3497 = vrot.lane.b32.xlu0 %v2608, 56
      %v3498 = vpop.permute.xlu0 %3497
      %3499 = vrot.lane.b32.xlu0 %v2609, 56
      %v3500 = vpop.permute.xlu0 %3499
      %3501 = vrot.lane.b32.xlu0 %v2610, 56
      %v3502 = vpop.permute.xlu0 %3501
      %3503 = vrot.lane.b32.xlu0 %v2611, 56
      %v3504 = vpop.permute.xlu0 %3503
      %3505 = vrot.lane.b32.xlu0 %v2612, 56
      %v3506 = vpop.permute.xlu0 %3505
      %3507 = vrot.lane.b32.xlu0 %v2613, 56
      %v3508 = vpop.permute.xlu0 %3507
      %3509 = vrot.lane.b32.xlu0 %v2614, 56
      %v3510 = vpop.permute.xlu0 %3509
      %3575 = vrot.lane.b32.xlu0 %v2615, 64
      %v3576 = vpop.permute.xlu0 %3575
      %3577 = vrot.lane.b32.xlu0 %v2616, 64
      %v3578 = vpop.permute.xlu0 %3577
      %3579 = vrot.lane.b32.xlu0 %v2617, 64
      %v3580 = vpop.permute.xlu0 %3579
      %3581 = vrot.lane.b32.xlu0 %v2618, 64
      %v3582 = vpop.permute.xlu0 %3581
      %3583 = vrot.lane.b32.xlu0 %v2619, 64
      %v3584 = vpop.permute.xlu0 %3583
      %3585 = vrot.lane.b32.xlu0 %v2620, 64
      %v3586 = vpop.permute.xlu0 %3585
      %3587 = vrot.lane.b32.xlu0 %v2621, 64
      %v3588 = vpop.permute.xlu0 %3587
      %3589 = vrot.lane.b32.xlu0 %v2622, 64
      %v3590 = vpop.permute.xlu0 %3589
      %3591 = vrot.lane.b32.xlu0 %v2623, 64
      %v3592 = vpop.permute.xlu0 %3591
      %3593 = vrot.lane.b32.xlu0 %v2624, 64
      %v3594 = vpop.permute.xlu0 %3593
      %3595 = vrot.lane.b32.xlu0 %v2625, 64
      %v3596 = vpop.permute.xlu0 %3595
      %3597 = vrot.lane.b32.xlu0 %v2626, 64
      %v3598 = vpop.permute.xlu0 %3597
      %3599 = vrot.lane.b32.xlu0 %v2627, 64
      %v3600 = vpop.permute.xlu0 %3599
      %3601 = vrot.lane.b32.xlu0 %v2628, 64
      %v3602 = vpop.permute.xlu0 %3601
      %3603 = vrot.lane.b32.xlu0 %v2629, 64
      %v3604 = vpop.permute.xlu0 %3603
      %3605 = vrot.lane.b32.xlu0 %v2630, 64
      %v3606 = vpop.permute.xlu0 %3605
      %3607 = vrot.lane.b32.xlu0 %v2631, 64
      %v3608 = vpop.permute.xlu0 %3607
      %3609 = vrot.lane.b32.xlu0 %v2632, 64
      %v3610 = vpop.permute.xlu0 %3609
      %3611 = vrot.lane.b32.xlu0 %v2633, 64
      %v3612 = vpop.permute.xlu0 %3611
      %3613 = vrot.lane.b32.xlu0 %v2634, 64
      %v3614 = vpop.permute.xlu0 %3613
      %3615 = vrot.lane.b32.xlu0 %v2635, 64
      %v3616 = vpop.permute.xlu0 %3615
      %3617 = vrot.lane.b32.xlu0 %v2636, 64
      %v3618 = vpop.permute.xlu0 %3617
      %3619 = vrot.lane.b32.xlu0 %v2637, 64
      %v3620 = vpop.permute.xlu0 %3619
      %3621 = vrot.lane.b32.xlu0 %v2638, 64
      %v3622 = vpop.permute.xlu0 %3621
      %3623 = vrot.lane.b32.xlu0 %v2639, 64
      %v3624 = vpop.permute.xlu0 %3623
      %3625 = vrot.lane.b32.xlu0 %v2640, 64
      %v3626 = vpop.permute.xlu0 %3625
      %3627 = vrot.lane.b32.xlu0 %v2641, 64
      %v3628 = vpop.permute.xlu0 %3627
      %3629 = vrot.lane.b32.xlu0 %v2642, 64
      %v3630 = vpop.permute.xlu0 %3629
      %3631 = vrot.lane.b32.xlu0 %v2643, 64
      %v3632 = vpop.permute.xlu0 %3631
      %3633 = vrot.lane.b32.xlu0 %v2644, 64
      %v3634 = vpop.permute.xlu0 %3633
      %3635 = vrot.lane.b32.xlu0 %v2645, 64
      %v3636 = vpop.permute.xlu0 %3635
      %3637 = vrot.lane.b32.xlu0 %v2646, 64
      %v3638 = vpop.permute.xlu0 %3637
      %v3671 = vsel %vm257, %v2358, %v2680
      %v3672 = vsel %vm257, %v2359, %v2682
      %v3673 = vsel %vm257, %v2360, %v2684
      %v3674 = vsel %vm257, %v2361, %v2686
      %v3675 = vsel %vm257, %v2362, %v2688
      %v3676 = vsel %vm257, %v2363, %v2690
      %v3677 = vsel %vm257, %v2364, %v2692
      %v3678 = vsel %vm257, %v2365, %v2694
      %v3679 = vsel %vm257, %v2366, %v2696
      %v3680 = vsel %vm257, %v2367, %v2698
      %v3681 = vsel %vm257, %v2368, %v2700
      %v3682 = vsel %vm257, %v2369, %v2702
      %v3683 = vsel %vm257, %v2370, %v2704
      %v3684 = vsel %vm257, %v2371, %v2706
      %v3685 = vsel %vm257, %v2372, %v2708
      %v3686 = vsel %vm257, %v2373, %v2710
      %v3687 = vsel %vm257, %v2374, %v2712
      %v3688 = vsel %vm257, %v2375, %v2714
      %v3689 = vsel %vm257, %v2376, %v2716
      %v3690 = vsel %vm257, %v2377, %v2718
      %v3691 = vsel %vm257, %v2378, %v2720
      %v3692 = vsel %vm257, %v2379, %v2722
      %v3693 = vsel %vm257, %v2380, %v2724
      %v3694 = vsel %vm257, %v2381, %v2726
      %v3695 = vsel %vm257, %v2382, %v2728
      %v3696 = vsel %vm257, %v2383, %v2730
      %v3697 = vsel %vm257, %v2384, %v2732
      %v3698 = vsel %vm257, %v2385, %v2734
      %v3699 = vsel %vm257, %v2386, %v2736
      %v3700 = vsel %vm257, %v2387, %v2738
      %v3701 = vsel %vm257, %v2388, %v2740
      %v3702 = vsel %vm257, %v2389, %v2742
      %v3703 = vsel %vm1681, %v3671, %v2808
      %v3704 = vsel %vm1681, %v3672, %v2810
      %v3705 = vsel %vm1681, %v3673, %v2812
      %v3706 = vsel %vm1681, %v3674, %v2814
      %v3707 = vsel %vm1681, %v3675, %v2816
      %v3708 = vsel %vm1681, %v3676, %v2818
      %v3709 = vsel %vm1681, %v3677, %v2820
      %v3710 = vsel %vm1681, %v3678, %v2822
      %v3711 = vsel %vm1681, %v3679, %v2824
      %v3712 = vsel %vm1681, %v3680, %v2826
      %v3713 = vsel %vm1681, %v3681, %v2828
      %v3714 = vsel %vm1681, %v3682, %v2830
      %v3715 = vsel %vm1681, %v3683, %v2832
      %v3716 = vsel %vm1681, %v3684, %v2834
      %v3717 = vsel %vm1681, %v3685, %v2836
      %v3718 = vsel %vm1681, %v3686, %v2838
      %v3719 = vsel %vm1681, %v3687, %v2840
      %v3720 = vsel %vm1681, %v3688, %v2842
      %v3721 = vsel %vm1681, %v3689, %v2844
      %v3722 = vsel %vm1681, %v3690, %v2846
      %v3723 = vsel %vm1681, %v3691, %v2848
      %v3724 = vsel %vm1681, %v3692, %v2850
      %v3725 = vsel %vm1681, %v3693, %v2852
      %v3726 = vsel %vm1681, %v3694, %v2854
      %v3727 = vsel %vm1681, %v3695, %v2856
      %v3728 = vsel %vm1681, %v3696, %v2858
      %v3729 = vsel %vm1681, %v3697, %v2860
      %v3730 = vsel %vm1681, %v3698, %v2862
      %v3731 = vsel %vm1681, %v3699, %v2864
      %v3732 = vsel %vm1681, %v3700, %v2866
      %v3733 = vsel %vm1681, %v3701, %v2868
      %v3734 = vsel %vm1681, %v3702, %v2870
      %v3735 = vsel %vm1714, %v3703, %v2936
      %v3736 = vsel %vm1714, %v3704, %v2938
      %v3737 = vsel %vm1714, %v3705, %v2940
      %v3738 = vsel %vm1714, %v3706, %v2942
      %v3739 = vsel %vm1714, %v3707, %v2944
      %v3740 = vsel %vm1714, %v3708, %v2946
      %v3741 = vsel %vm1714, %v3709, %v2948
      %v3742 = vsel %vm1714, %v3710, %v2950
      %v3743 = vsel %vm1714, %v3711, %v2952
      %v3744 = vsel %vm1714, %v3712, %v2954
      %v3745 = vsel %vm1714, %v3713, %v2956
      %v3746 = vsel %vm1714, %v3714, %v2958
      %v3747 = vsel %vm1714, %v3715, %v2960
      %v3748 = vsel %vm1714, %v3716, %v2962
      %v3749 = vsel %vm1714, %v3717, %v2964
      %v3750 = vsel %vm1714, %v3718, %v2966
      %v3751 = vsel %vm1714, %v3719, %v2968
      %v3752 = vsel %vm1714, %v3720, %v2970
      %v3753 = vsel %vm1714, %v3721, %v2972
      %v3754 = vsel %vm1714, %v3722, %v2974
      %v3755 = vsel %vm1714, %v3723, %v2976
      %v3756 = vsel %vm1714, %v3724, %v2978
      %v3757 = vsel %vm1714, %v3725, %v2980
      %v3758 = vsel %vm1714, %v3726, %v2982
      %v3759 = vsel %vm1714, %v3727, %v2984
      %v3760 = vsel %vm1714, %v3728, %v2986
      %v3761 = vsel %vm1714, %v3729, %v2988
      %v3762 = vsel %vm1714, %v3730, %v2990
      %v3763 = vsel %vm1714, %v3731, %v2992
      %v3764 = vsel %vm1714, %v3732, %v2994
      %v3765 = vsel %vm1714, %v3733, %v2996
      %v3766 = vsel %vm1714, %v3734, %v2998
      %v3767 = vsel %vm1747, %v3735, %v3064
      %v3768 = vsel %vm1747, %v3736, %v3066
      %v3769 = vsel %vm1747, %v3737, %v3068
      %v3770 = vsel %vm1747, %v3738, %v3070
      %v3771 = vsel %vm1747, %v3739, %v3072
      %v3772 = vsel %vm1747, %v3740, %v3074
      %v3773 = vsel %vm1747, %v3741, %v3076
      %v3774 = vsel %vm1747, %v3742, %v3078
      %v3775 = vsel %vm1747, %v3743, %v3080
      %v3776 = vsel %vm1747, %v3744, %v3082
      %v3777 = vsel %vm1747, %v3745, %v3084
      %v3778 = vsel %vm1747, %v3746, %v3086
      %v3779 = vsel %vm1747, %v3747, %v3088
      %v3780 = vsel %vm1747, %v3748, %v3090
      %v3781 = vsel %vm1747, %v3749, %v3092
      %v3782 = vsel %vm1747, %v3750, %v3094
      %v3783 = vsel %vm1747, %v3751, %v3096
      %v3784 = vsel %vm1747, %v3752, %v3098
      %v3785 = vsel %vm1747, %v3753, %v3100
      %v3786 = vsel %vm1747, %v3754, %v3102
      %v3787 = vsel %vm1747, %v3755, %v3104
      %v3788 = vsel %vm1747, %v3756, %v3106
      %v3789 = vsel %vm1747, %v3757, %v3108
      %v3790 = vsel %vm1747, %v3758, %v3110
      %v3791 = vsel %vm1747, %v3759, %v3112
      %v3792 = vsel %vm1747, %v3760, %v3114
      %v3793 = vsel %vm1747, %v3761, %v3116
      %v3794 = vsel %vm1747, %v3762, %v3118
      %v3795 = vsel %vm1747, %v3763, %v3120
      %v3796 = vsel %vm1747, %v3764, %v3122
      %v3797 = vsel %vm1747, %v3765, %v3124
      %v3798 = vsel %vm1747, %v3766, %v3126
      %v3799 = vsel %vm1780, %v3767, %v3192
      %v3800 = vsel %vm1780, %v3768, %v3194
      %v3801 = vsel %vm1780, %v3769, %v3196
      %v3802 = vsel %vm1780, %v3770, %v3198
      %v3803 = vsel %vm1780, %v3771, %v3200
      %v3804 = vsel %vm1780, %v3772, %v3202
      %v3805 = vsel %vm1780, %v3773, %v3204
      %v3806 = vsel %vm1780, %v3774, %v3206
      %v3807 = vsel %vm1780, %v3775, %v3208
      %v3808 = vsel %vm1780, %v3776, %v3210
      %v3809 = vsel %vm1780, %v3777, %v3212
      %v3810 = vsel %vm1780, %v3778, %v3214
      %v3811 = vsel %vm1780, %v3779, %v3216
      %v3812 = vsel %vm1780, %v3780, %v3218
      %v3813 = vsel %vm1780, %v3781, %v3220
      %v3814 = vsel %vm1780, %v3782, %v3222
      %v3815 = vsel %vm1780, %v3783, %v3224
      %v3816 = vsel %vm1780, %v3784, %v3226
      %v3817 = vsel %vm1780, %v3785, %v3228
      %v3818 = vsel %vm1780, %v3786, %v3230
      %v3819 = vsel %vm1780, %v3787, %v3232
      %v3820 = vsel %vm1780, %v3788, %v3234
      %v3821 = vsel %vm1780, %v3789, %v3236
      %v3822 = vsel %vm1780, %v3790, %v3238
      %v3823 = vsel %vm1780, %v3791, %v3240
      %v3824 = vsel %vm1780, %v3792, %v3242
      %v3825 = vsel %vm1780, %v3793, %v3244
      %v3826 = vsel %vm1780, %v3794, %v3246
      %v3827 = vsel %vm1780, %v3795, %v3248
      %v3828 = vsel %vm1780, %v3796, %v3250
      %v3829 = vsel %vm1780, %v3797, %v3252
      %v3830 = vsel %vm1780, %v3798, %v3254
      %v3831 = vsel %vm1813, %v3799, %v3320
      %v3832 = vsel %vm1813, %v3800, %v3322
      %v3833 = vsel %vm1813, %v3801, %v3324
      %v3834 = vsel %vm1813, %v3802, %v3326
      %v3835 = vsel %vm1813, %v3803, %v3328
      %v3836 = vsel %vm1813, %v3804, %v3330
      %v3837 = vsel %vm1813, %v3805, %v3332
      %v3838 = vsel %vm1813, %v3806, %v3334
      %v3839 = vsel %vm1813, %v3807, %v3336
      %v3840 = vsel %vm1813, %v3808, %v3338
      %v3841 = vsel %vm1813, %v3809, %v3340
      %v3842 = vsel %vm1813, %v3810, %v3342
      %v3843 = vsel %vm1813, %v3811, %v3344
      %v3844 = vsel %vm1813, %v3812, %v3346
      %v3845 = vsel %vm1813, %v3813, %v3348
      %v3846 = vsel %vm1813, %v3814, %v3350
      %v3847 = vsel %vm1813, %v3815, %v3352
      %v3848 = vsel %vm1813, %v3816, %v3354
      %v3849 = vsel %vm1813, %v3817, %v3356
      %v3850 = vsel %vm1813, %v3818, %v3358
      %v3851 = vsel %vm1813, %v3819, %v3360
      %v3852 = vsel %vm1813, %v3820, %v3362
      %v3853 = vsel %vm1813, %v3821, %v3364
      %v3854 = vsel %vm1813, %v3822, %v3366
      %v3855 = vsel %vm1813, %v3823, %v3368
      %v3856 = vsel %vm1813, %v3824, %v3370
      %v3857 = vsel %vm1813, %v3825, %v3372
      %v3858 = vsel %vm1813, %v3826, %v3374
      %v3859 = vsel %vm1813, %v3827, %v3376
      %v3860 = vsel %vm1813, %v3828, %v3378
      %v3861 = vsel %vm1813, %v3829, %v3380
      %v3862 = vsel %vm1813, %v3830, %v3382
      %v3863 = vsel %vm1846, %v3831, %v3448
      %v3864 = vsel %vm1846, %v3832, %v3450
      %v3865 = vsel %vm1846, %v3833, %v3452
      %v3866 = vsel %vm1846, %v3834, %v3454
      %v3867 = vsel %vm1846, %v3835, %v3456
      %v3868 = vsel %vm1846, %v3836, %v3458
      %v3869 = vsel %vm1846, %v3837, %v3460
      %v3870 = vsel %vm1846, %v3838, %v3462
      %v3871 = vsel %vm1846, %v3839, %v3464
      %v3872 = vsel %vm1846, %v3840, %v3466
      %v3873 = vsel %vm1846, %v3841, %v3468
      %v3874 = vsel %vm1846, %v3842, %v3470
      %v3875 = vsel %vm1846, %v3843, %v3472
      %v3876 = vsel %vm1846, %v3844, %v3474
      %v3877 = vsel %vm1846, %v3845, %v3476
      %v3878 = vsel %vm1846, %v3846, %v3478
      %v3879 = vsel %vm1846, %v3847, %v3480
      %v3880 = vsel %vm1846, %v3848, %v3482
      %v3881 = vsel %vm1846, %v3849, %v3484
      %v3882 = vsel %vm1846, %v3850, %v3486
      %v3883 = vsel %vm1846, %v3851, %v3488
      %v3884 = vsel %vm1846, %v3852, %v3490
      %v3885 = vsel %vm1846, %v3853, %v3492
      %v3886 = vsel %vm1846, %v3854, %v3494
      %v3887 = vsel %vm1846, %v3855, %v3496
      %v3888 = vsel %vm1846, %v3856, %v3498
      %v3889 = vsel %vm1846, %v3857, %v3500
      %v3890 = vsel %vm1846, %v3858, %v3502
      %v3891 = vsel %vm1846, %v3859, %v3504
      %v3892 = vsel %vm1846, %v3860, %v3506
      %v3893 = vsel %vm1846, %v3861, %v3508
      %v3894 = vsel %vm1846, %v3862, %v3510
      %v3895 = vsel %vm1879, %v3863, %v3576
      %v3896 = vsel %vm1879, %v3864, %v3578
      %v3897 = vsel %vm1879, %v3865, %v3580
      %v3898 = vsel %vm1879, %v3866, %v3582
      %v3899 = vsel %vm1879, %v3867, %v3584
      %v3900 = vsel %vm1879, %v3868, %v3586
      %v3901 = vsel %vm1879, %v3869, %v3588
      %v3902 = vsel %vm1879, %v3870, %v3590
      %v3903 = vsel %vm1879, %v3871, %v3592
      %v3904 = vsel %vm1879, %v3872, %v3594
      %v3905 = vsel %vm1879, %v3873, %v3596
      %v3906 = vsel %vm1879, %v3874, %v3598
      %v3907 = vsel %vm1879, %v3875, %v3600
      %v3908 = vsel %vm1879, %v3876, %v3602
      %v3909 = vsel %vm1879, %v3877, %v3604
      %v3910 = vsel %vm1879, %v3878, %v3606
      %v3911 = vsel %vm1879, %v3879, %v3608
      %v3912 = vsel %vm1879, %v3880, %v3610
      %v3913 = vsel %vm1879, %v3881, %v3612
      %v3914 = vsel %vm1879, %v3882, %v3614
      %v3915 = vsel %vm1879, %v3883, %v3616
      %v3916 = vsel %vm1879, %v3884, %v3618
      %v3917 = vsel %vm1879, %v3885, %v3620
      %v3918 = vsel %vm1879, %v3886, %v3622
      %v3919 = vsel %vm1879, %v3887, %v3624
      %v3920 = vsel %vm1879, %v3888, %v3626
      %v3921 = vsel %vm1879, %v3889, %v3628
      %v3922 = vsel %vm1879, %v3890, %v3630
      %v3923 = vsel %vm1879, %v3891, %v3632
      %v3924 = vsel %vm1879, %v3892, %v3634
      %v3925 = vsel %vm1879, %v3893, %v3636
      %v3926 = vsel %vm1879, %v3894, %v3638
      %v3927 = vld [vmem:[%s3] sm:$0xff]
      %v3928 = vld [vmem:[%s3 + $0x8] sm:$0xff]
      %v3929 = vld [vmem:[%s3 + $0x10] sm:$0xff]
      %v3930 = vld [vmem:[%s3 + $0x18] sm:$0xff]
      %v3931 = vld [vmem:[%s3 + $0x20] sm:$0xff]
      %v3932 = vld [vmem:[%s3 + $0x28] sm:$0xff]
      %v3933 = vld [vmem:[%s3 + $0x30] sm:$0xff]
      %v3934 = vld [vmem:[%s3 + $0x38] sm:$0xff]
      %v3935 = vld [vmem:[%s3 + $0x40] sm:$0xff]
      %v3936 = vld [vmem:[%s4] sm:$0x1]
      %v3938 = vlaneseq
      %v3939 = vshrl.u32 %v3938, 7
      %v3940 = vsub.s32 0, %v3939
      %v3941 = vrot.slane %v3936, %v3940
      %v3944 = vsel %vm1928, %v3895, 0
      %v3947 = vsel %vm1928, %v3896, 0
      %v3950 = vsel %vm1928, %v3897, 0
      %v3953 = vsel %vm1928, %v3898, 0
      %v3956 = vsel %vm1928, %v3899, 0
      %v3959 = vsel %vm1928, %v3900, 0
      %v3962 = vsel %vm1928, %v3901, 0
      %v3965 = vsel %vm1928, %v3902, 0
      %v3968 = vsel %vm1928, %v3903, 0
      %v3971 = vsel %vm1928, %v3904, 0
      %v3974 = vsel %vm1928, %v3905, 0
      %v3977 = vsel %vm1928, %v3906, 0
      %v3980 = vsel %vm1928, %v3907, 0
      %v3983 = vsel %vm1928, %v3908, 0
      %v3986 = vsel %vm1928, %v3909, 0
      %v3989 = vsel %vm1928, %v3910, 0
      %v3992 = vsel %vm1928, %v3911, 0
      %v3995 = vsel %vm1928, %v3912, 0
      %v3998 = vsel %vm1928, %v3913, 0
      %v4001 = vsel %vm1928, %v3914, 0
      %v4004 = vsel %vm1928, %v3915, 0
      %v4007 = vsel %vm1928, %v3916, 0
      %v4010 = vsel %vm1928, %v3917, 0
      %v4013 = vsel %vm1928, %v3918, 0
      %v4016 = vsel %vm1928, %v3919, 0
      %v4019 = vsel %vm1928, %v3920, 0
      %v4022 = vsel %vm1928, %v3921, 0
      %v4025 = vsel %vm1928, %v3922, 0
      %v4028 = vsel %vm1928, %v3923, 0
      %v4031 = vsel %vm1928, %v3924, 0
      %v4034 = vsel %vm1928, %v3925, 0
      %v4037 = vsel %vm1928, %v3926, 0
      %4039 = vmatprep.subr.mxu0 0.0
      %4040 = vmatpush1.msra.mxu0 0.0
      %4041 = vmatprep.subr.mxu0 0.0
      %4042 = vmatpush1.msra.mxu0 0.0
      %4043 = vmatprep.subr.mxu0 0.0
      %4044 = vmatpush1.msra.mxu0 0.0
      %4045 = vmatprep.subr.mxu0 0.0
      %4046 = vmatpush1.msra.mxu0 0.0
      %4047 = vmatprep.subr.mxu0 0.0
      %4048 = vmatpush1.msra.mxu0 0.0
      %4049 = vmatprep.subr.mxu0 0.0
      %4050 = vmatpush1.msra.mxu0 0.0
      %4051 = vmatprep.subr.mxu0 0.0
      %4052 = vmatpush1.msra.mxu0 0.0
      %4053 = vmatprep.subr.mxu0 0.0
      %4054 = vmatpush1.msra.mxu0 %v3935
      %4055 = vmatprep.subr.mxu0 0.0
      %4056 = vmatpush1.msra.mxu0 %v3934
      %4057 = vmatprep.subr.mxu0 0.0
      %4058 = vmatpush1.msra.mxu0 %v3933
      %4059 = vmatprep.subr.mxu0 0.0
      %4060 = vmatpush1.msra.mxu0 %v3932
      %4061 = vmatprep.subr.mxu0 0.0
      %4062 = vmatpush1.msra.mxu0 %v3931
      %4063 = vmatprep.subr.mxu0 0.0
      %4064 = vmatpush1.msra.mxu0 %v3930
      %4065 = vmatprep.subr.mxu0 0.0
      %4066 = vmatpush1.msra.mxu0 %v3929
      %4067 = vmatprep.subr.mxu0 0.0
      %4068 = vmatpush1.msra.mxu0 %v3928
      %4069 = vmatprep.subr.mxu0 0.0
      %4070 = vmatpush1.msra.mxu0 %v3927
      %4071 = vmatprep.subr.mxu0 0.0
      %4072 = vmatpush2.msra.mxu0 0.0
      %4073 = vmatprep.subr.mxu0 0.0
      %4074 = vmatpush2.msra.mxu0 0.0
      %4075 = vmatprep.subr.mxu0 0.0
      %4076 = vmatpush2.msra.mxu0 0.0
      %4077 = vmatprep.subr.mxu0 0.0
      %4078 = vmatpush2.msra.mxu0 0.0
      %4079 = vmatprep.subr.mxu0 0.0
      %4080 = vmatpush2.msra.mxu0 0.0
      %4081 = vmatprep.subr.mxu0 0.0
      %4082 = vmatpush2.msra.mxu0 0.0
      %4083 = vmatprep.subr.mxu0 0.0
      %4084 = vmatpush2.msra.mxu0 0.0
      %4085 = vmatprep.subr.mxu0 0.0
      %4086 = vmatpush2.msra.mxu0 0.0
      %4087 = vmatprep.subr.mxu0 0.0
      %4088 = vmatpush2.msra.mxu0 0.0
      %4089 = vmatprep.subr.mxu0 0.0
      %4090 = vmatpush2.msra.mxu0 0.0
      %4091 = vmatprep.subr.mxu0 0.0
      %4092 = vmatpush2.msra.mxu0 0.0
      %4093 = vmatprep.subr.mxu0 0.0
      %4094 = vmatpush2.msra.mxu0 0.0
      %4095 = vmatprep.subr.mxu0 0.0
      %4096 = vmatpush2.msra.mxu0 0.0
      %4097 = vmatprep.subr.mxu0 0.0
      %4098 = vmatpush2.msra.mxu0 0.0
      %4099 = vmatprep.subr.mxu0 0.0
      %4100 = vmatpush2.msra.mxu0 0.0
      %4101 = vmatprep.subr.mxu0 0.0
      %4102 = vmatpush2.msra.mxu0 0.0
      %4103 = vmatprep.mubr.f32.mxu0 0.0
      %4104 = vmatmul.mubr.f32.gmra.mxu0 %v3944
      %v4105 = vpop.f32.mrf.mxu0
      %v4106 = vadd.f32 %v3941, %v4105
      %v4107 = vpop.f32.mrf.mxu0
      %4108 = vmatprep.mubr.f32.mxu0 0.0
      %4109 = vmatmul.mubr.f32.gmra.mxu0 %v3947
      %v4110 = vpop.f32.mrf.mxu0
      %v4111 = vadd.f32 %v3941, %v4110
      %v4112 = vpop.f32.mrf.mxu0
      %4113 = vmatprep.mubr.f32.mxu0 0.0
      %4114 = vmatmul.mubr.f32.gmra.mxu0 %v3950
      %v4115 = vpop.f32.mrf.mxu0
      %v4116 = vadd.f32 %v3941, %v4115
      %v4117 = vpop.f32.mrf.mxu0
      %4118 = vmatprep.mubr.f32.mxu0 0.0
      %4119 = vmatmul.mubr.f32.gmra.mxu0 %v3953
      %v4120 = vpop.f32.mrf.mxu0
      %v4121 = vadd.f32 %v3941, %v4120
      %v4122 = vpop.f32.mrf.mxu0
      %4123 = vmatprep.mubr.f32.mxu0 0.0
      %4124 = vmatmul.mubr.f32.gmra.mxu0 %v3956
      %v4125 = vpop.f32.mrf.mxu0
      %v4126 = vadd.f32 %v3941, %v4125
      %v4127 = vpop.f32.mrf.mxu0
      %4128 = vmatprep.mubr.f32.mxu0 0.0
      %4129 = vmatmul.mubr.f32.gmra.mxu0 %v3959
      %v4130 = vpop.f32.mrf.mxu0
      %v4131 = vadd.f32 %v3941, %v4130
      %v4132 = vpop.f32.mrf.mxu0
      %4133 = vmatprep.mubr.f32.mxu0 0.0
      %4134 = vmatmul.mubr.f32.gmra.mxu0 %v3962
      %v4135 = vpop.f32.mrf.mxu0
      %v4136 = vadd.f32 %v3941, %v4135
      %v4137 = vpop.f32.mrf.mxu0
      %4138 = vmatprep.mubr.f32.mxu0 0.0
      %4139 = vmatmul.mubr.f32.gmra.mxu0 %v3965
      %v4140 = vpop.f32.mrf.mxu0
      %v4141 = vadd.f32 %v3941, %v4140
      %v4142 = vpop.f32.mrf.mxu0
      %4143 = vmatprep.mubr.f32.mxu0 0.0
      %4144 = vmatmul.mubr.f32.gmra.mxu0 %v3968
      %v4145 = vpop.f32.mrf.mxu0
      %v4146 = vadd.f32 %v3941, %v4145
      %v4147 = vpop.f32.mrf.mxu0
      %4148 = vmatprep.mubr.f32.mxu0 0.0
      %4149 = vmatmul.mubr.f32.gmra.mxu0 %v3971
      %v4150 = vpop.f32.mrf.mxu0
      %v4151 = vadd.f32 %v3941, %v4150
      %v4152 = vpop.f32.mrf.mxu0
      %4153 = vmatprep.mubr.f32.mxu0 0.0
      %4154 = vmatmul.mubr.f32.gmra.mxu0 %v3974
      %v4155 = vpop.f32.mrf.mxu0
      %v4156 = vadd.f32 %v3941, %v4155
      %v4157 = vpop.f32.mrf.mxu0
      %4158 = vmatprep.mubr.f32.mxu0 0.0
      %4159 = vmatmul.mubr.f32.gmra.mxu0 %v3977
      %v4160 = vpop.f32.mrf.mxu0
      %v4161 = vadd.f32 %v3941, %v4160
      %v4162 = vpop.f32.mrf.mxu0
      %4163 = vmatprep.mubr.f32.mxu0 0.0
      %4164 = vmatmul.mubr.f32.gmra.mxu0 %v3980
      %v4165 = vpop.f32.mrf.mxu0
      %v4166 = vadd.f32 %v3941, %v4165
      %v4167 = vpop.f32.mrf.mxu0
      %4168 = vmatprep.mubr.f32.mxu0 0.0
      %4169 = vmatmul.mubr.f32.gmra.mxu0 %v3983
      %v4170 = vpop.f32.mrf.mxu0
      %v4171 = vadd.f32 %v3941, %v4170
      %v4172 = vpop.f32.mrf.mxu0
      %4173 = vmatprep.mubr.f32.mxu0 0.0
      %4174 = vmatmul.mubr.f32.gmra.mxu0 %v3986
      %v4175 = vpop.f32.mrf.mxu0
      %v4176 = vadd.f32 %v3941, %v4175
      %v4177 = vpop.f32.mrf.mxu0
      %4178 = vmatprep.mubr.f32.mxu0 0.0
      %4179 = vmatmul.mubr.f32.gmra.mxu0 %v3989
      %v4180 = vpop.f32.mrf.mxu0
      %v4181 = vadd.f32 %v3941, %v4180
      %v4182 = vpop.f32.mrf.mxu0
      %4183 = vmatprep.mubr.f32.mxu0 0.0
      %4184 = vmatmul.mubr.f32.gmra.mxu0 %v3992
      %v4185 = vpop.f32.mrf.mxu0
      %v4186 = vadd.f32 %v3941, %v4185
      %v4187 = vpop.f32.mrf.mxu0
      %4188 = vmatprep.mubr.f32.mxu0 0.0
      %4189 = vmatmul.mubr.f32.gmra.mxu0 %v3995
      %v4190 = vpop.f32.mrf.mxu0
      %v4191 = vadd.f32 %v3941, %v4190
      %v4192 = vpop.f32.mrf.mxu0
      %4193 = vmatprep.mubr.f32.mxu0 0.0
      %4194 = vmatmul.mubr.f32.gmra.mxu0 %v3998
      %v4195 = vpop.f32.mrf.mxu0
      %v4196 = vadd.f32 %v3941, %v4195
      %v4197 = vpop.f32.mrf.mxu0
      %4198 = vmatprep.mubr.f32.mxu0 0.0
      %4199 = vmatmul.mubr.f32.gmra.mxu0 %v4001
      %v4200 = vpop.f32.mrf.mxu0
      %v4201 = vadd.f32 %v3941, %v4200
      %v4202 = vpop.f32.mrf.mxu0
      %4203 = vmatprep.mubr.f32.mxu0 0.0
      %4204 = vmatmul.mubr.f32.gmra.mxu0 %v4004
      %v4205 = vpop.f32.mrf.mxu0
      %v4206 = vadd.f32 %v3941, %v4205
      %v4207 = vpop.f32.mrf.mxu0
      %4208 = vmatprep.mubr.f32.mxu0 0.0
      %4209 = vmatmul.mubr.f32.gmra.mxu0 %v4007
      %v4210 = vpop.f32.mrf.mxu0
      %v4211 = vadd.f32 %v3941, %v4210
      %v4212 = vpop.f32.mrf.mxu0
      %4213 = vmatprep.mubr.f32.mxu0 0.0
      %4214 = vmatmul.mubr.f32.gmra.mxu0 %v4010
      %v4215 = vpop.f32.mrf.mxu0
      %v4216 = vadd.f32 %v3941, %v4215
      %v4217 = vpop.f32.mrf.mxu0
      %4218 = vmatprep.mubr.f32.mxu0 0.0
      %4219 = vmatmul.mubr.f32.gmra.mxu0 %v4013
      %v4220 = vpop.f32.mrf.mxu0
      %v4221 = vadd.f32 %v3941, %v4220
      %v4222 = vpop.f32.mrf.mxu0
      %4223 = vmatprep.mubr.f32.mxu0 0.0
      %4224 = vmatmul.mubr.f32.gmra.mxu0 %v4016
      %v4225 = vpop.f32.mrf.mxu0
      %v4226 = vadd.f32 %v3941, %v4225
      %v4227 = vpop.f32.mrf.mxu0
      %4228 = vmatprep.mubr.f32.mxu0 0.0
      %4229 = vmatmul.mubr.f32.gmra.mxu0 %v4019
      %v4230 = vpop.f32.mrf.mxu0
      %v4231 = vadd.f32 %v3941, %v4230
      %v4232 = vpop.f32.mrf.mxu0
      %4233 = vmatprep.mubr.f32.mxu0 0.0
      %4234 = vmatmul.mubr.f32.gmra.mxu0 %v4022
      %v4235 = vpop.f32.mrf.mxu0
      %v4236 = vadd.f32 %v3941, %v4235
      %v4237 = vpop.f32.mrf.mxu0
      %4238 = vmatprep.mubr.f32.mxu0 0.0
      %4239 = vmatmul.mubr.f32.gmra.mxu0 %v4025
      %v4240 = vpop.f32.mrf.mxu0
      %v4241 = vadd.f32 %v3941, %v4240
      %v4242 = vpop.f32.mrf.mxu0
      %4243 = vmatprep.mubr.f32.mxu0 0.0
      %4244 = vmatmul.mubr.f32.gmra.mxu0 %v4028
      %v4245 = vpop.f32.mrf.mxu0
      %v4246 = vadd.f32 %v3941, %v4245
      %v4247 = vpop.f32.mrf.mxu0
      %4248 = vmatprep.mubr.f32.mxu0 0.0
      %4249 = vmatmul.mubr.f32.gmra.mxu0 %v4031
      %v4250 = vpop.f32.mrf.mxu0
      %v4251 = vadd.f32 %v3941, %v4250
      %v4252 = vpop.f32.mrf.mxu0
      %4253 = vmatprep.mubr.f32.mxu0 0.0
      %4254 = vmatmul.mubr.f32.gmra.mxu0 %v4034
      %v4255 = vpop.f32.mrf.mxu0
      %v4256 = vadd.f32 %v3941, %v4255
      %v4257 = vpop.f32.mrf.mxu0
      %4258 = vmatprep.mubr.f32.mxu0 0.0
      %4259 = vmatmul.mubr.f32.gmra.mxu0 %v4037
      %v4260 = vpop.f32.mrf.mxu0
      %v4261 = vadd.f32 %v3941, %v4260
      %v4262 = vpop.f32.mrf.mxu0
      %4263 = vdwg.mxu0
      %v4264 = vmul.f32 %v4106, 0.5
      %v4265 = vmul.f32 %v4111, 0.5
      %v4266 = vmul.f32 %v4116, 0.5
      %v4267 = vmul.f32 %v4121, 0.5
      %v4268 = vmul.f32 %v4126, 0.5
      %v4269 = vmul.f32 %v4131, 0.5
      %v4270 = vmul.f32 %v4136, 0.5
      %v4271 = vmul.f32 %v4141, 0.5
      %v4272 = vmul.f32 %v4146, 0.5
      %v4273 = vmul.f32 %v4151, 0.5
      %v4274 = vmul.f32 %v4156, 0.5
      %v4275 = vmul.f32 %v4161, 0.5
      %v4276 = vmul.f32 %v4166, 0.5
      %v4277 = vmul.f32 %v4171, 0.5
      %v4278 = vmul.f32 %v4176, 0.5
      %v4279 = vmul.f32 %v4181, 0.5
      %v4280 = vmul.f32 %v4186, 0.5
      %v4281 = vmul.f32 %v4191, 0.5
      %v4282 = vmul.f32 %v4196, 0.5
      %v4283 = vmul.f32 %v4201, 0.5
      %v4284 = vmul.f32 %v4206, 0.5
      %v4285 = vmul.f32 %v4211, 0.5
      %v4286 = vmul.f32 %v4216, 0.5
      %v4287 = vmul.f32 %v4221, 0.5
      %v4288 = vmul.f32 %v4226, 0.5
      %v4289 = vmul.f32 %v4231, 0.5
      %v4290 = vmul.f32 %v4236, 0.5
      %v4291 = vmul.f32 %v4241, 0.5
      %v4292 = vmul.f32 %v4246, 0.5
      %v4293 = vmul.f32 %v4251, 0.5
      %v4294 = vmul.f32 %v4256, 0.5
      %v4295 = vmul.f32 %v4261, 0.5
      %v4296 = vadd.f32 %v225, %v4264
      %v4297 = vadd.f32 %v226, %v4265
      %v4298 = vadd.f32 %v227, %v4266
      %v4299 = vadd.f32 %v228, %v4267
      %v4300 = vadd.f32 %v229, %v4268
      %v4301 = vadd.f32 %v230, %v4269
      %v4302 = vadd.f32 %v231, %v4270
      %v4303 = vadd.f32 %v232, %v4271
      %v4304 = vadd.f32 %v233, %v4272
      %v4305 = vadd.f32 %v234, %v4273
      %v4306 = vadd.f32 %v235, %v4274
      %v4307 = vadd.f32 %v236, %v4275
      %v4308 = vadd.f32 %v237, %v4276
      %v4309 = vadd.f32 %v238, %v4277
      %v4310 = vadd.f32 %v239, %v4278
      %v4311 = vadd.f32 %v240, %v4279
      %v4312 = vadd.f32 %v241, %v4280
      %v4313 = vadd.f32 %v242, %v4281
      %v4314 = vadd.f32 %v243, %v4282
      %v4315 = vadd.f32 %v244, %v4283
      %v4316 = vadd.f32 %v245, %v4284
      %v4317 = vadd.f32 %v246, %v4285
      %v4318 = vadd.f32 %v247, %v4286
      %v4319 = vadd.f32 %v248, %v4287
      %v4320 = vadd.f32 %v249, %v4288
      %v4321 = vadd.f32 %v250, %v4289
      %v4322 = vadd.f32 %v251, %v4290
      %v4323 = vadd.f32 %v252, %v4291
      %v4324 = vadd.f32 %v253, %v4292
      %v4325 = vadd.f32 %v254, %v4293
      %v4326 = vadd.f32 %v255, %v4294
      %v4327 = vadd.f32 %v256, %v4295
      %4328 = vst.msk [vmem:[%s224] sm:$0xff] %vm257, %v4296
      %4329 = vst.msk [vmem:[%s224 + $0x8] sm:$0xff] %vm257, %v4297
      %4330 = vst.msk [vmem:[%s224 + $0x10] sm:$0xff] %vm257, %v4298
      %4331 = vst.msk [vmem:[%s224 + $0x18] sm:$0xff] %vm257, %v4299
      %4332 = vst.msk [vmem:[%s224 + $0x20] sm:$0xff] %vm257, %v4300
      %4333 = vst.msk [vmem:[%s224 + $0x28] sm:$0xff] %vm257, %v4301
      %4334 = vst.msk [vmem:[%s224 + $0x30] sm:$0xff] %vm257, %v4302
      %4335 = vst.msk [vmem:[%s224 + $0x38] sm:$0xff] %vm257, %v4303
      %4336 = vst.msk [vmem:[%s224 + $0x40] sm:$0xff] %vm257, %v4304
      %4337 = vst.msk [vmem:[%s224 + $0x48] sm:$0xff] %vm257, %v4305
      %4338 = vst.msk [vmem:[%s224 + $0x50] sm:$0xff] %vm257, %v4306
      %4339 = vst.msk [vmem:[%s224 + $0x58] sm:$0xff] %vm257, %v4307
      %4340 = vst.msk [vmem:[%s224 + $0x60] sm:$0xff] %vm257, %v4308
      %4341 = vst.msk [vmem:[%s224 + $0x68] sm:$0xff] %vm257, %v4309
      %4342 = vst.msk [vmem:[%s224 + $0x70] sm:$0xff] %vm257, %v4310
      %4343 = vst.msk [vmem:[%s224 + $0x78] sm:$0xff] %vm257, %v4311
      %4344 = vst.msk [vmem:[%s224 + $0x80] sm:$0xff] %vm257, %v4312
      %4345 = vst.msk [vmem:[%s224 + $0x88] sm:$0xff] %vm257, %v4313
      %4346 = vst.msk [vmem:[%s224 + $0x90] sm:$0xff] %vm257, %v4314
      %4347 = vst.msk [vmem:[%s224 + $0x98] sm:$0xff] %vm257, %v4315
      %4348 = vst.msk [vmem:[%s224 + $0xa0] sm:$0xff] %vm257, %v4316
      %4349 = vst.msk [vmem:[%s224 + $0xa8] sm:$0xff] %vm257, %v4317
      %4350 = vst.msk [vmem:[%s224 + $0xb0] sm:$0xff] %vm257, %v4318
      %4351 = vst.msk [vmem:[%s224 + $0xb8] sm:$0xff] %vm257, %v4319
      %4352 = vst.msk [vmem:[%s224 + $0xc0] sm:$0xff] %vm257, %v4320
      %4353 = vst.msk [vmem:[%s224 + $0xc8] sm:$0xff] %vm257, %v4321
      %4354 = vst.msk [vmem:[%s224 + $0xd0] sm:$0xff] %vm257, %v4322
      %4355 = vst.msk [vmem:[%s224 + $0xd8] sm:$0xff] %vm257, %v4323
      %4356 = vst.msk [vmem:[%s224 + $0xe0] sm:$0xff] %vm257, %v4324
      %4357 = vst.msk [vmem:[%s224 + $0xe8] sm:$0xff] %vm257, %v4325
      %4358 = vst.msk [vmem:[%s224 + $0xf0] sm:$0xff] %vm257, %v4326
      %4359 = vst.msk [vmem:[%s224 + $0xf8] sm:$0xff] %vm257, %v4327
      %p4360 = scmp.lt.s32.totalorder %s16, 1
      %s4361 = scalar_select %p4360, %s16, 1
      %s4362 = smul.addr %s4361, 32
      %s4363 = smul.addr %s4362, 8
      %s4364 = scalar_lea.vmem %s5, %s4363
      // Predicated region
      $region41: #{tpu_custom_call.1} parent=39 // pred_check
        %p4365 = pneg %p144
      $region42: #{tpu_custom_call.1} parent=39 // pred_check_branch
        %4367 = sbr.rel (%p4365) target = $region44
      $region43: #{tpu_custom_call.1} parent=39 // pred_region
        _
      $region44: #{tpu_custom_call.1} parent=39 // pred_fallthru
        _
    $region40: #{tpu_custom_call.1} parent=5 // pred_fallthru
      _
    %p4368 = scmp.le.s32.totalorder 2, %s11
    // Predicated region
    $region45: #{tpu_custom_call.1} parent=5 // pred_check
      %p4369 = pneg %p4368
    $region46: #{tpu_custom_call.1} parent=5 // pred_check_branch
      %4371 = sbr.rel (%p4369) target = $region48
    $region47: #{tpu_custom_call.1} parent=5 // pred_region
      %s4372 = ssub.s32 %s11, 2
      // Predicated region
      $region49: #{tpu_custom_call.1} parent=47 // pred_check
        %p4373 = pneg %p150
      $region50: #{tpu_custom_call.1} parent=47 // pred_check_branch
        %4375 = sbr.rel (%p4373) target = $region52
      $region51: #{tpu_custom_call.1} parent=47 // pred_region
        %p4376 = scmp.lt.s32.totalorder %s17, 1
        %s4377 = scalar_select %p4376, %s17, 1
        %s4378 = smul.addr %s4377, 32
        %s4379 = smul.addr %s4378, 8
        %s4380 = scalar_lea.vmem %s5, %s4379
      $region52: #{tpu_custom_call.1} parent=47 // pred_fallthru
        _
    $region48: #{tpu_custom_call.1} parent=5 // pred_fallthru
      _
  $region6: #{tpu_custom_call.1} parent=0 // loop_footer
    %s15 = sadd.s32 1, %s11
  $region7: #{tpu_custom_call.1} parent=0 // loop_footer_branch
    %10 = sbr.rel target = $region3
  $region8: #{tpu_custom_call.1} parent=0 // loop_exit
    _

</llo_original>
